<compile_context>
chip_gen: v7x
topology: tpu7x:2x2x1
jax: 0.10.0
libtpu: 0.0.40
codegen_flags: <defaults>
</compile_context>

<pallas_src>
import functools

import jax
import jax.numpy as jnp
from jax import lax
from jax.experimental import pallas as pl
from jax.experimental.pallas import tpu as pltpu


# ----------------------------------------------------------------------------
# In-kernel helpers.
# ----------------------------------------------------------------------------
def _pixel_geometry(H, W):
    """View-invariant per-pixel geometry, built once per grid step.

    col3/row3: edge-clamped pixel coordinates at offsets (-1, 0, +1).
    inv0     : 1/||(u, v, 1)|| (single EUP rsqrt); neighbour inverse norms are obtained by XLU
               shifts of this plane instead of 8 extra rsqrts.
    edges    : boundary masks (top, bottom, left, right) reused by every replicate-padded shift.
    """
    col = lax.broadcasted_iota(jnp.int32, (H, W), 1)
    row = lax.broadcasted_iota(jnp.int32, (H, W), 0)
    edges = (row == 0, row == H - 1, col == 0, col == W - 1)
    colf = col.astype(jnp.float32)
    rowf = row.astype(jnp.float32)
    col3 = (jnp.maximum(colf - 1.0, 0.0), colf, jnp.minimum(colf + 1.0, float(W - 1)))
    row3 = (jnp.maximum(rowf - 1.0, 0.0), rowf, jnp.minimum(rowf + 1.0, float(H - 1)))
    inv0 = lax.rsqrt(colf * colf + rowf * rowf + 1.0)
    return col3, row3, inv0, edges


def _normals_from_depth(d, col3, row3, inv0, edges):
    """kornia.depth_to_normals with K = I and normalize_points=True (streaming form).

    The 8 neighbours are consumed one at a time into 6 Sobel accumulators (gxx..gyz), never
    materializing the full shifted / unprojected stacks. Only depth and inv0 are XLU-shifted
    (replicate padding = roll + edge select); clamped pixel coordinates are analytic. The Sobel
    1/8 normalization is dropped: a uniform scale on both gradients cancels in the cross product
    and the final renormalization (only the 1e-24 eps corner shifts, per review).
    """
    edge_t, edge_b, edge_l, edge_r = edges
    H, W = d.shape

    def vshift(x, dy):  # y[i, j] = x[clamp(i + dy), j], dy in {-1, +1}
        rolled = pltpu.roll(x, shift=(-dy) % H, axis=0)
        return jnp.where(edge_b if dy == 1 else edge_t, x, rolled)

    def hshift(x, dx):  # y[i, j] = x[i, clamp(j + dx)], dx in {-1, +1}
        rolled = pltpu.roll(x, shift=(-dx) % W, axis=1)
        return jnp.where(edge_r if dx == 1 else edge_l, x, rolled)

    def wadd(a, v, w):  # a += w * v, folding +-1 into add/sub
        if w == 1.0:
            return v if a is None else a + v
        if w == -1.0:
            return -v if a is None else a - v
        return w * v if a is None else a + w * v

    gxx = gxy = gxz = gyx = gyy = gyz = None
    for dy in (-1, 0, 1):
        d_r = d if dy == 0 else vshift(d, dy)
        i_r = inv0 if dy == 0 else vshift(inv0, dy)
        ry = row3[dy + 1]
        for dx in (-1, 0, 1):
            if dy == 0 and dx == 0:
                continue
            # Unprojected neighbour point p = depth * (u, v, 1) / ||(u, v, 1)||.
            w = (d_r if dx == 0 else hshift(d_r, dx)) * (i_r if dx == 0 else hshift(i_r, dx))
            px = col3[dx + 1] * w
            py = ry * w
            wx = float(dx) * (2.0 if dy == 0 else 1.0)  # Sobel d/dx weight (1/8 dropped)
            wy = float(dy) * (2.0 if dx == 0 else 1.0)  # Sobel d/dy weight
            if wx != 0.0:
                gxx = wadd(gxx, px, wx)
                gxy = wadd(gxy, py, wx)
                gxz = wadd(gxz, w, wx)
            if wy != 0.0:
                gyx = wadd(gyx, px, wy)
                gyy = wadd(gyy, py, wy)
                gyz = wadd(gyz, w, wy)

    nx = gxy * gyz - gxz * gyy
    ny = gxz * gyx - gxx * gyz
    nz = gxx * gyy - gxy * gyx
    inv_n = lax.rsqrt(jnp.maximum(nx * nx + ny * ny + nz * nz, 1e-24))
    return nx * inv_n, ny * inv_n, nz * inv_n


# ----------------------------------------------------------------------------
# Kernel 1: GT normals from depth_gt, one view per grid step (cacheable across iterations).
# ----------------------------------------------------------------------------
def _gt_normals_kernel(depth_gt_ref, n_ref):
    d_gt = depth_gt_ref[0]                       # (H, W)
    col3, row3, inv0, edges = _pixel_geometry(*d_gt.shape)
    nx, ny, nz = _normals_from_depth(d_gt, col3, row3, inv0, edges)
    n_ref[0, 0] = nx
    n_ref[0, 1] = ny
    n_ref[0, 2] = nz


# ----------------------------------------------------------------------------
# Kernel 2: per-view render loss (depth compositing + fused L1 depth + L1 normals).
# ----------------------------------------------------------------------------
def _render_loss_kernel(dmax_ref, depth_gt_ref, mask_gt_ref, rendered_ref, zbuf_ref, ngt_ref,
                        total_ref):
    d_gt = depth_gt_ref[0]                       # (H, W)
    m_gt = mask_gt_ref[0]
    rend = rendered_ref[0]
    zb = zbuf_ref[0]
    dmax = dmax_ref[0]                           # scalar: torch.max(depth_gt) over all views

    mask_pred = (rend != 0.0).astype(jnp.float32)
    depth_pred = jnp.where(zb < 0.0, dmax, zb)
    depth_final = depth_pred * mask_pred + d_gt * (1.0 - mask_pred) * (1.0 - m_gt)

    col3, row3, inv0, edges = _pixel_geometry(*d_gt.shape)
    nfx, nfy, nfz = _normals_from_depth(depth_final, col3, row3, inv0, edges)

    # total_loss = L1(depth) + L1(normals over (3, H, W)), fused into one reduction.
    # (mask_depth_valid_sensor is all ones; the silhouette loss never enters total_loss.)
    per_pix = jnp.abs(d_gt - depth_final) + (
        jnp.abs(ngt_ref[0, 0] - nfx) + jnp.abs(ngt_ref[0, 1] - nfy) + jnp.abs(ngt_ref[0, 2] - nfz)
    ) * (1.0 / 3.0)
    total_ref[...] = jnp.broadcast_to(jnp.mean(per_pix), total_ref.shape).astype(total_ref.dtype)


# ----------------------------------------------------------------------------
# Kernel 3: one-way chamfer (knn K=1, squared L2, clamp_max 0.2, point mean), one batch element
# per outer step, mesh points streamed in chunks with a running (1, P1) min accumulator.
# ----------------------------------------------------------------------------
def _chamfer_kernel(x_ref, y_ref, out_ref, minacc_ref, *, p1):
    k = pl.program_id(1)

    @pl.when(k == 0)
    def _():
        minacc_ref[...] = jnp.full_like(minacc_ref, jnp.inf)

    x = x_ref[0]                                 # (3, P1)  coords on sublanes, targets on lanes
    y = y_ref[0]                                 # (Pc, 3)  mesh chunk on sublanes
    d = None
    for c in range(x.shape[0]):
        diff = y[:, c:c + 1] - x[c:c + 1, :]     # (Pc, 1) - (1, P1) -> (Pc, P1)
        sq = diff * diff
        d = sq if d is None else d + sq
    minacc_ref[...] = jnp.minimum(minacc_ref[...], jnp.min(d, axis=0, keepdims=True))

    @pl.when(k == pl.num_programs(1) - 1)
    def _():
        cham = jnp.minimum(minacc_ref[...], 0.2)     # torch.clamp_max(sq dists, 0.2)
        val = jnp.sum(cham) * (1.0 / p1)             # point_reduction='mean'
        out_ref[...] = jnp.broadcast_to(val, out_ref.shape).astype(out_ref.dtype)


# ----------------------------------------------------------------------------
# Wrapper (glue: channel slicing, global max, GT-normal precompute, point-cloud layout, means).
# ----------------------------------------------------------------------------
def _f32(a):
    return a if a.dtype == jnp.float32 else a.astype(jnp.float32)


def compute_gt_normals(depth_gt):
    """GT normals depend only on depth_gt; compute once and reuse across optimizer iterations."""
    depth_gt = _f32(depth_gt)
    N, H, W = depth_gt.shape
    return pl.pallas_call(
        _gt_normals_kernel,
        grid=(N,),
        in_specs=[pl.BlockSpec((1, H, W), lambda i: (i, 0, 0))],
        out_specs=pl.BlockSpec((1, 3, H, W), lambda i: (i, 0, 0, 0)),
        out_shape=jax.ShapeDtypeStruct((N, 3, H, W), jnp.float32),
        compiler_params=pltpu.CompilerParams(
            dimension_semantics=("parallel",),
            vmem_limit_bytes=32 * 1024 * 1024),
    )(depth_gt)


def loss_batched_forward(depth_gt, mask_gt, rendered_mesh, zbuf, target_pcd, mesh_pcd,
                         gt_normals=None):
    depth_gt = _f32(depth_gt)
    mask_gt = _f32(mask_gt)
    N, H, W = depth_gt.shape

    # Channel selects stay in the wrapper: a (H, W, 2) block in VMEM would pad the 2-wide channel
    # dim to 128 lanes; this is one small strided HBM copy instead (see TODO in the header).
    rendered = _f32(rendered_mesh)[..., 1]            # rendered_mesh[..., 1]
    zbuf0 = _f32(zbuf)[..., 0]                        # zbuf[..., 0] (contiguous, free reshape)
    dmax = jnp.max(depth_gt).reshape(1)               # torch.max(depth_gt), global over views

    if gt_normals is None:                            # cacheable by the caller
        gt_normals = compute_gt_normals(depth_gt)
    gt_normals = _f32(gt_normals)

    img_spec = pl.BlockSpec((1, H, W), lambda i: (i, 0, 0))
    total_pv = pl.pallas_call(
        _render_loss_kernel,
        grid=(N,),
        in_specs=[pl.BlockSpec(memory_space=pltpu.MemorySpace.SMEM),
                  img_spec, img_spec, img_spec, img_spec,
                  pl.BlockSpec((1, 3, H, W), lambda i: (i, 0, 0, 0))],
        out_specs=pl.BlockSpec((1, 1, 128), lambda i: (i, 0, 0)),      # lane-dense per-view block
        out_shape=jax.ShapeDtypeStruct((N, 1, 128), jnp.float32),
        compiler_params=pltpu.CompilerParams(
            dimension_semantics=("parallel",),
            vmem_limit_bytes=32 * 1024 * 1024),
    )(dmax, depth_gt, mask_gt, rendered, zbuf0, gt_normals)[:, 0, 0]

    B, P1, D = target_pcd.shape
    _, P2, _ = mesh_pcd.shape
    x_t = jnp.transpose(_f32(target_pcd), (0, 2, 1))  # (B, 3, P1): target points on lanes
    y = _f32(mesh_pcd)                                # (B, P2, 3): mesh points on sublanes

    # Stream mesh points in chunks: (chunk, P1) distance tile + (1, P1) running min stay in VMEM
    # even at production point counts. Far-away pad points never win the min.
    chunk = min(P2, 1024)
    if P2 % chunk != 0:
        y = jnp.pad(y, ((0, 0), (0, chunk - P2 % chunk), (0, 0)), constant_values=1e9)
    n_chunks = y.shape[1] // chunk

    cham_pb = pl.pallas_call(
        functools.partial(_chamfer_kernel, p1=P1),
        grid=(B, n_chunks),
        in_specs=[pl.BlockSpec((1, D, P1), lambda b, k: (b, 0, 0)),
                  pl.BlockSpec((1, chunk, D), lambda b, k: (b, k, 0))],
        out_specs=pl.BlockSpec((1, 1, 128), lambda b, k: (b, 0, 0)),
        out_shape=jax.ShapeDtypeStruct((B, 1, 128), jnp.float32),
        scratch_shapes=[pltpu.VMEM((1, P1), jnp.float32)],
        compiler_params=pltpu.CompilerParams(
            dimension_semantics=("parallel", "arbitrary"),
            vmem_limit_bytes=32 * 1024 * 1024),
    )(x_t, y)[:, 0, 0]

    chamfer_loss = jnp.mean(cham_pb)                  # batch_reduction='mean'
    total_loss_randc = jnp.mean(total_pv)             # total_loss.mean() over views
    return total_loss_randc + 10.0 * chamfer_loss


if __name__ == "__main__":
    key = jax.random.PRNGKey(0)
    N, H, W = 2, 16, 128                 # views, spatial
    B, P1, P2, D = 2, 128, 512, 3        # point-cloud batch, target pts, sampled mesh pts

    ks = jax.random.split(key, 6)
    depth_gt = jax.random.uniform(ks[0], (N, H, W), jnp.float32, 0.5, 2.0)
    mask_gt = (jax.random.uniform(ks[1], (N, H, W)) > 0.5).astype(jnp.float32)
    sil = jax.random.uniform(ks[2], (N, H, W), jnp.float32)
    rendered_mesh = jnp.stack([jnp.zeros_like(sil), jnp.where(sil > 0.5, sil, 0.0)], axis=-1)
    zdepth = jax.random.uniform(ks[3], (N, H, W), jnp.float32, 0.5, 3.0)
    zbuf = jnp.where(sil > 0.5, zdepth, -1.0)[..., None]                     # (N, H, W, 1)
    target_pcd = jax.random.normal(ks[4], (B, P1, D), jnp.float32)
    mesh_pcd = jax.random.normal(ks[5], (B, P2, D), jnp.float32)

    out = jax.jit(loss_batched_forward)(depth_gt, mask_gt, rendered_mesh, zbuf,
                                        target_pcd, mesh_pcd)
    jax.block_until_ready(out)
    print("KERNEL_OK")
</pallas_src>

<mosaic_0001>
module attributes {stable_mosaic.version = 11 : i64} {
  func.func @_chamfer_kernel(%arg0: i32, %arg1: i32, %arg2: memref<1x3x128xf32, #tpu.memory_space<vmem>>, %arg3: memref<1x512x3xf32, #tpu.memory_space<vmem>>, %arg4: memref<1x1x128xf32, #tpu.memory_space<vmem>>, %arg5: memref<1x128xf32, #tpu.memory_space<vmem>>) attributes {dimension_semantics = [#tpu.dimension_semantics<parallel>, #tpu.dimension_semantics<arbitrary>], iteration_bounds = array<i64: 2, 1>, scalar_prefetch = 0 : i64, scratch_operands = 1 : i64, tpu.core_type = #tpu.core_type<tc>, window_params = [{transform_indices = @transform_0, window_bounds = array<i64: 1, 3, 128>}, {transform_indices = @transform_1, window_bounds = array<i64: 1, 512, 3>}, {transform_indices = @transform_2, window_bounds = array<i64: 1, 1, 128>}]} {
    %c0_i32 = arith.constant 0 : i32
    %0 = arith.cmpi eq, %arg1, %c0_i32 : i32
    %1 = arith.extui %0 : i1 to i32
    %c0_i32_0 = arith.constant 0 : i32
    %2 = arith.cmpi ne, %1, %c0_i32_0 : i32
    scf.if %2 {
      %cst_12 = arith.constant 0x7F800000 : f32
      %35 = vector.broadcast %cst_12 : f32 to vector<1x128xf32>
      %c0_13 = arith.constant 0 : index
      %c0_14 = arith.constant 0 : index
      %36 = vector.load %arg5[%c0_13, %c0_14] : memref<1x128xf32, #tpu.memory_space<vmem>>, vector<1x128xf32>
      tpu.vector_store %arg5[%c0_13, %c0_14], %35 {strides = array<i32>} : memref<1x128xf32, #tpu.memory_space<vmem>>, vector<1x128xf32>,
    } else {
    }
    %c0 = arith.constant 0 : index
    %c0_1 = arith.constant 0 : index
    %c0_2 = arith.constant 0 : index
    %3 = vector.load %arg2[%c0, %c0_1, %c0_2] : memref<1x3x128xf32, #tpu.memory_space<vmem>>, vector<1x3x128xf32>
    %4 = vector.shape_cast %3 : vector<1x3x128xf32> to vector<3x128xf32>
    %c0_3 = arith.constant 0 : index
    %c0_4 = arith.constant 0 : index
    %c0_5 = arith.constant 0 : index
    %5 = vector.load %arg3[%c0_3, %c0_4, %c0_5] : memref<1x512x3xf32, #tpu.memory_space<vmem>>, vector<1x512x3xf32>
    %6 = vector.shape_cast %5 : vector<1x512x3xf32> to vector<512x3xf32>
    %7 = vector.extract_strided_slice %6 {offsets = [0, 0], sizes = [512, 1], strides = [1, 1]} : vector<512x3xf32> to vector<512x1xf32>
    %8 = vector.extract_strided_slice %4 {offsets = [0, 0], sizes = [1, 128], strides = [1, 1]} : vector<3x128xf32> to vector<1x128xf32>
    %9 = vector.broadcast %7 : vector<512x1xf32> to vector<512x128xf32>
    %10 = vector.broadcast %8 : vector<1x128xf32> to vector<512x128xf32>
    %11 = arith.subf %9, %10 : vector<512x128xf32>
    %12 = arith.mulf %11, %11 : vector<512x128xf32>
    %13 = vector.extract_strided_slice %6 {offsets = [0, 1], sizes = [512, 1], strides = [1, 1]} : vector<512x3xf32> to vector<512x1xf32>
    %14 = vector.extract_strided_slice %4 {offsets = [1, 0], sizes = [1, 128], strides = [1, 1]} : vector<3x128xf32> to vector<1x128xf32>
    %15 = vector.broadcast %13 : vector<512x1xf32> to vector<512x128xf32>
    %16 = vector.broadcast %14 : vector<1x128xf32> to vector<512x128xf32>
    %17 = arith.subf %15, %16 : vector<512x128xf32>
    %18 = arith.mulf %17, %17 : vector<512x128xf32>
    %19 = arith.addf %12, %18 : vector<512x128xf32>
    %20 = vector.extract_strided_slice %6 {offsets = [0, 2], sizes = [512, 1], strides = [1, 1]} : vector<512x3xf32> to vector<512x1xf32>
    %21 = vector.extract_strided_slice %4 {offsets = [2, 0], sizes = [1, 128], strides = [1, 1]} : vector<3x128xf32> to vector<1x128xf32>
    %22 = vector.broadcast %20 : vector<512x1xf32> to vector<512x128xf32>
    %23 = vector.broadcast %21 : vector<1x128xf32> to vector<512x128xf32>
    %24 = arith.subf %22, %23 : vector<512x128xf32>
    %25 = arith.mulf %24, %24 : vector<512x128xf32>
    %26 = arith.addf %19, %25 : vector<512x128xf32>
    %c0_6 = arith.constant 0 : index
    %c0_7 = arith.constant 0 : index
    %27 = vector.load %arg5[%c0_6, %c0_7] : memref<1x128xf32, #tpu.memory_space<vmem>>, vector<1x128xf32>
    %cst = arith.constant dense<0x7F800000> : vector<128xf32>
    %28 = vector.multi_reduction <minimumf>, %26, %cst [0] : vector<512x128xf32> to vector<128xf32>
    %29 = vector.shape_cast %28 : vector<128xf32> to vector<1x128xf32>
    %30 = arith.minimumf %27, %29 : vector<1x128xf32>
    %c0_8 = arith.constant 0 : index
    %c0_9 = arith.constant 0 : index
    %31 = vector.load %arg5[%c0_8, %c0_9] : memref<1x128xf32, #tpu.memory_space<vmem>>, vector<1x128xf32>
    tpu.vector_store %arg5[%c0_8, %c0_9], %30 {strides = array<i32>} : memref<1x128xf32, #tpu.memory_space<vmem>>, vector<1x128xf32>,
    %c0_i32_10 = arith.constant 0 : i32
    %32 = arith.cmpi eq, %arg1, %c0_i32_10 : i32
    %33 = arith.extui %32 : i1 to i32
    %c0_i32_11 = arith.constant 0 : i32
    %34 = arith.cmpi ne, %33, %c0_i32_11 : i32
    scf.if %34 {
      %c0_12 = arith.constant 0 : index
      %c0_13 = arith.constant 0 : index
      %35 = vector.load %arg5[%c0_12, %c0_13] : memref<1x128xf32, #tpu.memory_space<vmem>>, vector<1x128xf32>
      %cst_14 = arith.constant 2.000000e-01 : f32
      %36 = vector.broadcast %cst_14 : f32 to vector<1x128xf32>
      %37 = arith.minimumf %35, %36 : vector<1x128xf32>
      %38 = vector.shape_cast %37 : vector<1x128xf32> to vector<1x1x128xf32>
      %cst_15 = arith.constant dense<0.000000e+00> : vector<1xf32>
      %39 = vector.multi_reduction <add>, %38, %cst_15 [1, 2] : vector<1x1x128xf32> to vector<1xf32>
      %40 = vector.shape_cast %39 : vector<1xf32> to vector<1x1x1xf32>
      %41 = vector.extract %40[0, 0, 0] : f32 from vector<1x1x1xf32>
      %cst_16 = arith.constant 7.812500e-03 : f32
      %42 = arith.mulf %41, %cst_16 : f32
      %43 = vector.broadcast %42 : f32 to vector<1x1x128xf32>
      %c0_17 = arith.constant 0 : index
      %c0_18 = arith.constant 0 : index
      %c0_19 = arith.constant 0 : index
      %44 = vector.load %arg4[%c0_17, %c0_18, %c0_19] : memref<1x1x128xf32, #tpu.memory_space<vmem>>, vector<1x1x128xf32>
      tpu.vector_store %arg4[%c0_17, %c0_18, %c0_19], %43 {strides = array<i32>} : memref<1x1x128xf32, #tpu.memory_space<vmem>>, vector<1x1x128xf32>,
    } else {
    }
    return
  }
  func.func @transform_0(%arg0: i32, %arg1: i32) -> (i32, i32, i32) {
    %c0_i32 = arith.constant 0 : i32
    %c0_i32_0 = arith.constant 0 : i32
    %c0_i32_1 = arith.constant 0 : i32
    return %arg0, %c0_i32, %c0_i32_0 : i32, i32, i32
  }
  func.func @transform_1(%arg0: i32, %arg1: i32) -> (i32, i32, i32) {
    %c0_i32 = arith.constant 0 : i32
    %c0_i32_0 = arith.constant 0 : i32
    return %arg0, %arg1, %c0_i32 : i32, i32, i32
  }
  func.func @transform_2(%arg0: i32, %arg1: i32) -> (i32, i32, i32) {
    %c0_i32 = arith.constant 0 : i32
    %c0_i32_0 = arith.constant 0 : i32
    %c0_i32_1 = arith.constant 0 : i32
    return %arg0, %c0_i32, %c0_i32_0 : i32, i32, i32
  }
}

module attributes {stable_mosaic.version = 11 : i64} {
  func.func @_gt_normals_kernel(%arg0: i32, %arg1: memref<1x16x128xf32, #tpu.memory_space<vmem>>, %arg2: memref<1x3x16x128xf32, #tpu.memory_space<vmem>>) attributes {dimension_semantics = [#tpu.dimension_semantics<parallel>], iteration_bounds = array<i64: 2>, scalar_prefetch = 0 : i64, scratch_operands = 0 : i64, tpu.core_type = #tpu.core_type<tc>, window_params = [{transform_indices = @transform_0, window_bounds = array<i64: 1, 16, 128>}, {transform_indices = @transform_1, window_bounds = array<i64: 1, 3, 16, 128>}]} {
    %c0 = arith.constant 0 : index
    %c0_0 = arith.constant 0 : index
    %c0_1 = arith.constant 0 : index
    %0 = vector.load %arg1[%c0, %c0_0, %c0_1] : memref<1x16x128xf32, #tpu.memory_space<vmem>>, vector<1x16x128xf32>
    %1 = vector.shape_cast %0 : vector<1x16x128xf32> to vector<16x128xf32>
    %2 = tpu.iota {dimensions = array<i32: 1>} : vector<16x128xi32>
    %3 = tpu.iota {dimensions = array<i32: 0>} : vector<16x128xi32>
    %c0_i32 = arith.constant 0 : i32
    %4 = vector.broadcast %c0_i32 : i32 to vector<16x128xi32>
    %5 = arith.cmpi eq, %3, %4 : vector<16x128xi32>
    %c15_i32 = arith.constant 15 : i32
    %6 = vector.broadcast %c15_i32 : i32 to vector<16x128xi32>
    %7 = arith.cmpi eq, %3, %6 : vector<16x128xi32>
    %c0_i32_2 = arith.constant 0 : i32
    %8 = vector.broadcast %c0_i32_2 : i32 to vector<16x128xi32>
    %9 = arith.cmpi eq, %2, %8 : vector<16x128xi32>
    %c127_i32 = arith.constant 127 : i32
    %10 = vector.broadcast %c127_i32 : i32 to vector<16x128xi32>
    %11 = arith.cmpi eq, %2, %10 : vector<16x128xi32>
    %12 = arith.sitofp %2 : vector<16x128xi32> to vector<16x128xf32>
    %13 = arith.sitofp %3 : vector<16x128xi32> to vector<16x128xf32>
    %cst = arith.constant 1.000000e+00 : f32
    %14 = vector.broadcast %cst : f32 to vector<16x128xf32>
    %15 = arith.subf %12, %14 : vector<16x128xf32>
    %cst_3 = arith.constant 0.000000e+00 : f32
    %16 = vector.broadcast %cst_3 : f32 to vector<16x128xf32>
    %17 = arith.maximumf %15, %16 : vector<16x128xf32>
    %cst_4 = arith.constant 1.000000e+00 : f32
    %18 = vector.broadcast %cst_4 : f32 to vector<16x128xf32>
    %19 = arith.addf %12, %18 : vector<16x128xf32>
    %cst_5 = arith.constant 1.270000e+02 : f32
    %20 = vector.broadcast %cst_5 : f32 to vector<16x128xf32>
    %21 = arith.minimumf %19, %20 : vector<16x128xf32>
    %cst_6 = arith.constant 1.000000e+00 : f32
    %22 = vector.broadcast %cst_6 : f32 to vector<16x128xf32>
    %23 = arith.subf %13, %22 : vector<16x128xf32>
    %cst_7 = arith.constant 0.000000e+00 : f32
    %24 = vector.broadcast %cst_7 : f32 to vector<16x128xf32>
    %25 = arith.maximumf %23, %24 : vector<16x128xf32>
    %cst_8 = arith.constant 1.000000e+00 : f32
    %26 = vector.broadcast %cst_8 : f32 to vector<16x128xf32>
    %27 = arith.addf %13, %26 : vector<16x128xf32>
    %cst_9 = arith.constant 1.500000e+01 : f32
    %28 = vector.broadcast %cst_9 : f32 to vector<16x128xf32>
    %29 = arith.minimumf %27, %28 : vector<16x128xf32>
    %30 = arith.mulf %12, %12 : vector<16x128xf32>
    %31 = arith.mulf %13, %13 : vector<16x128xf32>
    %32 = arith.addf %30, %31 : vector<16x128xf32>
    %cst_10 = arith.constant 1.000000e+00 : f32
    %33 = vector.broadcast %cst_10 : f32 to vector<16x128xf32>
    %34 = arith.addf %32, %33 : vector<16x128xf32>
    %35 = math.rsqrt %34 : vector<16x128xf32>
    %c1_i32 = arith.constant 1 : i32
    %36 = tpu.dynamic_rotate %1 by %c1_i32 dim 0 : vector<16x128xf32>, i32 -> vector<16x128xf32>
    %37 = arith.select %5, %1, %36 : vector<16x128xi1>, vector<16x128xf32>
    %c1_i32_11 = arith.constant 1 : i32
    %38 = tpu.dynamic_rotate %35 by %c1_i32_11 dim 0 : vector<16x128xf32>, i32 -> vector<16x128xf32>
    %39 = arith.select %5, %35, %38 : vector<16x128xi1>, vector<16x128xf32>
    %c1_i32_12 = arith.constant 1 : i32
    %40 = tpu.dynamic_rotate %37 by %c1_i32_12 dim 1 : vector<16x128xf32>, i32 -> vector<16x128xf32>
    %41 = arith.select %9, %37, %40 : vector<16x128xi1>, vector<16x128xf32>
    %c1_i32_13 = arith.constant 1 : i32
    %42 = tpu.dynamic_rotate %39 by %c1_i32_13 dim 1 : vector<16x128xf32>, i32 -> vector<16x128xf32>
    %43 = arith.select %9, %39, %42 : vector<16x128xi1>, vector<16x128xf32>
    %44 = arith.mulf %41, %43 : vector<16x128xf32>
    %45 = arith.mulf %17, %44 : vector<16x128xf32>
    %46 = arith.mulf %25, %44 : vector<16x128xf32>
    %cst_14 = arith.constant 0.000000e+00 : f32
    %47 = vector.broadcast %cst_14 : f32 to vector<16x128xf32>
    %48 = arith.subf %47, %45 : vector<16x128xf32>
    %cst_15 = arith.constant 0.000000e+00 : f32
    %49 = vector.broadcast %cst_15 : f32 to vector<16x128xf32>
    %50 = arith.subf %49, %46 : vector<16x128xf32>
    %cst_16 = arith.constant 0.000000e+00 : f32
    %51 = vector.broadcast %cst_16 : f32 to vector<16x128xf32>
    %52 = arith.subf %51, %44 : vector<16x128xf32>
    %cst_17 = arith.constant 0.000000e+00 : f32
    %53 = vector.broadcast %cst_17 : f32 to vector<16x128xf32>
    %54 = arith.subf %53, %45 : vector<16x128xf32>
    %cst_18 = arith.constant 0.000000e+00 : f32
    %55 = vector.broadcast %cst_18 : f32 to vector<16x128xf32>
    %56 = arith.subf %55, %46 : vector<16x128xf32>
    %cst_19 = arith.constant 0.000000e+00 : f32
    %57 = vector.broadcast %cst_19 : f32 to vector<16x128xf32>
    %58 = arith.subf %57, %44 : vector<16x128xf32>
    %59 = arith.mulf %37, %39 : vector<16x128xf32>
    %60 = arith.mulf %12, %59 : vector<16x128xf32>
    %61 = arith.mulf %25, %59 : vector<16x128xf32>
    %cst_20 = arith.constant -2.000000e+00 : f32
    %62 = vector.broadcast %cst_20 : f32 to vector<16x128xf32>
    %63 = arith.mulf %62, %60 : vector<16x128xf32>
    %64 = arith.addf %54, %63 : vector<16x128xf32>
    %cst_21 = arith.constant -2.000000e+00 : f32
    %65 = vector.broadcast %cst_21 : f32 to vector<16x128xf32>
    %66 = arith.mulf %65, %61 : vector<16x128xf32>
    %67 = arith.addf %56, %66 : vector<16x128xf32>
    %cst_22 = arith.constant -2.000000e+00 : f32
    %68 = vector.broadcast %cst_22 : f32 to vector<16x128xf32>
    %69 = arith.mulf %68, %59 : vector<16x128xf32>
    %70 = arith.addf %58, %69 : vector<16x128xf32>
    %c127_i32_23 = arith.constant 127 : i32
    %71 = tpu.dynamic_rotate %37 by %c127_i32_23 dim 1 : vector<16x128xf32>, i32 -> vector<16x128xf32>
    %72 = arith.select %11, %37, %71 : vector<16x128xi1>, vector<16x128xf32>
    %c127_i32_24 = arith.constant 127 : i32
    %73 = tpu.dynamic_rotate %39 by %c127_i32_24 dim 1 : vector<16x128xf32>, i32 -> vector<16x128xf32>
    %74 = arith.select %11, %39, %73 : vector<16x128xi1>, vector<16x128xf32>
    %75 = arith.mulf %72, %74 : vector<16x128xf32>
    %76 = arith.mulf %21, %75 : vector<16x128xf32>
    %77 = arith.mulf %25, %75 : vector<16x128xf32>
    %78 = arith.addf %48, %76 : vector<16x128xf32>
    %79 = arith.addf %50, %77 : vector<16x128xf32>
    %80 = arith.addf %52, %75 : vector<16x128xf32>
    %81 = arith.subf %64, %76 : vector<16x128xf32>
    %82 = arith.subf %67, %77 : vector<16x128xf32>
    %83 = arith.subf %70, %75 : vector<16x128xf32>
    %c1_i32_25 = arith.constant 1 : i32
    %84 = tpu.dynamic_rotate %1 by %c1_i32_25 dim 1 : vector<16x128xf32>, i32 -> vector<16x128xf32>
    %85 = arith.select %9, %1, %84 : vector<16x128xi1>, vector<16x128xf32>
    %c1_i32_26 = arith.constant 1 : i32
    %86 = tpu.dynamic_rotate %35 by %c1_i32_26 dim 1 : vector<16x128xf32>, i32 -> vector<16x128xf32>
    %87 = arith.select %9, %35, %86 : vector<16x128xi1>, vector<16x128xf32>
    %88 = arith.mulf %85, %87 : vector<16x128xf32>
    %89 = arith.mulf %17, %88 : vector<16x128xf32>
    %90 = arith.mulf %13, %88 : vector<16x128xf32>
    %cst_27 = arith.constant -2.000000e+00 : f32
    %91 = vector.broadcast %cst_27 : f32 to vector<16x128xf32>
    %92 = arith.mulf %91, %89 : vector<16x128xf32>
    %93 = arith.addf %78, %92 : vector<16x128xf32>
    %cst_28 = arith.constant -2.000000e+00 : f32
    %94 = vector.broadcast %cst_28 : f32 to vector<16x128xf32>
    %95 = arith.mulf %94, %90 : vector<16x128xf32>
    %96 = arith.addf %79, %95 : vector<16x128xf32>
    %cst_29 = arith.constant -2.000000e+00 : f32
    %97 = vector.broadcast %cst_29 : f32 to vector<16x128xf32>
    %98 = arith.mulf %97, %88 : vector<16x128xf32>
    %99 = arith.addf %80, %98 : vector<16x128xf32>
    %c127_i32_30 = arith.constant 127 : i32
    %100 = tpu.dynamic_rotate %1 by %c127_i32_30 dim 1 : vector<16x128xf32>, i32 -> vector<16x128xf32>
    %101 = arith.select %11, %1, %100 : vector<16x128xi1>, vector<16x128xf32>
    %c127_i32_31 = arith.constant 127 : i32
    %102 = tpu.dynamic_rotate %35 by %c127_i32_31 dim 1 : vector<16x128xf32>, i32 -> vector<16x128xf32>
    %103 = arith.select %11, %35, %102 : vector<16x128xi1>, vector<16x128xf32>
    %104 = arith.mulf %101, %103 : vector<16x128xf32>
    %105 = arith.mulf %21, %104 : vector<16x128xf32>
    %106 = arith.mulf %13, %104 : vector<16x128xf32>
    %cst_32 = arith.constant 2.000000e+00 : f32
    %107 = vector.broadcast %cst_32 : f32 to vector<16x128xf32>
    %108 = arith.mulf %107, %105 : vector<16x128xf32>
    %109 = arith.addf %93, %108 : vector<16x128xf32>
    %cst_33 = arith.constant 2.000000e+00 : f32
    %110 = vector.broadcast %cst_33 : f32 to vector<16x128xf32>
    %111 = arith.mulf %110, %106 : vector<16x128xf32>
    %112 = arith.addf %96, %111 : vector<16x128xf32>
    %cst_34 = arith.constant 2.000000e+00 : f32
    %113 = vector.broadcast %cst_34 : f32 to vector<16x128xf32>
    %114 = arith.mulf %113, %104 : vector<16x128xf32>
    %115 = arith.addf %99, %114 : vector<16x128xf32>
    %c15_i32_35 = arith.constant 15 : i32
    %116 = tpu.dynamic_rotate %1 by %c15_i32_35 dim 0 : vector<16x128xf32>, i32 -> vector<16x128xf32>
    %117 = arith.select %7, %1, %116 : vector<16x128xi1>, vector<16x128xf32>
    %c15_i32_36 = arith.constant 15 : i32
    %118 = tpu.dynamic_rotate %35 by %c15_i32_36 dim 0 : vector<16x128xf32>, i32 -> vector<16x128xf32>
    %119 = arith.select %7, %35, %118 : vector<16x128xi1>, vector<16x128xf32>
    %c1_i32_37 = arith.constant 1 : i32
    %120 = tpu.dynamic_rotate %117 by %c1_i32_37 dim 1 : vector<16x128xf32>, i32 -> vector<16x128xf32>
    %121 = arith.select %9, %117, %120 : vector<16x128xi1>, vector<16x128xf32>
    %c1_i32_38 = arith.constant 1 : i32
    %122 = tpu.dynamic_rotate %119 by %c1_i32_38 dim 1 : vector<16x128xf32>, i32 -> vector<16x128xf32>
    %123 = arith.select %9, %119, %122 : vector<16x128xi1>, vector<16x128xf32>
    %124 = arith.mulf %121, %123 : vector<16x128xf32>
    %125 = arith.mulf %17, %124 : vector<16x128xf32>
    %126 = arith.mulf %29, %124 : vector<16x128xf32>
    %127 = arith.subf %109, %125 : vector<16x128xf32>
    %128 = arith.subf %112, %126 : vector<16x128xf32>
    %129 = arith.subf %115, %124 : vector<16x128xf32>
    %130 = arith.addf %81, %125 : vector<16x128xf32>
    %131 = arith.addf %82, %126 : vector<16x128xf32>
    %132 = arith.addf %83, %124 : vector<16x128xf32>
    %133 = arith.mulf %117, %119 : vector<16x128xf32>
    %134 = arith.mulf %12, %133 : vector<16x128xf32>
    %135 = arith.mulf %29, %133 : vector<16x128xf32>
    %cst_39 = arith.constant 2.000000e+00 : f32
    %136 = vector.broadcast %cst_39 : f32 to vector<16x128xf32>
    %137 = arith.mulf %136, %134 : vector<16x128xf32>
    %138 = arith.addf %130, %137 : vector<16x128xf32>
    %cst_40 = arith.constant 2.000000e+00 : f32
    %139 = vector.broadcast %cst_40 : f32 to vector<16x128xf32>
    %140 = arith.mulf %139, %135 : vector<16x128xf32>
    %141 = arith.addf %131, %140 : vector<16x128xf32>
    %cst_41 = arith.constant 2.000000e+00 : f32
    %142 = vector.broadcast %cst_41 : f32 to vector<16x128xf32>
    %143 = arith.mulf %142, %133 : vector<16x128xf32>
    %144 = arith.addf %132, %143 : vector<16x128xf32>
    %c127_i32_42 = arith.constant 127 : i32
    %145 = tpu.dynamic_rotate %117 by %c127_i32_42 dim 1 : vector<16x128xf32>, i32 -> vector<16x128xf32>
    %146 = arith.select %11, %117, %145 : vector<16x128xi1>, vector<16x128xf32>
    %c127_i32_43 = arith.constant 127 : i32
    %147 = tpu.dynamic_rotate %119 by %c127_i32_43 dim 1 : vector<16x128xf32>, i32 -> vector<16x128xf32>
    %148 = arith.select %11, %119, %147 : vector<16x128xi1>, vector<16x128xf32>
    %149 = arith.mulf %146, %148 : vector<16x128xf32>
    %150 = arith.mulf %21, %149 : vector<16x128xf32>
    %151 = arith.mulf %29, %149 : vector<16x128xf32>
    %152 = arith.addf %127, %150 : vector<16x128xf32>
    %153 = arith.addf %128, %151 : vector<16x128xf32>
    %154 = arith.addf %129, %149 : vector<16x128xf32>
    %155 = arith.addf %138, %150 : vector<16x128xf32>
    %156 = arith.addf %141, %151 : vector<16x128xf32>
    %157 = arith.addf %144, %149 : vector<16x128xf32>
    %158 = arith.mulf %153, %157 : vector<16x128xf32>
    %159 = arith.mulf %154, %156 : vector<16x128xf32>
    %160 = arith.subf %158, %159 : vector<16x128xf32>
    %161 = arith.mulf %154, %155 : vector<16x128xf32>
    %162 = arith.mulf %152, %157 : vector<16x128xf32>
    %163 = arith.subf %161, %162 : vector<16x128xf32>
    %164 = arith.mulf %152, %156 : vector<16x128xf32>
    %165 = arith.mulf %153, %155 : vector<16x128xf32>
    %166 = arith.subf %164, %165 : vector<16x128xf32>
    %167 = arith.mulf %160, %160 : vector<16x128xf32>
    %168 = arith.mulf %163, %163 : vector<16x128xf32>
    %169 = arith.addf %167, %168 : vector<16x128xf32>
    %170 = arith.mulf %166, %166 : vector<16x128xf32>
    %171 = arith.addf %169, %170 : vector<16x128xf32>
    %cst_44 = arith.constant 1.000000e-24 : f32
    %172 = vector.broadcast %cst_44 : f32 to vector<16x128xf32>
    %173 = arith.maximumf %171, %172 : vector<16x128xf32>
    %174 = math.rsqrt %173 : vector<16x128xf32>
    %175 = arith.mulf %160, %174 : vector<16x128xf32>
    %176 = arith.mulf %163, %174 : vector<16x128xf32>
    %177 = arith.mulf %166, %174 : vector<16x128xf32>
    %c0_45 = arith.constant 0 : index
    %c0_46 = arith.constant 0 : index
    %c0_47 = arith.constant 0 : index
    %c0_48 = arith.constant 0 : index
    %178 = vector.load %arg2[%c0_45, %c0_46, %c0_47, %c0_48] : memref<1x3x16x128xf32, #tpu.memory_space<vmem>>, vector<1x1x16x128xf32>
    %179 = vector.shape_cast %178 : vector<1x1x16x128xf32> to vector<16x128xf32>
    %180 = vector.shape_cast %175 : vector<16x128xf32> to vector<1x1x16x128xf32>
    tpu.vector_store %arg2[%c0_45, %c0_46, %c0_47, %c0_48], %180 {strides = array<i32>} : memref<1x3x16x128xf32, #tpu.memory_space<vmem>>, vector<1x1x16x128xf32>,
    %c0_49 = arith.constant 0 : index
    %c1 = arith.constant 1 : index
    %c0_50 = arith.constant 0 : index
    %c0_51 = arith.constant 0 : index
    %181 = vector.load %arg2[%c0_49, %c1, %c0_50, %c0_51] : memref<1x3x16x128xf32, #tpu.memory_space<vmem>>, vector<1x1x16x128xf32>
    %182 = vector.shape_cast %181 : vector<1x1x16x128xf32> to vector<16x128xf32>
    %183 = vector.shape_cast %176 : vector<16x128xf32> to vector<1x1x16x128xf32>
    tpu.vector_store %arg2[%c0_49, %c1, %c0_50, %c0_51], %183 {strides = array<i32>} : memref<1x3x16x128xf32, #tpu.memory_space<vmem>>, vector<1x1x16x128xf32>,
    %c0_52 = arith.constant 0 : index
    %c2 = arith.constant 2 : index
    %c0_53 = arith.constant 0 : index
    %c0_54 = arith.constant 0 : index
    %184 = vector.load %arg2[%c0_52, %c2, %c0_53, %c0_54] : memref<1x3x16x128xf32, #tpu.memory_space<vmem>>, vector<1x1x16x128xf32>
    %185 = vector.shape_cast %184 : vector<1x1x16x128xf32> to vector<16x128xf32>
    %186 = vector.shape_cast %177 : vector<16x128xf32> to vector<1x1x16x128xf32>
    tpu.vector_store %arg2[%c0_52, %c2, %c0_53, %c0_54], %186 {strides = array<i32>} : memref<1x3x16x128xf32, #tpu.memory_space<vmem>>, vector<1x1x16x128xf32>,
    return
  }
  func.func @transform_0(%arg0: i32) -> (i32, i32, i32) {
    %c0_i32 = arith.constant 0 : i32
    %c0_i32_0 = arith.constant 0 : i32
    %c0_i32_1 = arith.constant 0 : i32
    return %arg0, %c0_i32, %c0_i32_0 : i32, i32, i32
  }
  func.func @transform_1(%arg0: i32) -> (i32, i32, i32, i32) {
    %c0_i32 = arith.constant 0 : i32
    %c0_i32_0 = arith.constant 0 : i32
    %c0_i32_1 = arith.constant 0 : i32
    %c0_i32_2 = arith.constant 0 : i32
    return %arg0, %c0_i32, %c0_i32_0, %c0_i32_1 : i32, i32, i32, i32
  }
}

module attributes {stable_mosaic.version = 11 : i64} {
  func.func @_render_loss_kernel(%arg0: i32, %arg1: memref<1xf32, #tpu.memory_space<smem>>, %arg2: memref<1x16x128xf32, #tpu.memory_space<vmem>>, %arg3: memref<1x16x128xf32, #tpu.memory_space<vmem>>, %arg4: memref<1x16x128xf32, #tpu.memory_space<vmem>>, %arg5: memref<1x16x128xf32, #tpu.memory_space<vmem>>, %arg6: memref<1x3x16x128xf32, #tpu.memory_space<vmem>>, %arg7: memref<1x1x128xf32, #tpu.memory_space<vmem>>) attributes {dimension_semantics = [#tpu.dimension_semantics<parallel>], iteration_bounds = array<i64: 2>, scalar_prefetch = 0 : i64, scratch_operands = 0 : i64, tpu.core_type = #tpu.core_type<tc>, window_params = [{transform_indices = @transform_0, window_bounds = array<i64: 1>}, {transform_indices = @transform_1, window_bounds = array<i64: 1, 16, 128>}, {transform_indices = @transform_2, window_bounds = array<i64: 1, 16, 128>}, {transform_indices = @transform_3, window_bounds = array<i64: 1, 16, 128>}, {transform_indices = @transform_4, window_bounds = array<i64: 1, 16, 128>}, {transform_indices = @transform_5, window_bounds = array<i64: 1, 3, 16, 128>}, {transform_indices = @transform_6, window_bounds = array<i64: 1, 1, 128>}]} {
    %c0 = arith.constant 0 : index
    %c0_0 = arith.constant 0 : index
    %c0_1 = arith.constant 0 : index
    %0 = vector.load %arg2[%c0, %c0_0, %c0_1] : memref<1x16x128xf32, #tpu.memory_space<vmem>>, vector<1x16x128xf32>
    %1 = vector.shape_cast %0 : vector<1x16x128xf32> to vector<16x128xf32>
    %c0_2 = arith.constant 0 : index
    %c0_3 = arith.constant 0 : index
    %c0_4 = arith.constant 0 : index
    %2 = vector.load %arg3[%c0_2, %c0_3, %c0_4] : memref<1x16x128xf32, #tpu.memory_space<vmem>>, vector<1x16x128xf32>
    %3 = vector.shape_cast %2 : vector<1x16x128xf32> to vector<16x128xf32>
    %c0_5 = arith.constant 0 : index
    %c0_6 = arith.constant 0 : index
    %c0_7 = arith.constant 0 : index
    %4 = vector.load %arg4[%c0_5, %c0_6, %c0_7] : memref<1x16x128xf32, #tpu.memory_space<vmem>>, vector<1x16x128xf32>
    %5 = vector.shape_cast %4 : vector<1x16x128xf32> to vector<16x128xf32>
    %c0_8 = arith.constant 0 : index
    %c0_9 = arith.constant 0 : index
    %c0_10 = arith.constant 0 : index
    %6 = vector.load %arg5[%c0_8, %c0_9, %c0_10] : memref<1x16x128xf32, #tpu.memory_space<vmem>>, vector<1x16x128xf32>
    %7 = vector.shape_cast %6 : vector<1x16x128xf32> to vector<16x128xf32>
    %c0_11 = arith.constant 0 : index
    %8 = memref.load %arg1[%c0_11] : memref<1xf32, #tpu.memory_space<smem>>
    %cst = arith.constant 0.000000e+00 : f32
    %9 = vector.broadcast %cst : f32 to vector<16x128xf32>
    %10 = arith.cmpf one, %5, %9 : vector<16x128xf32>
    %11 = arith.extui %10 : vector<16x128xi1> to vector<16x128xi32>
    %12 = arith.sitofp %11 : vector<16x128xi32> to vector<16x128xf32>
    %cst_12 = arith.constant 0.000000e+00 : f32
    %13 = vector.broadcast %cst_12 : f32 to vector<16x128xf32>
    %14 = arith.cmpf olt, %7, %13 : vector<16x128xf32>
    %15 = vector.broadcast %8 : f32 to vector<16x128xf32>
    %16 = arith.select %14, %15, %7 : vector<16x128xi1>, vector<16x128xf32>
    %17 = arith.mulf %16, %12 : vector<16x128xf32>
    %cst_13 = arith.constant 1.000000e+00 : f32
    %18 = vector.broadcast %cst_13 : f32 to vector<16x128xf32>
    %19 = arith.subf %18, %12 : vector<16x128xf32>
    %20 = arith.mulf %1, %19 : vector<16x128xf32>
    %cst_14 = arith.constant 1.000000e+00 : f32
    %21 = vector.broadcast %cst_14 : f32 to vector<16x128xf32>
    %22 = arith.subf %21, %3 : vector<16x128xf32>
    %23 = arith.mulf %20, %22 : vector<16x128xf32>
    %24 = arith.addf %17, %23 : vector<16x128xf32>
    %25 = tpu.iota {dimensions = array<i32: 1>} : vector<16x128xi32>
    %26 = tpu.iota {dimensions = array<i32: 0>} : vector<16x128xi32>
    %c0_i32 = arith.constant 0 : i32
    %27 = vector.broadcast %c0_i32 : i32 to vector<16x128xi32>
    %28 = arith.cmpi eq, %26, %27 : vector<16x128xi32>
    %c15_i32 = arith.constant 15 : i32
    %29 = vector.broadcast %c15_i32 : i32 to vector<16x128xi32>
    %30 = arith.cmpi eq, %26, %29 : vector<16x128xi32>
    %c0_i32_15 = arith.constant 0 : i32
    %31 = vector.broadcast %c0_i32_15 : i32 to vector<16x128xi32>
    %32 = arith.cmpi eq, %25, %31 : vector<16x128xi32>
    %c127_i32 = arith.constant 127 : i32
    %33 = vector.broadcast %c127_i32 : i32 to vector<16x128xi32>
    %34 = arith.cmpi eq, %25, %33 : vector<16x128xi32>
    %35 = arith.sitofp %25 : vector<16x128xi32> to vector<16x128xf32>
    %36 = arith.sitofp %26 : vector<16x128xi32> to vector<16x128xf32>
    %cst_16 = arith.constant 1.000000e+00 : f32
    %37 = vector.broadcast %cst_16 : f32 to vector<16x128xf32>
    %38 = arith.subf %35, %37 : vector<16x128xf32>
    %cst_17 = arith.constant 0.000000e+00 : f32
    %39 = vector.broadcast %cst_17 : f32 to vector<16x128xf32>
    %40 = arith.maximumf %38, %39 : vector<16x128xf32>
    %cst_18 = arith.constant 1.000000e+00 : f32
    %41 = vector.broadcast %cst_18 : f32 to vector<16x128xf32>
    %42 = arith.addf %35, %41 : vector<16x128xf32>
    %cst_19 = arith.constant 1.270000e+02 : f32
    %43 = vector.broadcast %cst_19 : f32 to vector<16x128xf32>
    %44 = arith.minimumf %42, %43 : vector<16x128xf32>
    %cst_20 = arith.constant 1.000000e+00 : f32
    %45 = vector.broadcast %cst_20 : f32 to vector<16x128xf32>
    %46 = arith.subf %36, %45 : vector<16x128xf32>
    %cst_21 = arith.constant 0.000000e+00 : f32
    %47 = vector.broadcast %cst_21 : f32 to vector<16x128xf32>
    %48 = arith.maximumf %46, %47 : vector<16x128xf32>
    %cst_22 = arith.constant 1.000000e+00 : f32
    %49 = vector.broadcast %cst_22 : f32 to vector<16x128xf32>
    %50 = arith.addf %36, %49 : vector<16x128xf32>
    %cst_23 = arith.constant 1.500000e+01 : f32
    %51 = vector.broadcast %cst_23 : f32 to vector<16x128xf32>
    %52 = arith.minimumf %50, %51 : vector<16x128xf32>
    %53 = arith.mulf %35, %35 : vector<16x128xf32>
    %54 = arith.mulf %36, %36 : vector<16x128xf32>
    %55 = arith.addf %53, %54 : vector<16x128xf32>
    %cst_24 = arith.constant 1.000000e+00 : f32
    %56 = vector.broadcast %cst_24 : f32 to vector<16x128xf32>
    %57 = arith.addf %55, %56 : vector<16x128xf32>
    %58 = math.rsqrt %57 : vector<16x128xf32>
    %c1_i32 = arith.constant 1 : i32
    %59 = tpu.dynamic_rotate %24 by %c1_i32 dim 0 : vector<16x128xf32>, i32 -> vector<16x128xf32>
    %60 = arith.select %28, %24, %59 : vector<16x128xi1>, vector<16x128xf32>
    %c1_i32_25 = arith.constant 1 : i32
    %61 = tpu.dynamic_rotate %58 by %c1_i32_25 dim 0 : vector<16x128xf32>, i32 -> vector<16x128xf32>
    %62 = arith.select %28, %58, %61 : vector<16x128xi1>, vector<16x128xf32>
    %c1_i32_26 = arith.constant 1 : i32
    %63 = tpu.dynamic_rotate %60 by %c1_i32_26 dim 1 : vector<16x128xf32>, i32 -> vector<16x128xf32>
    %64 = arith.select %32, %60, %63 : vector<16x128xi1>, vector<16x128xf32>
    %c1_i32_27 = arith.constant 1 : i32
    %65 = tpu.dynamic_rotate %62 by %c1_i32_27 dim 1 : vector<16x128xf32>, i32 -> vector<16x128xf32>
    %66 = arith.select %32, %62, %65 : vector<16x128xi1>, vector<16x128xf32>
    %67 = arith.mulf %64, %66 : vector<16x128xf32>
    %68 = arith.mulf %40, %67 : vector<16x128xf32>
    %69 = arith.mulf %48, %67 : vector<16x128xf32>
    %cst_28 = arith.constant 0.000000e+00 : f32
    %70 = vector.broadcast %cst_28 : f32 to vector<16x128xf32>
    %71 = arith.subf %70, %68 : vector<16x128xf32>
    %cst_29 = arith.constant 0.000000e+00 : f32
    %72 = vector.broadcast %cst_29 : f32 to vector<16x128xf32>
    %73 = arith.subf %72, %69 : vector<16x128xf32>
    %cst_30 = arith.constant 0.000000e+00 : f32
    %74 = vector.broadcast %cst_30 : f32 to vector<16x128xf32>
    %75 = arith.subf %74, %67 : vector<16x128xf32>
    %cst_31 = arith.constant 0.000000e+00 : f32
    %76 = vector.broadcast %cst_31 : f32 to vector<16x128xf32>
    %77 = arith.subf %76, %68 : vector<16x128xf32>
    %cst_32 = arith.constant 0.000000e+00 : f32
    %78 = vector.broadcast %cst_32 : f32 to vector<16x128xf32>
    %79 = arith.subf %78, %69 : vector<16x128xf32>
    %cst_33 = arith.constant 0.000000e+00 : f32
    %80 = vector.broadcast %cst_33 : f32 to vector<16x128xf32>
    %81 = arith.subf %80, %67 : vector<16x128xf32>
    %82 = arith.mulf %60, %62 : vector<16x128xf32>
    %83 = arith.mulf %35, %82 : vector<16x128xf32>
    %84 = arith.mulf %48, %82 : vector<16x128xf32>
    %cst_34 = arith.constant -2.000000e+00 : f32
    %85 = vector.broadcast %cst_34 : f32 to vector<16x128xf32>
    %86 = arith.mulf %85, %83 : vector<16x128xf32>
    %87 = arith.addf %77, %86 : vector<16x128xf32>
    %cst_35 = arith.constant -2.000000e+00 : f32
    %88 = vector.broadcast %cst_35 : f32 to vector<16x128xf32>
    %89 = arith.mulf %88, %84 : vector<16x128xf32>
    %90 = arith.addf %79, %89 : vector<16x128xf32>
    %cst_36 = arith.constant -2.000000e+00 : f32
    %91 = vector.broadcast %cst_36 : f32 to vector<16x128xf32>
    %92 = arith.mulf %91, %82 : vector<16x128xf32>
    %93 = arith.addf %81, %92 : vector<16x128xf32>
    %c127_i32_37 = arith.constant 127 : i32
    %94 = tpu.dynamic_rotate %60 by %c127_i32_37 dim 1 : vector<16x128xf32>, i32 -> vector<16x128xf32>
    %95 = arith.select %34, %60, %94 : vector<16x128xi1>, vector<16x128xf32>
    %c127_i32_38 = arith.constant 127 : i32
    %96 = tpu.dynamic_rotate %62 by %c127_i32_38 dim 1 : vector<16x128xf32>, i32 -> vector<16x128xf32>
    %97 = arith.select %34, %62, %96 : vector<16x128xi1>, vector<16x128xf32>
    %98 = arith.mulf %95, %97 : vector<16x128xf32>
    %99 = arith.mulf %44, %98 : vector<16x128xf32>
    %100 = arith.mulf %48, %98 : vector<16x128xf32>
    %101 = arith.addf %71, %99 : vector<16x128xf32>
    %102 = arith.addf %73, %100 : vector<16x128xf32>
    %103 = arith.addf %75, %98 : vector<16x128xf32>
    %104 = arith.subf %87, %99 : vector<16x128xf32>
    %105 = arith.subf %90, %100 : vector<16x128xf32>
    %106 = arith.subf %93, %98 : vector<16x128xf32>
    %c1_i32_39 = arith.constant 1 : i32
    %107 = tpu.dynamic_rotate %24 by %c1_i32_39 dim 1 : vector<16x128xf32>, i32 -> vector<16x128xf32>
    %108 = arith.select %32, %24, %107 : vector<16x128xi1>, vector<16x128xf32>
    %c1_i32_40 = arith.constant 1 : i32
    %109 = tpu.dynamic_rotate %58 by %c1_i32_40 dim 1 : vector<16x128xf32>, i32 -> vector<16x128xf32>
    %110 = arith.select %32, %58, %109 : vector<16x128xi1>, vector<16x128xf32>
    %111 = arith.mulf %108, %110 : vector<16x128xf32>
    %112 = arith.mulf %40, %111 : vector<16x128xf32>
    %113 = arith.mulf %36, %111 : vector<16x128xf32>
    %cst_41 = arith.constant -2.000000e+00 : f32
    %114 = vector.broadcast %cst_41 : f32 to vector<16x128xf32>
    %115 = arith.mulf %114, %112 : vector<16x128xf32>
    %116 = arith.addf %101, %115 : vector<16x128xf32>
    %cst_42 = arith.constant -2.000000e+00 : f32
    %117 = vector.broadcast %cst_42 : f32 to vector<16x128xf32>
    %118 = arith.mulf %117, %113 : vector<16x128xf32>
    %119 = arith.addf %102, %118 : vector<16x128xf32>
    %cst_43 = arith.constant -2.000000e+00 : f32
    %120 = vector.broadcast %cst_43 : f32 to vector<16x128xf32>
    %121 = arith.mulf %120, %111 : vector<16x128xf32>
    %122 = arith.addf %103, %121 : vector<16x128xf32>
    %c127_i32_44 = arith.constant 127 : i32
    %123 = tpu.dynamic_rotate %24 by %c127_i32_44 dim 1 : vector<16x128xf32>, i32 -> vector<16x128xf32>
    %124 = arith.select %34, %24, %123 : vector<16x128xi1>, vector<16x128xf32>
    %c127_i32_45 = arith.constant 127 : i32
    %125 = tpu.dynamic_rotate %58 by %c127_i32_45 dim 1 : vector<16x128xf32>, i32 -> vector<16x128xf32>
    %126 = arith.select %34, %58, %125 : vector<16x128xi1>, vector<16x128xf32>
    %127 = arith.mulf %124, %126 : vector<16x128xf32>
    %128 = arith.mulf %44, %127 : vector<16x128xf32>
    %129 = arith.mulf %36, %127 : vector<16x128xf32>
    %cst_46 = arith.constant 2.000000e+00 : f32
    %130 = vector.broadcast %cst_46 : f32 to vector<16x128xf32>
    %131 = arith.mulf %130, %128 : vector<16x128xf32>
    %132 = arith.addf %116, %131 : vector<16x128xf32>
    %cst_47 = arith.constant 2.000000e+00 : f32
    %133 = vector.broadcast %cst_47 : f32 to vector<16x128xf32>
    %134 = arith.mulf %133, %129 : vector<16x128xf32>
    %135 = arith.addf %119, %134 : vector<16x128xf32>
    %cst_48 = arith.constant 2.000000e+00 : f32
    %136 = vector.broadcast %cst_48 : f32 to vector<16x128xf32>
    %137 = arith.mulf %136, %127 : vector<16x128xf32>
    %138 = arith.addf %122, %137 : vector<16x128xf32>
    %c15_i32_49 = arith.constant 15 : i32
    %139 = tpu.dynamic_rotate %24 by %c15_i32_49 dim 0 : vector<16x128xf32>, i32 -> vector<16x128xf32>
    %140 = arith.select %30, %24, %139 : vector<16x128xi1>, vector<16x128xf32>
    %c15_i32_50 = arith.constant 15 : i32
    %141 = tpu.dynamic_rotate %58 by %c15_i32_50 dim 0 : vector<16x128xf32>, i32 -> vector<16x128xf32>
    %142 = arith.select %30, %58, %141 : vector<16x128xi1>, vector<16x128xf32>
    %c1_i32_51 = arith.constant 1 : i32
    %143 = tpu.dynamic_rotate %140 by %c1_i32_51 dim 1 : vector<16x128xf32>, i32 -> vector<16x128xf32>
    %144 = arith.select %32, %140, %143 : vector<16x128xi1>, vector<16x128xf32>
    %c1_i32_52 = arith.constant 1 : i32
    %145 = tpu.dynamic_rotate %142 by %c1_i32_52 dim 1 : vector<16x128xf32>, i32 -> vector<16x128xf32>
    %146 = arith.select %32, %142, %145 : vector<16x128xi1>, vector<16x128xf32>
    %147 = arith.mulf %144, %146 : vector<16x128xf32>
    %148 = arith.mulf %40, %147 : vector<16x128xf32>
    %149 = arith.mulf %52, %147 : vector<16x128xf32>
    %150 = arith.subf %132, %148 : vector<16x128xf32>
    %151 = arith.subf %135, %149 : vector<16x128xf32>
    %152 = arith.subf %138, %147 : vector<16x128xf32>
    %153 = arith.addf %104, %148 : vector<16x128xf32>
    %154 = arith.addf %105, %149 : vector<16x128xf32>
    %155 = arith.addf %106, %147 : vector<16x128xf32>
    %156 = arith.mulf %140, %142 : vector<16x128xf32>
    %157 = arith.mulf %35, %156 : vector<16x128xf32>
    %158 = arith.mulf %52, %156 : vector<16x128xf32>
    %cst_53 = arith.constant 2.000000e+00 : f32
    %159 = vector.broadcast %cst_53 : f32 to vector<16x128xf32>
    %160 = arith.mulf %159, %157 : vector<16x128xf32>
    %161 = arith.addf %153, %160 : vector<16x128xf32>
    %cst_54 = arith.constant 2.000000e+00 : f32
    %162 = vector.broadcast %cst_54 : f32 to vector<16x128xf32>
    %163 = arith.mulf %162, %158 : vector<16x128xf32>
    %164 = arith.addf %154, %163 : vector<16x128xf32>
    %cst_55 = arith.constant 2.000000e+00 : f32
    %165 = vector.broadcast %cst_55 : f32 to vector<16x128xf32>
    %166 = arith.mulf %165, %156 : vector<16x128xf32>
    %167 = arith.addf %155, %166 : vector<16x128xf32>
    %c127_i32_56 = arith.constant 127 : i32
    %168 = tpu.dynamic_rotate %140 by %c127_i32_56 dim 1 : vector<16x128xf32>, i32 -> vector<16x128xf32>
    %169 = arith.select %34, %140, %168 : vector<16x128xi1>, vector<16x128xf32>
    %c127_i32_57 = arith.constant 127 : i32
    %170 = tpu.dynamic_rotate %142 by %c127_i32_57 dim 1 : vector<16x128xf32>, i32 -> vector<16x128xf32>
    %171 = arith.select %34, %142, %170 : vector<16x128xi1>, vector<16x128xf32>
    %172 = arith.mulf %169, %171 : vector<16x128xf32>
    %173 = arith.mulf %44, %172 : vector<16x128xf32>
    %174 = arith.mulf %52, %172 : vector<16x128xf32>
    %175 = arith.addf %150, %173 : vector<16x128xf32>
    %176 = arith.addf %151, %174 : vector<16x128xf32>
    %177 = arith.addf %152, %172 : vector<16x128xf32>
    %178 = arith.addf %161, %173 : vector<16x128xf32>
    %179 = arith.addf %164, %174 : vector<16x128xf32>
    %180 = arith.addf %167, %172 : vector<16x128xf32>
    %181 = arith.mulf %176, %180 : vector<16x128xf32>
    %182 = arith.mulf %177, %179 : vector<16x128xf32>
    %183 = arith.subf %181, %182 : vector<16x128xf32>
    %184 = arith.mulf %177, %178 : vector<16x128xf32>
    %185 = arith.mulf %175, %180 : vector<16x128xf32>
    %186 = arith.subf %184, %185 : vector<16x128xf32>
    %187 = arith.mulf %175, %179 : vector<16x128xf32>
    %188 = arith.mulf %176, %178 : vector<16x128xf32>
    %189 = arith.subf %187, %188 : vector<16x128xf32>
    %190 = arith.mulf %183, %183 : vector<16x128xf32>
    %191 = arith.mulf %186, %186 : vector<16x128xf32>
    %192 = arith.addf %190, %191 : vector<16x128xf32>
    %193 = arith.mulf %189, %189 : vector<16x128xf32>
    %194 = arith.addf %192, %193 : vector<16x128xf32>
    %cst_58 = arith.constant 1.000000e-24 : f32
    %195 = vector.broadcast %cst_58 : f32 to vector<16x128xf32>
    %196 = arith.maximumf %194, %195 : vector<16x128xf32>
    %197 = math.rsqrt %196 : vector<16x128xf32>
    %198 = arith.mulf %183, %197 : vector<16x128xf32>
    %199 = arith.mulf %186, %197 : vector<16x128xf32>
    %200 = arith.mulf %189, %197 : vector<16x128xf32>
    %201 = arith.subf %1, %24 : vector<16x128xf32>
    %202 = math.absf %201 : vector<16x128xf32>
    %c0_59 = arith.constant 0 : index
    %c0_60 = arith.constant 0 : index
    %c0_61 = arith.constant 0 : index
    %c0_62 = arith.constant 0 : index
    %203 = vector.load %arg6[%c0_59, %c0_60, %c0_61, %c0_62] : memref<1x3x16x128xf32, #tpu.memory_space<vmem>>, vector<1x1x16x128xf32>
    %204 = vector.shape_cast %203 : vector<1x1x16x128xf32> to vector<16x128xf32>
    %205 = arith.subf %204, %198 : vector<16x128xf32>
    %206 = math.absf %205 : vector<16x128xf32>
    %c0_63 = arith.constant 0 : index
    %c1 = arith.constant 1 : index
    %c0_64 = arith.constant 0 : index
    %c0_65 = arith.constant 0 : index
    %207 = vector.load %arg6[%c0_63, %c1, %c0_64, %c0_65] : memref<1x3x16x128xf32, #tpu.memory_space<vmem>>, vector<1x1x16x128xf32>
    %208 = vector.shape_cast %207 : vector<1x1x16x128xf32> to vector<16x128xf32>
    %209 = arith.subf %208, %199 : vector<16x128xf32>
    %210 = math.absf %209 : vector<16x128xf32>
    %211 = arith.addf %206, %210 : vector<16x128xf32>
    %c0_66 = arith.constant 0 : index
    %c2 = arith.constant 2 : index
    %c0_67 = arith.constant 0 : index
    %c0_68 = arith.constant 0 : index
    %212 = vector.load %arg6[%c0_66, %c2, %c0_67, %c0_68] : memref<1x3x16x128xf32, #tpu.memory_space<vmem>>, vector<1x1x16x128xf32>
    %213 = vector.shape_cast %212 : vector<1x1x16x128xf32> to vector<16x128xf32>
    %214 = arith.subf %213, %200 : vector<16x128xf32>
    %215 = math.absf %214 : vector<16x128xf32>
    %216 = arith.addf %211, %215 : vector<16x128xf32>
    %cst_69 = arith.constant 0.333333343 : f32
    %217 = vector.broadcast %cst_69 : f32 to vector<16x128xf32>
    %218 = arith.mulf %216, %217 : vector<16x128xf32>
    %219 = arith.addf %202, %218 : vector<16x128xf32>
    %220 = vector.shape_cast %219 : vector<16x128xf32> to vector<1x16x128xf32>
    %cst_70 = arith.constant dense<0.000000e+00> : vector<1xf32>
    %221 = vector.multi_reduction <add>, %220, %cst_70 [1, 2] : vector<1x16x128xf32> to vector<1xf32>
    %222 = vector.shape_cast %221 : vector<1xf32> to vector<1x1x1xf32>
    %223 = vector.extract %222[0, 0, 0] : f32 from vector<1x1x1xf32>
    %cst_71 = arith.constant 2.048000e+03 : f32
    %224 = arith.divf %223, %cst_71 : f32
    %225 = vector.broadcast %224 : f32 to vector<1x1x128xf32>
    %c0_72 = arith.constant 0 : index
    %c0_73 = arith.constant 0 : index
    %c0_74 = arith.constant 0 : index
    %226 = vector.load %arg7[%c0_72, %c0_73, %c0_74] : memref<1x1x128xf32, #tpu.memory_space<vmem>>, vector<1x1x128xf32>
    tpu.vector_store %arg7[%c0_72, %c0_73, %c0_74], %225 {strides = array<i32>} : memref<1x1x128xf32, #tpu.memory_space<vmem>>, vector<1x1x128xf32>,
    return
  }
  func.func @transform_0(%arg0: i32) -> i32 {
    %c0_i32 = arith.constant 0 : i32
    %c0_i32_0 = arith.constant 0 : i32
    return %c0_i32 : i32
  }
  func.func @transform_1(%arg0: i32) -> (i32, i32, i32) {
    %c0_i32 = arith.constant 0 : i32
    %c0_i32_0 = arith.constant 0 : i32
    %c0_i32_1 = arith.constant 0 : i32
    return %arg0, %c0_i32, %c0_i32_0 : i32, i32, i32
  }
  func.func @transform_2(%arg0: i32) -> (i32, i32, i32) {
    %c0_i32 = arith.constant 0 : i32
    %c0_i32_0 = arith.constant 0 : i32
    %c0_i32_1 = arith.constant 0 : i32
    return %arg0, %c0_i32, %c0_i32_0 : i32, i32, i32
  }
  func.func @transform_3(%arg0: i32) -> (i32, i32, i32) {
    %c0_i32 = arith.constant 0 : i32
    %c0_i32_0 = arith.constant 0 : i32
    %c0_i32_1 = arith.constant 0 : i32
    return %arg0, %c0_i32, %c0_i32_0 : i32, i32, i32
  }
  func.func @transform_4(%arg0: i32) -> (i32, i32, i32) {
    %c0_i32 = arith.constant 0 : i32
    %c0_i32_0 = arith.constant 0 : i32
    %c0_i32_1 = arith.constant 0 : i32
    return %arg0, %c0_i32, %c0_i32_0 : i32, i32, i32
  }
  func.func @transform_5(%arg0: i32) -> (i32, i32, i32, i32) {
    %c0_i32 = arith.constant 0 : i32
    %c0_i32_0 = arith.constant 0 : i32
    %c0_i32_1 = arith.constant 0 : i32
    %c0_i32_2 = arith.constant 0 : i32
    return %arg0, %c0_i32, %c0_i32_0, %c0_i32_1 : i32, i32, i32, i32
  }
  func.func @transform_6(%arg0: i32) -> (i32, i32, i32) {
    %c0_i32 = arith.constant 0 : i32
    %c0_i32_0 = arith.constant 0 : i32
    %c0_i32_1 = arith.constant 0 : i32
    return %arg0, %c0_i32, %c0_i32_0 : i32, i32, i32
  }
}

</mosaic_0001>

<llo_original>
// kernel: loss_batched_forward.3
$region0: #{loss_batched_forward.3}
  #allocation0 [shape = 'u32[]', space=smem, size = 0x4, offset = 0x4, fixed_abs, tag = 'smem constant byte address 0x4 - core index']
  #allocation1 [shape = 'u32[144,128]{1,0:T(1,128)}', space=vmem, size = 0x12000, scoped, tag = 'internal scratch']
  %s0 = inlined_call_operand.vmem [shape: f32[2,16,128], index: 0, kind: input, shape index: {}]
  %s1 = inlined_call_operand.vmem [shape: f32[2,3,16,128], index: 1, kind: output, shape index: {}]
  %s2 = sld [smem:[#allocation0]]
  $region37: #{loss_batched_forward.3} parent=0
    _
  %s4 = ssub.s32 1, %s2
  %s5 = scalar_select 0, %s4, %s2
  loop: start=0, step=1, limit=4
  $region2: #{loss_batched_forward.3} parent=0 // loop_pre_header
    _
  $region3: #{loss_batched_forward.3} parent=0 // loop_header
    %s7 = sphi 0, %s11
    %p8 = scmp.ge.s32.totalorder %s7, 4
    %s17 = sphi 0, %s19
    %s20 = sphi 0, %s17
    %s21 = sphi 0, %s20
    %s37 = sphi 0, %s21
    %s43 = sphi 0, %s45
    %s46 = sphi 0, %s43
    %s47 = sphi 0, %s46
    %s63 = sphi 0, %s47
  $region4: #{loss_batched_forward.3} parent=0 // loop_header_branch
    %10 = sbr.rel (%p8) target = $region8
  $region5: #{loss_batched_forward.3} parent=0 // loop_body
    %s12 = ssub.s32 %s7, 1
    %s13 = ssub.s32 %s7, 2
    %s14 = sadd.s32 %s7, 1
    %s15 = ssub.s32 %s7, %s14
    %p16 = scmp.eq.s32.totalorder %s15, 0
    %s18 = sadd.s32 %s17, 1
    %s19 = scalar_select %p16, %s17, %s18
    %p22 = pneg %p16
    %p23 = scmp.eq.s32.totalorder %s7, 1
    %p24 = por %p22, %p23
    %p25 = scmp.ne.s32.totalorder %s17, %s20
    %p26 = scmp.eq.s32.totalorder %s7, 0
    %p27 = por %p25, %p26
    %p28 = scmp.ne.s32.totalorder %s17, %s20
    %p29 = scmp.eq.s32.totalorder %s12, 1
    %p30 = por %p28, %p29
    %p31 = scmp.ne.s32.totalorder %s20, %s21
    %p32 = scmp.eq.s32.totalorder %s12, 0
    %p33 = por %p31, %p32
    %p34 = scmp.ne.s32.totalorder %s20, %s21
    %p35 = scmp.eq.s32.totalorder %s13, 1
    %p36 = por %p34, %p35
    %p38 = scmp.ne.s32.totalorder %s21, %s37
    %p39 = scmp.eq.s32.totalorder %s13, 0
    %p40 = por %p38, %p39
    %s41 = ssub.s32 %s7, %s14
    %p42 = scmp.eq.s32.totalorder %s41, 0
    %s44 = sadd.s32 %s43, 1
    %s45 = scalar_select %p42, %s43, %s44
    %p48 = pneg %p42
    %p49 = scmp.eq.s32.totalorder %s7, 1
    %p50 = por %p48, %p49
    %p51 = scmp.ne.s32.totalorder %s43, %s46
    %p52 = scmp.eq.s32.totalorder %s7, 0
    %p53 = por %p51, %p52
    %p54 = scmp.ne.s32.totalorder %s43, %s46
    %p55 = scmp.eq.s32.totalorder %s12, 1
    %p56 = por %p54, %p55
    %p57 = scmp.ne.s32.totalorder %s46, %s47
    %p58 = scmp.eq.s32.totalorder %s12, 0
    %p59 = por %p57, %p58
    %p60 = scmp.ne.s32.totalorder %s46, %s47
    %p61 = scmp.eq.s32.totalorder %s13, 1
    %p62 = por %p60, %p61
    %p64 = scmp.ne.s32.totalorder %s47, %s63
    %p65 = scmp.eq.s32.totalorder %s13, 0
    %p66 = por %p64, %p65
    %p67 = scmp.le.s32.totalorder 1, %s7
    %p68 = scmp.lt.s32.totalorder %s7, 3
    %p69 = pnand %p67, %p68
    %p70 = pneg %p69
    // Predicated region
    $region9: #{loss_batched_forward.3} parent=5 // pred_check
      _
    $region10: #{loss_batched_forward.3} parent=5 // pred_check_branch
      %72 = sbr.rel (%p69) target = $region12
    $region11: #{loss_batched_forward.3} parent=5 // pred_region
      %s73 = ssub.s32 %s7, 1
    $region12: #{loss_batched_forward.3} parent=5 // pred_fallthru
      _
    %p74 = scmp.lt.s32.totalorder %s7, 2
    // Predicated region
    $region13: #{loss_batched_forward.3} parent=5 // pred_check
      %p75 = pneg %p74
    $region14: #{loss_batched_forward.3} parent=5 // pred_check_branch
      %77 = sbr.rel (%p75) target = $region16
    $region15: #{loss_batched_forward.3} parent=5 // pred_region
      // Predicated region
      $region17: #{loss_batched_forward.3} parent=15 // pred_check
        %p78 = pneg %p27
      $region18: #{loss_batched_forward.3} parent=15 // pred_check_branch
        %80 = sbr.rel (%p78) target = $region20
      $region19: #{loss_batched_forward.3} parent=15 // pred_region
        %p81 = scmp.lt.s32.totalorder %s7, 1
        %s82 = scalar_select %p81, %s7, 1
        %s83 = smul.addr %s82, 2
        %s84 = smul.addr %s83, 8
        %s85 = scalar_lea.vmem %s0, %s84
      $region20: #{loss_batched_forward.3} parent=15 // pred_fallthru
        _
    $region16: #{loss_batched_forward.3} parent=5 // pred_fallthru
      _
    %p86 = scmp.le.s32.totalorder 1, %s7
    %p87 = scmp.lt.s32.totalorder %s7, 3
    %p88 = pnand %p86, %p87
    %p89 = pneg %p88
    // Predicated region
    $region21: #{loss_batched_forward.3} parent=5 // pred_check
      _
    $region22: #{loss_batched_forward.3} parent=5 // pred_check_branch
      %91 = sbr.rel (%p88) target = $region24
    $region23: #{loss_batched_forward.3} parent=5 // pred_region
      %s92 = ssub.s32 %s7, 1
      %p93 = scmp.lt.s32.totalorder %s12, 1
      %s94 = scalar_select %p93, %s12, 1
      %s95 = smul.addr %s94, 2
      %s96 = smul.addr %s95, 8
      %s97 = scalar_lea.vmem %s0, %s96
      %p98 = pneg %p33
      %p99 = pneg %p30
      %p100 = pneg %p59
      %p101 = pneg %p56
      %p102 = scmp.lt.s32.totalorder %s12, 1
      %s103 = scalar_select %p102, %s12, 1
      %s104 = smul.addr %s103, 6
      %s105 = smul.addr %s104, 8
      %s106 = scalar_lea.vmem %s1, %s105
      %p107 = scmp.lt.s32.totalorder %s12, 1
      %s108 = scalar_select %p107, %s12, 1
      %s109 = smul.addr %s108, 2
      %s110 = smul.addr %s109, 8
      %s111 = scalar_lea.vmem %s0, %s110
      %p112 = scmp.lt.s32.totalorder %s12, 1
      %s113 = scalar_select %p112, %s12, 1
      %s114 = smul.addr %s113, 6
      %s115 = smul.addr %s114, 8
      %s116 = scalar_lea.vmem %s1, %s115
      %v117 = vld [vmem:[%s111] sm:$0xff]
      %v118 = vld [vmem:[%s111 + $0x8] sm:$0xff]
      %v119 = vlaneseq
      %v120 = vand.u32 %v119, 127
      %v121 = vlaneseq
      %v122 = vshrl.u32 %v121, 7
      %v123 = vadd.s32 %v122, 8
      %vm124 = vcmp.eq.s32.totalorder %v122, 0
      %vm125 = vcmp.eq.s32.totalorder %v123, 0
      %vm126 = vcmp.eq.s32.totalorder %v122, 15
      %vm127 = vcmp.eq.s32.totalorder %v123, 15
      %vm128 = vcmp.eq.s32.totalorder %v120, 0
      %vm129 = vcmp.eq.s32.totalorder %v120, 127
      %v130 = vcvt.s32.f32 %v120
      %v131 = vcvt.s32.f32 %v122
      %v132 = vcvt.s32.f32 %v123
      %v133 = vsub.f32 %v130, 1.0
      %v134 = vmax.f32 %v133, 0.0
      %v135 = vadd.f32 %v130, 1.0
      %v136 = vmin.f32 %v135, 127.0
      %v137 = vsub.f32 %v131, 1.0
      %v138 = vsub.f32 %v132, 1.0
      %v139 = vmax.f32 %v137, 0.0
      %v140 = vmax.f32 %v138, 0.0
      %v141 = vadd.f32 %v131, 1.0
      %v142 = vadd.f32 %v132, 1.0
      %v143 = vmin.f32 %v141, 15.0
      %v144 = vmin.f32 %v142, 15.0
      %v145 = vmul.f32 %v130, %v130
      %v146 = vmul.f32 %v131, %v131
      %v147 = vmul.f32 %v132, %v132
      %v148 = vadd.f32 %v145, %v146
      %v149 = vadd.f32 %v145, %v147
      %v150 = vadd.f32 %v148, 1.0
      %v151 = vadd.f32 %v149, 1.0
      %v152 = vrsqrt.pop %v150
      %v153 = vrsqrt.pop %v151
      %v154 = vrot.slane %v117, 7
      %v155 = vrot.slane %v118, 7
      %vm156 = vcmp.lt.s32.totalorder %v122, 1
      %v157 = vsel %vm156, %v154, %v155
      %v158 = vsel %vm156, %v155, %v154
      %v159 = vsel %vm124, %v117, %v158
      %v160 = vsel %vm125, %v118, %v157
      %v161 = vrot.slane %v152, 7
      %v162 = vrot.slane %v153, 7
      %v163 = vsel %vm156, %v161, %v162
      %v164 = vsel %vm156, %v162, %v161
      %v165 = vsel %vm124, %v152, %v164
      %v166 = vsel %vm125, %v153, %v163
      %167 = vrot.lane.b32.xlu0 %v159, 1
      %v168 = vpop.permute.xlu0 %167
      %169 = vrot.lane.b32.xlu0 %v160, 1
      %v170 = vpop.permute.xlu0 %169
      %v171 = vsel %vm128, %v159, %v168
      %v172 = vsel %vm128, %v160, %v170
      %173 = vrot.lane.b32.xlu0 %v165, 1
      %v174 = vpop.permute.xlu0 %173
      %175 = vrot.lane.b32.xlu0 %v166, 1
      %v176 = vpop.permute.xlu0 %175
      %v177 = vsel %vm128, %v165, %v174
      %v178 = vsel %vm128, %v166, %v176
      %v179 = vmul.f32 %v171, %v177
      %v180 = vmul.f32 %v172, %v178
      %v181 = vmul.f32 %v134, %v179
      %v182 = vmul.f32 %v134, %v180
      %v183 = vmul.f32 %v139, %v179
      %v184 = vmul.f32 %v140, %v180
      %v185 = vsub.f32 0.0, %v181
      %v186 = vsub.f32 0.0, %v182
      %v187 = vsub.f32 0.0, %v183
      %v188 = vsub.f32 0.0, %v184
      %v189 = vsub.f32 0.0, %v179
      %v190 = vsub.f32 0.0, %v180
      %v191 = vmul.f32 %v159, %v165
      %v192 = vmul.f32 %v160, %v166
      %v193 = vmul.f32 %v130, %v191
      %v194 = vmul.f32 %v130, %v192
      %v195 = vmul.f32 %v139, %v191
      %v196 = vmul.f32 %v140, %v192
      %v197 = vmul.f32 %v193, -2.0
      %v198 = vmul.f32 %v194, -2.0
      %v199 = vadd.f32 %v185, %v197
      %v200 = vadd.f32 %v186, %v198
      %v201 = vmul.f32 %v195, -2.0
      %v202 = vmul.f32 %v196, -2.0
      %v203 = vadd.f32 %v187, %v201
      %v204 = vadd.f32 %v188, %v202
      %v205 = vmul.f32 %v191, -2.0
      %v206 = vmul.f32 %v192, -2.0
      %v207 = vadd.f32 %v189, %v205
      %v208 = vadd.f32 %v190, %v206
      %209 = vrot.lane.b32.xlu0 %v159, 127
      %v210 = vpop.permute.xlu0 %209
      %211 = vrot.lane.b32.xlu0 %v160, 127
      %v212 = vpop.permute.xlu0 %211
      %v213 = vsel %vm129, %v159, %v210
      %v214 = vsel %vm129, %v160, %v212
      %215 = vrot.lane.b32.xlu0 %v165, 127
      %v216 = vpop.permute.xlu0 %215
      %217 = vrot.lane.b32.xlu0 %v166, 127
      %v218 = vpop.permute.xlu0 %217
      %v219 = vsel %vm129, %v165, %v216
      %v220 = vsel %vm129, %v166, %v218
      %v221 = vmul.f32 %v213, %v219
      %v222 = vmul.f32 %v214, %v220
      %v223 = vmul.f32 %v136, %v221
      %v224 = vmul.f32 %v136, %v222
      %v225 = vmul.f32 %v139, %v221
      %v226 = vmul.f32 %v140, %v222
      %v227 = vadd.f32 %v185, %v223
      %v228 = vadd.f32 %v186, %v224
      %v229 = vadd.f32 %v187, %v225
      %v230 = vadd.f32 %v188, %v226
      %v231 = vadd.f32 %v189, %v221
      %v232 = vadd.f32 %v190, %v222
      %v233 = vsub.f32 %v199, %v223
      %v234 = vsub.f32 %v200, %v224
      %v235 = vsub.f32 %v203, %v225
      %v236 = vsub.f32 %v204, %v226
      %v237 = vsub.f32 %v207, %v221
      %v238 = vsub.f32 %v208, %v222
      %239 = vrot.lane.b32.xlu0 %v117, 1
      %v240 = vpop.permute.xlu0 %239
      %241 = vrot.lane.b32.xlu0 %v118, 1
      %v242 = vpop.permute.xlu0 %241
      %v243 = vsel %vm128, %v117, %v240
      %v244 = vsel %vm128, %v118, %v242
      %245 = vrot.lane.b32.xlu0 %v152, 1
      %v246 = vpop.permute.xlu0 %245
      %247 = vrot.lane.b32.xlu0 %v153, 1
      %v248 = vpop.permute.xlu0 %247
      %v249 = vsel %vm128, %v152, %v246
      %v250 = vsel %vm128, %v153, %v248
      %v251 = vmul.f32 %v243, %v249
      %v252 = vmul.f32 %v244, %v250
      %v253 = vmul.f32 %v134, %v251
      %v254 = vmul.f32 %v134, %v252
      %v255 = vmul.f32 %v131, %v251
      %v256 = vmul.f32 %v132, %v252
      %v257 = vmul.f32 %v253, -2.0
      %v258 = vmul.f32 %v254, -2.0
      %v259 = vadd.f32 %v227, %v257
      %v260 = vadd.f32 %v228, %v258
      %v261 = vmul.f32 %v255, -2.0
      %v262 = vmul.f32 %v256, -2.0
      %v263 = vadd.f32 %v229, %v261
      %v264 = vadd.f32 %v230, %v262
      %v265 = vmul.f32 %v251, -2.0
      %v266 = vmul.f32 %v252, -2.0
      %v267 = vadd.f32 %v231, %v265
      %v268 = vadd.f32 %v232, %v266
      %269 = vrot.lane.b32.xlu0 %v117, 127
      %v270 = vpop.permute.xlu0 %269
      %271 = vrot.lane.b32.xlu0 %v118, 127
      %v272 = vpop.permute.xlu0 %271
      %v273 = vsel %vm129, %v117, %v270
      %v274 = vsel %vm129, %v118, %v272
      %275 = vrot.lane.b32.xlu0 %v152, 127
      %v276 = vpop.permute.xlu0 %275
      %277 = vrot.lane.b32.xlu0 %v153, 127
      %v278 = vpop.permute.xlu0 %277
      %v279 = vsel %vm129, %v152, %v276
      %v280 = vsel %vm129, %v153, %v278
      %v281 = vmul.f32 %v273, %v279
      %v282 = vmul.f32 %v274, %v280
      %v283 = vmul.f32 %v136, %v281
      %v284 = vmul.f32 %v136, %v282
      %v285 = vmul.f32 %v131, %v281
      %v286 = vmul.f32 %v132, %v282
      %v287 = vmul.f32 %v283, 2.0
      %v288 = vmul.f32 %v284, 2.0
      %v289 = vadd.f32 %v259, %v287
      %v290 = vadd.f32 %v260, %v288
      %v291 = vmul.f32 %v285, 2.0
      %v292 = vmul.f32 %v286, 2.0
      %v293 = vadd.f32 %v263, %v291
      %v294 = vadd.f32 %v264, %v292
      %v295 = vmul.f32 %v281, 2.0
      %v296 = vmul.f32 %v282, 2.0
      %v297 = vadd.f32 %v267, %v295
      %v298 = vadd.f32 %v268, %v296
      %v299 = vrot.slane %v117, 1
      %v300 = vrot.slane %v118, 1
      %vm301 = vcmp.lt.s32.totalorder %v122, 7
      %v302 = vsel %vm301, %v299, %v300
      %v303 = vsel %vm301, %v300, %v299
      %v304 = vsel %vm126, %v117, %v302
      %v305 = vsel %vm127, %v118, %v303
      %v306 = vrot.slane %v152, 1
      %v307 = vrot.slane %v153, 1
      %v308 = vsel %vm301, %v306, %v307
      %v309 = vsel %vm301, %v307, %v306
      %v310 = vsel %vm126, %v152, %v308
      %v311 = vsel %vm127, %v153, %v309
      %312 = vrot.lane.b32.xlu0 %v304, 1
      %v313 = vpop.permute.xlu0 %312
      %314 = vrot.lane.b32.xlu0 %v305, 1
      %v315 = vpop.permute.xlu0 %314
      %v316 = vsel %vm128, %v304, %v313
      %v317 = vsel %vm128, %v305, %v315
      %318 = vrot.lane.b32.xlu0 %v310, 1
      %v319 = vpop.permute.xlu0 %318
      %320 = vrot.lane.b32.xlu0 %v311, 1
      %v321 = vpop.permute.xlu0 %320
      %v322 = vsel %vm128, %v310, %v319
      %v323 = vsel %vm128, %v311, %v321
      %v324 = vmul.f32 %v316, %v322
      %v325 = vmul.f32 %v317, %v323
      %v326 = vmul.f32 %v134, %v324
      %v327 = vmul.f32 %v134, %v325
      %v328 = vmul.f32 %v143, %v324
      %v329 = vmul.f32 %v144, %v325
      %v330 = vsub.f32 %v289, %v326
      %v331 = vsub.f32 %v290, %v327
      %v332 = vsub.f32 %v293, %v328
      %v333 = vsub.f32 %v294, %v329
      %v334 = vsub.f32 %v297, %v324
      %v335 = vsub.f32 %v298, %v325
      %v336 = vadd.f32 %v233, %v326
      %v337 = vadd.f32 %v234, %v327
      %v338 = vadd.f32 %v235, %v328
      %v339 = vadd.f32 %v236, %v329
      %v340 = vadd.f32 %v237, %v324
      %v341 = vadd.f32 %v238, %v325
      %v342 = vmul.f32 %v304, %v310
      %v343 = vmul.f32 %v305, %v311
      %v344 = vmul.f32 %v130, %v342
      %v345 = vmul.f32 %v130, %v343
      %v346 = vmul.f32 %v143, %v342
      %v347 = vmul.f32 %v144, %v343
      %v348 = vmul.f32 %v344, 2.0
      %v349 = vmul.f32 %v345, 2.0
      %v350 = vadd.f32 %v336, %v348
      %v351 = vadd.f32 %v337, %v349
      %v352 = vmul.f32 %v346, 2.0
      %v353 = vmul.f32 %v347, 2.0
      %v354 = vadd.f32 %v338, %v352
      %v355 = vadd.f32 %v339, %v353
      %v356 = vmul.f32 %v342, 2.0
      %v357 = vmul.f32 %v343, 2.0
      %v358 = vadd.f32 %v340, %v356
      %v359 = vadd.f32 %v341, %v357
      %360 = vrot.lane.b32.xlu0 %v304, 127
      %v361 = vpop.permute.xlu0 %360
      %362 = vrot.lane.b32.xlu0 %v305, 127
      %v363 = vpop.permute.xlu0 %362
      %v364 = vsel %vm129, %v304, %v361
      %v365 = vsel %vm129, %v305, %v363
      %366 = vrot.lane.b32.xlu0 %v310, 127
      %v367 = vpop.permute.xlu0 %366
      %368 = vrot.lane.b32.xlu0 %v311, 127
      %v369 = vpop.permute.xlu0 %368
      %v370 = vsel %vm129, %v310, %v367
      %v371 = vsel %vm129, %v311, %v369
      %v372 = vmul.f32 %v364, %v370
      %v373 = vmul.f32 %v365, %v371
      %v374 = vmul.f32 %v136, %v372
      %v375 = vmul.f32 %v136, %v373
      %v376 = vmul.f32 %v143, %v372
      %v377 = vmul.f32 %v144, %v373
      %v378 = vadd.f32 %v330, %v374
      %v379 = vadd.f32 %v331, %v375
      %v380 = vadd.f32 %v332, %v376
      %v381 = vadd.f32 %v333, %v377
      %v382 = vadd.f32 %v334, %v372
      %v383 = vadd.f32 %v335, %v373
      %v384 = vadd.f32 %v350, %v374
      %v385 = vadd.f32 %v351, %v375
      %v386 = vadd.f32 %v354, %v376
      %v387 = vadd.f32 %v355, %v377
      %v388 = vadd.f32 %v358, %v372
      %v389 = vadd.f32 %v359, %v373
      %v390 = vmul.f32 %v380, %v388
      %v391 = vmul.f32 %v381, %v389
      %v392 = vmul.f32 %v382, %v386
      %v393 = vmul.f32 %v383, %v387
      %v394 = vsub.f32 %v390, %v392
      %v395 = vsub.f32 %v391, %v393
      %v396 = vmul.f32 %v382, %v384
      %v397 = vmul.f32 %v383, %v385
      %v398 = vmul.f32 %v378, %v388
      %v399 = vmul.f32 %v379, %v389
      %v400 = vsub.f32 %v396, %v398
      %v401 = vsub.f32 %v397, %v399
      %v402 = vmul.f32 %v378, %v386
      %v403 = vmul.f32 %v379, %v387
      %v404 = vmul.f32 %v380, %v384
      %v405 = vmul.f32 %v381, %v385
      %v406 = vsub.f32 %v402, %v404
      %v407 = vsub.f32 %v403, %v405
      %v408 = vmul.f32 %v394, %v394
      %v409 = vmul.f32 %v395, %v395
      %v410 = vmul.f32 %v400, %v400
      %v411 = vmul.f32 %v401, %v401
      %v412 = vadd.f32 %v408, %v410
      %v413 = vadd.f32 %v409, %v411
      %v414 = vmul.f32 %v406, %v406
      %v415 = vmul.f32 %v407, %v407
      %v416 = vadd.f32 %v412, %v414
      %v417 = vadd.f32 %v413, %v415
      %v418 = vmax.f32 %v416, 1e-24
      %v419 = vmax.f32 %v417, 1e-24
      %v420 = vrsqrt.pop %v418
      %v421 = vrsqrt.pop %v419
      %v422 = vmul.f32 %v394, %v420
      %v423 = vmul.f32 %v395, %v421
      %v424 = vmul.f32 %v400, %v420
      %v425 = vmul.f32 %v401, %v421
      %v426 = vmul.f32 %v406, %v420
      %v427 = vmul.f32 %v407, %v421
      %428 = vst [vmem:[%s116] sm:$0xff] %v422
      %429 = vst [vmem:[%s116 + $0x8] sm:$0xff] %v423
      %s430 = scalar_lea.vmem %s116, 16
      %431 = vst [vmem:[%s430] sm:$0xff] %v424
      %432 = vst [vmem:[%s430 + $0x8] sm:$0xff] %v425
      %s433 = scalar_lea.vmem %s116, 32
      %434 = vst [vmem:[%s433] sm:$0xff] %v426
      %435 = vst [vmem:[%s433 + $0x8] sm:$0xff] %v427
      %p436 = scmp.lt.s32.totalorder %s12, 1
      %s437 = scalar_select %p436, %s12, 1
      %s438 = smul.addr %s437, 6
      %s439 = smul.addr %s438, 8
      %s440 = scalar_lea.vmem %s1, %s439
      // Predicated region
      $region25: #{loss_batched_forward.3} parent=23 // pred_check
        %p441 = pneg %p56
      $region26: #{loss_batched_forward.3} parent=23 // pred_check_branch
        %443 = sbr.rel (%p441) target = $region28
      $region27: #{loss_batched_forward.3} parent=23 // pred_region
        _
      $region28: #{loss_batched_forward.3} parent=23 // pred_fallthru
        _
    $region24: #{loss_batched_forward.3} parent=5 // pred_fallthru
      _
    %p444 = scmp.le.s32.totalorder 2, %s7
    // Predicated region
    $region29: #{loss_batched_forward.3} parent=5 // pred_check
      %p445 = pneg %p444
    $region30: #{loss_batched_forward.3} parent=5 // pred_check_branch
      %447 = sbr.rel (%p445) target = $region32
    $region31: #{loss_batched_forward.3} parent=5 // pred_region
      %s448 = ssub.s32 %s7, 2
      // Predicated region
      $region33: #{loss_batched_forward.3} parent=31 // pred_check
        %p449 = pneg %p62
      $region34: #{loss_batched_forward.3} parent=31 // pred_check_branch
        %451 = sbr.rel (%p449) target = $region36
      $region35: #{loss_batched_forward.3} parent=31 // pred_region
        %p452 = scmp.lt.s32.totalorder %s13, 1
        %s453 = scalar_select %p452, %s13, 1
        %s454 = smul.addr %s453, 6
        %s455 = smul.addr %s454, 8
        %s456 = scalar_lea.vmem %s1, %s455
      $region36: #{loss_batched_forward.3} parent=31 // pred_fallthru
        _
    $region32: #{loss_batched_forward.3} parent=5 // pred_fallthru
      _
  $region6: #{loss_batched_forward.3} parent=0 // loop_footer
    %s11 = sadd.s32 1, %s7
  $region7: #{loss_batched_forward.3} parent=0 // loop_footer_branch
    %6 = sbr.rel target = $region3
  $region8: #{loss_batched_forward.3} parent=0 // loop_exit
    _

// kernel: loss_batched_forward.4
$region0: #{loss_batched_forward.4}
  #allocation0 [shape = 'u32[]', space=smem, size = 0x4, offset = 0x4, fixed_abs, tag = 'smem constant byte address 0x4 - core index']
  #allocation1 [shape = 'u32[144,128]{1,0:T(1,128)}', space=vmem, size = 0x12000, scoped, tag = 'internal scratch']
  #allocation2 [shape = 'f32[1]{0:T(128)S(6)}', space=smem, size = 0x200, scoped, tag = 'scoped memory for loss_batched_forward.4']
  %s0 = inlined_call_operand.<no memory space> [shape: f32[1], index: 0, kind: input, shape index: {}]
  %s1 = inlined_call_operand.vmem [shape: f32[2,16,128], index: 1, kind: input, shape index: {}]
  %s2 = inlined_call_operand.vmem [shape: f32[2,16,128], index: 2, kind: input, shape index: {}]
  %s3 = inlined_call_operand.vmem [shape: f32[2,16,128], index: 3, kind: input, shape index: {}]
  %s4 = inlined_call_operand.vmem [shape: f32[2,16,128], index: 4, kind: input, shape index: {}]
  %s5 = inlined_call_operand.vmem [shape: f32[2,3,16,128], index: 5, kind: input, shape index: {}]
  %s6 = inlined_call_operand.vmem [shape: f32[2,1,128], index: 6, kind: output, shape index: {}]
  %s7 = sld [smem:[#allocation0]]
  $region57: #{loss_batched_forward.4} parent=0
    _
  %s9 = ssub.s32 1, %s7
  %s10 = scalar_select 0, %s9, %s7
  %11 = sst [smem:[#allocation2]] %s0
  loop: start=0, step=1, limit=4
  $region2: #{loss_batched_forward.4} parent=0 // loop_pre_header
    _
  $region3: #{loss_batched_forward.4} parent=0 // loop_header
    %s13 = sphi 0, %s17
    %p14 = scmp.ge.s32.totalorder %s13, 4
    %s21 = sphi 0, %s21
    %s23 = sphi 0, %s21
    %s24 = sphi 0, %s23
    %s38 = sphi 0, %s24
    %s44 = sphi 0, %s46
    %s47 = sphi 0, %s44
    %s48 = sphi 0, %s47
    %s64 = sphi 0, %s48
    %s70 = sphi 0, %s72
    %s73 = sphi 0, %s70
    %s74 = sphi 0, %s73
    %s90 = sphi 0, %s74
    %s96 = sphi 0, %s98
    %s99 = sphi 0, %s96
    %s100 = sphi 0, %s99
    %s116 = sphi 0, %s100
    %s122 = sphi 0, %s124
    %s125 = sphi 0, %s122
    %s126 = sphi 0, %s125
    %s142 = sphi 0, %s126
    %s148 = sphi 0, %s150
    %s151 = sphi 0, %s148
    %s152 = sphi 0, %s151
    %s168 = sphi 0, %s152
    %s174 = sphi 0, %s176
    %s177 = sphi 0, %s174
    %s178 = sphi 0, %s177
    %s194 = sphi 0, %s178
  $region4: #{loss_batched_forward.4} parent=0 // loop_header_branch
    %16 = sbr.rel (%p14) target = $region8
  $region5: #{loss_batched_forward.4} parent=0 // loop_body
    %s18 = ssub.s32 %s13, 1
    %s19 = ssub.s32 %s13, 2
    %s20 = sadd.s32 %s13, 1
    %s22 = sadd.s32 %s21, 1
    %p25 = scmp.eq.s32.totalorder %s13, 1
    %p26 = scmp.ne.s32.totalorder %s21, %s23
    %p27 = scmp.eq.s32.totalorder %s13, 0
    %p28 = por %p26, %p27
    %p29 = scmp.ne.s32.totalorder %s21, %s23
    %p30 = scmp.eq.s32.totalorder %s18, 1
    %p31 = por %p29, %p30
    %p32 = scmp.ne.s32.totalorder %s23, %s24
    %p33 = scmp.eq.s32.totalorder %s18, 0
    %p34 = por %p32, %p33
    %p35 = scmp.ne.s32.totalorder %s23, %s24
    %p36 = scmp.eq.s32.totalorder %s19, 1
    %p37 = por %p35, %p36
    %p39 = scmp.ne.s32.totalorder %s24, %s38
    %p40 = scmp.eq.s32.totalorder %s19, 0
    %p41 = por %p39, %p40
    %s42 = ssub.s32 %s13, %s20
    %p43 = scmp.eq.s32.totalorder %s42, 0
    %s45 = sadd.s32 %s44, 1
    %s46 = scalar_select %p43, %s44, %s45
    %p49 = pneg %p43
    %p50 = scmp.eq.s32.totalorder %s13, 1
    %p51 = por %p49, %p50
    %p52 = scmp.ne.s32.totalorder %s44, %s47
    %p53 = scmp.eq.s32.totalorder %s13, 0
    %p54 = por %p52, %p53
    %p55 = scmp.ne.s32.totalorder %s44, %s47
    %p56 = scmp.eq.s32.totalorder %s18, 1
    %p57 = por %p55, %p56
    %p58 = scmp.ne.s32.totalorder %s47, %s48
    %p59 = scmp.eq.s32.totalorder %s18, 0
    %p60 = por %p58, %p59
    %p61 = scmp.ne.s32.totalorder %s47, %s48
    %p62 = scmp.eq.s32.totalorder %s19, 1
    %p63 = por %p61, %p62
    %p65 = scmp.ne.s32.totalorder %s48, %s64
    %p66 = scmp.eq.s32.totalorder %s19, 0
    %p67 = por %p65, %p66
    %s68 = ssub.s32 %s13, %s20
    %p69 = scmp.eq.s32.totalorder %s68, 0
    %s71 = sadd.s32 %s70, 1
    %s72 = scalar_select %p69, %s70, %s71
    %p75 = pneg %p69
    %p76 = scmp.eq.s32.totalorder %s13, 1
    %p77 = por %p75, %p76
    %p78 = scmp.ne.s32.totalorder %s70, %s73
    %p79 = scmp.eq.s32.totalorder %s13, 0
    %p80 = por %p78, %p79
    %p81 = scmp.ne.s32.totalorder %s70, %s73
    %p82 = scmp.eq.s32.totalorder %s18, 1
    %p83 = por %p81, %p82
    %p84 = scmp.ne.s32.totalorder %s73, %s74
    %p85 = scmp.eq.s32.totalorder %s18, 0
    %p86 = por %p84, %p85
    %p87 = scmp.ne.s32.totalorder %s73, %s74
    %p88 = scmp.eq.s32.totalorder %s19, 1
    %p89 = por %p87, %p88
    %p91 = scmp.ne.s32.totalorder %s74, %s90
    %p92 = scmp.eq.s32.totalorder %s19, 0
    %p93 = por %p91, %p92
    %s94 = ssub.s32 %s13, %s20
    %p95 = scmp.eq.s32.totalorder %s94, 0
    %s97 = sadd.s32 %s96, 1
    %s98 = scalar_select %p95, %s96, %s97
    %p101 = pneg %p95
    %p102 = scmp.eq.s32.totalorder %s13, 1
    %p103 = por %p101, %p102
    %p104 = scmp.ne.s32.totalorder %s96, %s99
    %p105 = scmp.eq.s32.totalorder %s13, 0
    %p106 = por %p104, %p105
    %p107 = scmp.ne.s32.totalorder %s96, %s99
    %p108 = scmp.eq.s32.totalorder %s18, 1
    %p109 = por %p107, %p108
    %p110 = scmp.ne.s32.totalorder %s99, %s100
    %p111 = scmp.eq.s32.totalorder %s18, 0
    %p112 = por %p110, %p111
    %p113 = scmp.ne.s32.totalorder %s99, %s100
    %p114 = scmp.eq.s32.totalorder %s19, 1
    %p115 = por %p113, %p114
    %p117 = scmp.ne.s32.totalorder %s100, %s116
    %p118 = scmp.eq.s32.totalorder %s19, 0
    %p119 = por %p117, %p118
    %s120 = ssub.s32 %s13, %s20
    %p121 = scmp.eq.s32.totalorder %s120, 0
    %s123 = sadd.s32 %s122, 1
    %s124 = scalar_select %p121, %s122, %s123
    %p127 = pneg %p121
    %p128 = scmp.eq.s32.totalorder %s13, 1
    %p129 = por %p127, %p128
    %p130 = scmp.ne.s32.totalorder %s122, %s125
    %p131 = scmp.eq.s32.totalorder %s13, 0
    %p132 = por %p130, %p131
    %p133 = scmp.ne.s32.totalorder %s122, %s125
    %p134 = scmp.eq.s32.totalorder %s18, 1
    %p135 = por %p133, %p134
    %p136 = scmp.ne.s32.totalorder %s125, %s126
    %p137 = scmp.eq.s32.totalorder %s18, 0
    %p138 = por %p136, %p137
    %p139 = scmp.ne.s32.totalorder %s125, %s126
    %p140 = scmp.eq.s32.totalorder %s19, 1
    %p141 = por %p139, %p140
    %p143 = scmp.ne.s32.totalorder %s126, %s142
    %p144 = scmp.eq.s32.totalorder %s19, 0
    %p145 = por %p143, %p144
    %s146 = ssub.s32 %s13, %s20
    %p147 = scmp.eq.s32.totalorder %s146, 0
    %s149 = sadd.s32 %s148, 1
    %s150 = scalar_select %p147, %s148, %s149
    %p153 = pneg %p147
    %p154 = scmp.eq.s32.totalorder %s13, 1
    %p155 = por %p153, %p154
    %p156 = scmp.ne.s32.totalorder %s148, %s151
    %p157 = scmp.eq.s32.totalorder %s13, 0
    %p158 = por %p156, %p157
    %p159 = scmp.ne.s32.totalorder %s148, %s151
    %p160 = scmp.eq.s32.totalorder %s18, 1
    %p161 = por %p159, %p160
    %p162 = scmp.ne.s32.totalorder %s151, %s152
    %p163 = scmp.eq.s32.totalorder %s18, 0
    %p164 = por %p162, %p163
    %p165 = scmp.ne.s32.totalorder %s151, %s152
    %p166 = scmp.eq.s32.totalorder %s19, 1
    %p167 = por %p165, %p166
    %p169 = scmp.ne.s32.totalorder %s152, %s168
    %p170 = scmp.eq.s32.totalorder %s19, 0
    %p171 = por %p169, %p170
    %s172 = ssub.s32 %s13, %s20
    %p173 = scmp.eq.s32.totalorder %s172, 0
    %s175 = sadd.s32 %s174, 1
    %s176 = scalar_select %p173, %s174, %s175
    %p179 = pneg %p173
    %p180 = scmp.eq.s32.totalorder %s13, 1
    %p181 = por %p179, %p180
    %p182 = scmp.ne.s32.totalorder %s174, %s177
    %p183 = scmp.eq.s32.totalorder %s13, 0
    %p184 = por %p182, %p183
    %p185 = scmp.ne.s32.totalorder %s174, %s177
    %p186 = scmp.eq.s32.totalorder %s18, 1
    %p187 = por %p185, %p186
    %p188 = scmp.ne.s32.totalorder %s177, %s178
    %p189 = scmp.eq.s32.totalorder %s18, 0
    %p190 = por %p188, %p189
    %p191 = scmp.ne.s32.totalorder %s177, %s178
    %p192 = scmp.eq.s32.totalorder %s19, 1
    %p193 = por %p191, %p192
    %p195 = scmp.ne.s32.totalorder %s178, %s194
    %p196 = scmp.eq.s32.totalorder %s19, 0
    %p197 = por %p195, %p196
    %p198 = scmp.le.s32.totalorder 1, %s13
    %p199 = scmp.lt.s32.totalorder %s13, 3
    %p200 = pnand %p198, %p199
    %p201 = pneg %p200
    // Predicated region
    $region9: #{loss_batched_forward.4} parent=5 // pred_check
      _
    $region10: #{loss_batched_forward.4} parent=5 // pred_check_branch
      %203 = sbr.rel (%p200) target = $region12
    $region11: #{loss_batched_forward.4} parent=5 // pred_region
      %s204 = ssub.s32 %s13, 1
      // Predicated region
      $region13: #{loss_batched_forward.4} parent=11 // pred_check
        %p205 = pneg %p34
      $region14: #{loss_batched_forward.4} parent=11 // pred_check_branch
        %207 = sbr.rel (%p205) target = $region16
      $region15: #{loss_batched_forward.4} parent=11 // pred_region
        _
      $region16: #{loss_batched_forward.4} parent=11 // pred_fallthru
        _
    $region12: #{loss_batched_forward.4} parent=5 // pred_fallthru
      _
    %p208 = scmp.lt.s32.totalorder %s13, 2
    // Predicated region
    $region17: #{loss_batched_forward.4} parent=5 // pred_check
      %p209 = pneg %p208
    $region18: #{loss_batched_forward.4} parent=5 // pred_check_branch
      %211 = sbr.rel (%p209) target = $region20
    $region19: #{loss_batched_forward.4} parent=5 // pred_region
      // Predicated region
      $region21: #{loss_batched_forward.4} parent=19 // pred_check
        %p212 = pneg %p54
      $region22: #{loss_batched_forward.4} parent=19 // pred_check_branch
        %214 = sbr.rel (%p212) target = $region24
      $region23: #{loss_batched_forward.4} parent=19 // pred_region
        %p215 = scmp.lt.s32.totalorder %s13, 1
        %s216 = scalar_select %p215, %s13, 1
        %s217 = smul.addr %s216, 2
        %s218 = smul.addr %s217, 8
        %s219 = scalar_lea.vmem %s1, %s218
      $region24: #{loss_batched_forward.4} parent=19 // pred_fallthru
        _
      // Predicated region
      $region25: #{loss_batched_forward.4} parent=19 // pred_check
        %p220 = pneg %p80
      $region26: #{loss_batched_forward.4} parent=19 // pred_check_branch
        %222 = sbr.rel (%p220) target = $region28
      $region27: #{loss_batched_forward.4} parent=19 // pred_region
        %p223 = scmp.lt.s32.totalorder %s13, 1
        %s224 = scalar_select %p223, %s13, 1
        %s225 = smul.addr %s224, 2
        %s226 = smul.addr %s225, 8
        %s227 = scalar_lea.vmem %s2, %s226
      $region28: #{loss_batched_forward.4} parent=19 // pred_fallthru
        _
      // Predicated region
      $region29: #{loss_batched_forward.4} parent=19 // pred_check
        %p228 = pneg %p106
      $region30: #{loss_batched_forward.4} parent=19 // pred_check_branch
        %230 = sbr.rel (%p228) target = $region32
      $region31: #{loss_batched_forward.4} parent=19 // pred_region
        %p231 = scmp.lt.s32.totalorder %s13, 1
        %s232 = scalar_select %p231, %s13, 1
        %s233 = smul.addr %s232, 2
        %s234 = smul.addr %s233, 8
        %s235 = scalar_lea.vmem %s3, %s234
      $region32: #{loss_batched_forward.4} parent=19 // pred_fallthru
        _
      // Predicated region
      $region33: #{loss_batched_forward.4} parent=19 // pred_check
        %p236 = pneg %p132
      $region34: #{loss_batched_forward.4} parent=19 // pred_check_branch
        %238 = sbr.rel (%p236) target = $region36
      $region35: #{loss_batched_forward.4} parent=19 // pred_region
        %p239 = scmp.lt.s32.totalorder %s13, 1
        %s240 = scalar_select %p239, %s13, 1
        %s241 = smul.addr %s240, 2
        %s242 = smul.addr %s241, 8
        %s243 = scalar_lea.vmem %s4, %s242
      $region36: #{loss_batched_forward.4} parent=19 // pred_fallthru
        _
      // Predicated region
      $region37: #{loss_batched_forward.4} parent=19 // pred_check
        %p244 = pneg %p158
      $region38: #{loss_batched_forward.4} parent=19 // pred_check_branch
        %246 = sbr.rel (%p244) target = $region40
      $region39: #{loss_batched_forward.4} parent=19 // pred_region
        %p247 = scmp.lt.s32.totalorder %s13, 1
        %s248 = scalar_select %p247, %s13, 1
        %s249 = smul.addr %s248, 6
        %s250 = smul.addr %s249, 8
        %s251 = scalar_lea.vmem %s5, %s250
      $region40: #{loss_batched_forward.4} parent=19 // pred_fallthru
        _
    $region20: #{loss_batched_forward.4} parent=5 // pred_fallthru
      _
    %p252 = scmp.le.s32.totalorder 1, %s13
    %p253 = scmp.lt.s32.totalorder %s13, 3
    %p254 = pnand %p252, %p253
    %p255 = pneg %p254
    // Predicated region
    $region41: #{loss_batched_forward.4} parent=5 // pred_check
      _
    $region42: #{loss_batched_forward.4} parent=5 // pred_check_branch
      %257 = sbr.rel (%p254) target = $region44
    $region43: #{loss_batched_forward.4} parent=5 // pred_region
      %s258 = ssub.s32 %s13, 1
      %p259 = pneg %p34
      %p260 = pneg %p31
      %p261 = scmp.lt.s32.totalorder %s18, 1
      %s262 = scalar_select %p261, %s18, 1
      %s263 = smul.addr %s262, 2
      %s264 = smul.addr %s263, 8
      %s265 = scalar_lea.vmem %s1, %s264
      %p266 = pneg %p60
      %p267 = pneg %p57
      %p268 = scmp.lt.s32.totalorder %s18, 1
      %s269 = scalar_select %p268, %s18, 1
      %s270 = smul.addr %s269, 2
      %s271 = smul.addr %s270, 8
      %s272 = scalar_lea.vmem %s2, %s271
      %p273 = pneg %p86
      %p274 = pneg %p83
      %p275 = scmp.lt.s32.totalorder %s18, 1
      %s276 = scalar_select %p275, %s18, 1
      %s277 = smul.addr %s276, 2
      %s278 = smul.addr %s277, 8
      %s279 = scalar_lea.vmem %s3, %s278
      %p280 = pneg %p112
      %p281 = pneg %p109
      %p282 = scmp.lt.s32.totalorder %s18, 1
      %s283 = scalar_select %p282, %s18, 1
      %s284 = smul.addr %s283, 2
      %s285 = smul.addr %s284, 8
      %s286 = scalar_lea.vmem %s4, %s285
      %p287 = pneg %p138
      %p288 = pneg %p135
      %p289 = scmp.lt.s32.totalorder %s18, 1
      %s290 = scalar_select %p289, %s18, 1
      %s291 = smul.addr %s290, 6
      %s292 = smul.addr %s291, 8
      %s293 = scalar_lea.vmem %s5, %s292
      %p294 = pneg %p164
      %p295 = pneg %p161
      %p296 = pneg %p190
      %p297 = pneg %p187
      %p298 = scmp.lt.s32.totalorder %s18, 1
      %s299 = scalar_select %p298, %s18, 1
      %s300 = scalar_lea.vmem %s6, %s299
      %p301 = scmp.lt.s32.totalorder %s18, 1
      %s302 = scalar_select %p301, %s18, 1
      %s303 = smul.addr %s302, 2
      %s304 = smul.addr %s303, 8
      %s305 = scalar_lea.vmem %s1, %s304
      %p306 = scmp.lt.s32.totalorder %s18, 1
      %s307 = scalar_select %p306, %s18, 1
      %s308 = smul.addr %s307, 2
      %s309 = smul.addr %s308, 8
      %s310 = scalar_lea.vmem %s2, %s309
      %p311 = scmp.lt.s32.totalorder %s18, 1
      %s312 = scalar_select %p311, %s18, 1
      %s313 = smul.addr %s312, 2
      %s314 = smul.addr %s313, 8
      %s315 = scalar_lea.vmem %s3, %s314
      %p316 = scmp.lt.s32.totalorder %s18, 1
      %s317 = scalar_select %p316, %s18, 1
      %s318 = smul.addr %s317, 2
      %s319 = smul.addr %s318, 8
      %s320 = scalar_lea.vmem %s4, %s319
      %p321 = scmp.lt.s32.totalorder %s18, 1
      %s322 = scalar_select %p321, %s18, 1
      %s323 = smul.addr %s322, 6
      %s324 = smul.addr %s323, 8
      %s325 = scalar_lea.vmem %s5, %s324
      %p326 = scmp.lt.s32.totalorder %s18, 1
      %s327 = scalar_select %p326, %s18, 1
      %s328 = scalar_lea.vmem %s6, %s327
      %v329 = vld [vmem:[%s305] sm:$0xff]
      %v330 = vld [vmem:[%s305 + $0x8] sm:$0xff]
      %v331 = vld [vmem:[%s310] sm:$0xff]
      %v332 = vld [vmem:[%s310 + $0x8] sm:$0xff]
      %v333 = vld [vmem:[%s315] sm:$0xff]
      %v334 = vld [vmem:[%s315 + $0x8] sm:$0xff]
      %v335 = vld [vmem:[%s320] sm:$0xff]
      %v336 = vld [vmem:[%s320 + $0x8] sm:$0xff]
      %s337 = sld [smem:[#allocation2]]
      %vm338 = vcmp.ne.f32.partialorder %v333, 0.0
      %vm339 = vcmp.ne.f32.partialorder %v334, 0.0
      %v340 = vsel %vm338, 1, 0
      %v341 = vsel %vm339, 1, 0
      %v342 = vcvt.s32.f32 %v340
      %v343 = vcvt.s32.f32 %v341
      %vm344 = vcmp.lt.f32.partialorder %v335, 0.0
      %vm345 = vcmp.lt.f32.partialorder %v336, 0.0
      %v346 = vstv %s337
      %v347 = vsel %vm344, %v346, %v335
      %v348 = vsel %vm345, %v346, %v336
      %v349 = vmul.f32 %v347, %v342
      %v350 = vmul.f32 %v348, %v343
      %v351 = vsub.f32 1.0, %v342
      %v352 = vsub.f32 1.0, %v343
      %v353 = vmul.f32 %v329, %v351
      %v354 = vmul.f32 %v330, %v352
      %v355 = vsub.f32 1.0, %v331
      %v356 = vsub.f32 1.0, %v332
      %v357 = vmul.f32 %v353, %v355
      %v358 = vmul.f32 %v354, %v356
      %v359 = vadd.f32 %v349, %v357
      %v360 = vadd.f32 %v350, %v358
      %v361 = vlaneseq
      %v362 = vand.u32 %v361, 127
      %v363 = vlaneseq
      %v364 = vshrl.u32 %v363, 7
      %v365 = vadd.s32 %v364, 8
      %vm366 = vcmp.eq.s32.totalorder %v364, 0
      %vm367 = vcmp.eq.s32.totalorder %v365, 0
      %vm368 = vcmp.eq.s32.totalorder %v364, 15
      %vm369 = vcmp.eq.s32.totalorder %v365, 15
      %vm370 = vcmp.eq.s32.totalorder %v362, 0
      %vm371 = vcmp.eq.s32.totalorder %v362, 127
      %v372 = vcvt.s32.f32 %v362
      %v373 = vcvt.s32.f32 %v364
      %v374 = vcvt.s32.f32 %v365
      %v375 = vsub.f32 %v372, 1.0
      %v376 = vmax.f32 %v375, 0.0
      %v377 = vadd.f32 %v372, 1.0
      %v378 = vmin.f32 %v377, 127.0
      %v379 = vsub.f32 %v373, 1.0
      %v380 = vsub.f32 %v374, 1.0
      %v381 = vmax.f32 %v379, 0.0
      %v382 = vmax.f32 %v380, 0.0
      %v383 = vadd.f32 %v373, 1.0
      %v384 = vadd.f32 %v374, 1.0
      %v385 = vmin.f32 %v383, 15.0
      %v386 = vmin.f32 %v384, 15.0
      %v387 = vmul.f32 %v372, %v372
      %v388 = vmul.f32 %v373, %v373
      %v389 = vmul.f32 %v374, %v374
      %v390 = vadd.f32 %v387, %v388
      %v391 = vadd.f32 %v387, %v389
      %v392 = vadd.f32 %v390, 1.0
      %v393 = vadd.f32 %v391, 1.0
      %v394 = vrsqrt.pop %v392
      %v395 = vrsqrt.pop %v393
      %v396 = vrot.slane %v359, 7
      %v397 = vrot.slane %v360, 7
      %vm398 = vcmp.lt.s32.totalorder %v364, 1
      %v399 = vsel %vm398, %v396, %v397
      %v400 = vsel %vm398, %v397, %v396
      %v401 = vsel %vm366, %v359, %v400
      %v402 = vsel %vm367, %v360, %v399
      %v403 = vrot.slane %v394, 7
      %v404 = vrot.slane %v395, 7
      %v405 = vsel %vm398, %v403, %v404
      %v406 = vsel %vm398, %v404, %v403
      %v407 = vsel %vm366, %v394, %v406
      %v408 = vsel %vm367, %v395, %v405
      %409 = vrot.lane.b32.xlu0 %v401, 1
      %v410 = vpop.permute.xlu0 %409
      %411 = vrot.lane.b32.xlu0 %v402, 1
      %v412 = vpop.permute.xlu0 %411
      %v413 = vsel %vm370, %v401, %v410
      %v414 = vsel %vm370, %v402, %v412
      %415 = vrot.lane.b32.xlu0 %v407, 1
      %v416 = vpop.permute.xlu0 %415
      %417 = vrot.lane.b32.xlu0 %v408, 1
      %v418 = vpop.permute.xlu0 %417
      %v419 = vsel %vm370, %v407, %v416
      %v420 = vsel %vm370, %v408, %v418
      %v421 = vmul.f32 %v413, %v419
      %v422 = vmul.f32 %v414, %v420
      %v423 = vmul.f32 %v376, %v421
      %v424 = vmul.f32 %v376, %v422
      %v425 = vmul.f32 %v381, %v421
      %v426 = vmul.f32 %v382, %v422
      %v427 = vsub.f32 0.0, %v423
      %v428 = vsub.f32 0.0, %v424
      %v429 = vsub.f32 0.0, %v425
      %v430 = vsub.f32 0.0, %v426
      %v431 = vsub.f32 0.0, %v421
      %v432 = vsub.f32 0.0, %v422
      %v433 = vmul.f32 %v401, %v407
      %v434 = vmul.f32 %v402, %v408
      %v435 = vmul.f32 %v372, %v433
      %v436 = vmul.f32 %v372, %v434
      %v437 = vmul.f32 %v381, %v433
      %v438 = vmul.f32 %v382, %v434
      %v439 = vmul.f32 %v435, -2.0
      %v440 = vmul.f32 %v436, -2.0
      %v441 = vadd.f32 %v427, %v439
      %v442 = vadd.f32 %v428, %v440
      %v443 = vmul.f32 %v437, -2.0
      %v444 = vmul.f32 %v438, -2.0
      %v445 = vadd.f32 %v429, %v443
      %v446 = vadd.f32 %v430, %v444
      %v447 = vmul.f32 %v433, -2.0
      %v448 = vmul.f32 %v434, -2.0
      %v449 = vadd.f32 %v431, %v447
      %v450 = vadd.f32 %v432, %v448
      %451 = vrot.lane.b32.xlu0 %v401, 127
      %v452 = vpop.permute.xlu0 %451
      %453 = vrot.lane.b32.xlu0 %v402, 127
      %v454 = vpop.permute.xlu0 %453
      %v455 = vsel %vm371, %v401, %v452
      %v456 = vsel %vm371, %v402, %v454
      %457 = vrot.lane.b32.xlu0 %v407, 127
      %v458 = vpop.permute.xlu0 %457
      %459 = vrot.lane.b32.xlu0 %v408, 127
      %v460 = vpop.permute.xlu0 %459
      %v461 = vsel %vm371, %v407, %v458
      %v462 = vsel %vm371, %v408, %v460
      %v463 = vmul.f32 %v455, %v461
      %v464 = vmul.f32 %v456, %v462
      %v465 = vmul.f32 %v378, %v463
      %v466 = vmul.f32 %v378, %v464
      %v467 = vmul.f32 %v381, %v463
      %v468 = vmul.f32 %v382, %v464
      %v469 = vadd.f32 %v427, %v465
      %v470 = vadd.f32 %v428, %v466
      %v471 = vadd.f32 %v429, %v467
      %v472 = vadd.f32 %v430, %v468
      %v473 = vadd.f32 %v431, %v463
      %v474 = vadd.f32 %v432, %v464
      %v475 = vsub.f32 %v441, %v465
      %v476 = vsub.f32 %v442, %v466
      %v477 = vsub.f32 %v445, %v467
      %v478 = vsub.f32 %v446, %v468
      %v479 = vsub.f32 %v449, %v463
      %v480 = vsub.f32 %v450, %v464
      %481 = vrot.lane.b32.xlu0 %v359, 1
      %v482 = vpop.permute.xlu0 %481
      %483 = vrot.lane.b32.xlu0 %v360, 1
      %v484 = vpop.permute.xlu0 %483
      %v485 = vsel %vm370, %v359, %v482
      %v486 = vsel %vm370, %v360, %v484
      %487 = vrot.lane.b32.xlu0 %v394, 1
      %v488 = vpop.permute.xlu0 %487
      %489 = vrot.lane.b32.xlu0 %v395, 1
      %v490 = vpop.permute.xlu0 %489
      %v491 = vsel %vm370, %v394, %v488
      %v492 = vsel %vm370, %v395, %v490
      %v493 = vmul.f32 %v485, %v491
      %v494 = vmul.f32 %v486, %v492
      %v495 = vmul.f32 %v376, %v493
      %v496 = vmul.f32 %v376, %v494
      %v497 = vmul.f32 %v373, %v493
      %v498 = vmul.f32 %v374, %v494
      %v499 = vmul.f32 %v495, -2.0
      %v500 = vmul.f32 %v496, -2.0
      %v501 = vadd.f32 %v469, %v499
      %v502 = vadd.f32 %v470, %v500
      %v503 = vmul.f32 %v497, -2.0
      %v504 = vmul.f32 %v498, -2.0
      %v505 = vadd.f32 %v471, %v503
      %v506 = vadd.f32 %v472, %v504
      %v507 = vmul.f32 %v493, -2.0
      %v508 = vmul.f32 %v494, -2.0
      %v509 = vadd.f32 %v473, %v507
      %v510 = vadd.f32 %v474, %v508
      %511 = vrot.lane.b32.xlu0 %v359, 127
      %v512 = vpop.permute.xlu0 %511
      %513 = vrot.lane.b32.xlu0 %v360, 127
      %v514 = vpop.permute.xlu0 %513
      %v515 = vsel %vm371, %v359, %v512
      %v516 = vsel %vm371, %v360, %v514
      %517 = vrot.lane.b32.xlu0 %v394, 127
      %v518 = vpop.permute.xlu0 %517
      %519 = vrot.lane.b32.xlu0 %v395, 127
      %v520 = vpop.permute.xlu0 %519
      %v521 = vsel %vm371, %v394, %v518
      %v522 = vsel %vm371, %v395, %v520
      %v523 = vmul.f32 %v515, %v521
      %v524 = vmul.f32 %v516, %v522
      %v525 = vmul.f32 %v378, %v523
      %v526 = vmul.f32 %v378, %v524
      %v527 = vmul.f32 %v373, %v523
      %v528 = vmul.f32 %v374, %v524
      %v529 = vmul.f32 %v525, 2.0
      %v530 = vmul.f32 %v526, 2.0
      %v531 = vadd.f32 %v501, %v529
      %v532 = vadd.f32 %v502, %v530
      %v533 = vmul.f32 %v527, 2.0
      %v534 = vmul.f32 %v528, 2.0
      %v535 = vadd.f32 %v505, %v533
      %v536 = vadd.f32 %v506, %v534
      %v537 = vmul.f32 %v523, 2.0
      %v538 = vmul.f32 %v524, 2.0
      %v539 = vadd.f32 %v509, %v537
      %v540 = vadd.f32 %v510, %v538
      %v541 = vrot.slane %v359, 1
      %v542 = vrot.slane %v360, 1
      %vm543 = vcmp.lt.s32.totalorder %v364, 7
      %v544 = vsel %vm543, %v541, %v542
      %v545 = vsel %vm543, %v542, %v541
      %v546 = vsel %vm368, %v359, %v544
      %v547 = vsel %vm369, %v360, %v545
      %v548 = vrot.slane %v394, 1
      %v549 = vrot.slane %v395, 1
      %v550 = vsel %vm543, %v548, %v549
      %v551 = vsel %vm543, %v549, %v548
      %v552 = vsel %vm368, %v394, %v550
      %v553 = vsel %vm369, %v395, %v551
      %554 = vrot.lane.b32.xlu0 %v546, 1
      %v555 = vpop.permute.xlu0 %554
      %556 = vrot.lane.b32.xlu0 %v547, 1
      %v557 = vpop.permute.xlu0 %556
      %v558 = vsel %vm370, %v546, %v555
      %v559 = vsel %vm370, %v547, %v557
      %560 = vrot.lane.b32.xlu0 %v552, 1
      %v561 = vpop.permute.xlu0 %560
      %562 = vrot.lane.b32.xlu0 %v553, 1
      %v563 = vpop.permute.xlu0 %562
      %v564 = vsel %vm370, %v552, %v561
      %v565 = vsel %vm370, %v553, %v563
      %v566 = vmul.f32 %v558, %v564
      %v567 = vmul.f32 %v559, %v565
      %v568 = vmul.f32 %v376, %v566
      %v569 = vmul.f32 %v376, %v567
      %v570 = vmul.f32 %v385, %v566
      %v571 = vmul.f32 %v386, %v567
      %v572 = vsub.f32 %v531, %v568
      %v573 = vsub.f32 %v532, %v569
      %v574 = vsub.f32 %v535, %v570
      %v575 = vsub.f32 %v536, %v571
      %v576 = vsub.f32 %v539, %v566
      %v577 = vsub.f32 %v540, %v567
      %v578 = vadd.f32 %v475, %v568
      %v579 = vadd.f32 %v476, %v569
      %v580 = vadd.f32 %v477, %v570
      %v581 = vadd.f32 %v478, %v571
      %v582 = vadd.f32 %v479, %v566
      %v583 = vadd.f32 %v480, %v567
      %v584 = vmul.f32 %v546, %v552
      %v585 = vmul.f32 %v547, %v553
      %v586 = vmul.f32 %v372, %v584
      %v587 = vmul.f32 %v372, %v585
      %v588 = vmul.f32 %v385, %v584
      %v589 = vmul.f32 %v386, %v585
      %v590 = vmul.f32 %v586, 2.0
      %v591 = vmul.f32 %v587, 2.0
      %v592 = vadd.f32 %v578, %v590
      %v593 = vadd.f32 %v579, %v591
      %v594 = vmul.f32 %v588, 2.0
      %v595 = vmul.f32 %v589, 2.0
      %v596 = vadd.f32 %v580, %v594
      %v597 = vadd.f32 %v581, %v595
      %v598 = vmul.f32 %v584, 2.0
      %v599 = vmul.f32 %v585, 2.0
      %v600 = vadd.f32 %v582, %v598
      %v601 = vadd.f32 %v583, %v599
      %602 = vrot.lane.b32.xlu0 %v546, 127
      %v603 = vpop.permute.xlu0 %602
      %604 = vrot.lane.b32.xlu0 %v547, 127
      %v605 = vpop.permute.xlu0 %604
      %v606 = vsel %vm371, %v546, %v603
      %v607 = vsel %vm371, %v547, %v605
      %608 = vrot.lane.b32.xlu0 %v552, 127
      %v609 = vpop.permute.xlu0 %608
      %610 = vrot.lane.b32.xlu0 %v553, 127
      %v611 = vpop.permute.xlu0 %610
      %v612 = vsel %vm371, %v552, %v609
      %v613 = vsel %vm371, %v553, %v611
      %v614 = vmul.f32 %v606, %v612
      %v615 = vmul.f32 %v607, %v613
      %v616 = vmul.f32 %v378, %v614
      %v617 = vmul.f32 %v378, %v615
      %v618 = vmul.f32 %v385, %v614
      %v619 = vmul.f32 %v386, %v615
      %v620 = vadd.f32 %v572, %v616
      %v621 = vadd.f32 %v573, %v617
      %v622 = vadd.f32 %v574, %v618
      %v623 = vadd.f32 %v575, %v619
      %v624 = vadd.f32 %v576, %v614
      %v625 = vadd.f32 %v577, %v615
      %v626 = vadd.f32 %v592, %v616
      %v627 = vadd.f32 %v593, %v617
      %v628 = vadd.f32 %v596, %v618
      %v629 = vadd.f32 %v597, %v619
      %v630 = vadd.f32 %v600, %v614
      %v631 = vadd.f32 %v601, %v615
      %v632 = vmul.f32 %v622, %v630
      %v633 = vmul.f32 %v623, %v631
      %v634 = vmul.f32 %v624, %v628
      %v635 = vmul.f32 %v625, %v629
      %v636 = vsub.f32 %v632, %v634
      %v637 = vsub.f32 %v633, %v635
      %v638 = vmul.f32 %v624, %v626
      %v639 = vmul.f32 %v625, %v627
      %v640 = vmul.f32 %v620, %v630
      %v641 = vmul.f32 %v621, %v631
      %v642 = vsub.f32 %v638, %v640
      %v643 = vsub.f32 %v639, %v641
      %v644 = vmul.f32 %v620, %v628
      %v645 = vmul.f32 %v621, %v629
      %v646 = vmul.f32 %v622, %v626
      %v647 = vmul.f32 %v623, %v627
      %v648 = vsub.f32 %v644, %v646
      %v649 = vsub.f32 %v645, %v647
      %v650 = vmul.f32 %v636, %v636
      %v651 = vmul.f32 %v637, %v637
      %v652 = vmul.f32 %v642, %v642
      %v653 = vmul.f32 %v643, %v643
      %v654 = vadd.f32 %v650, %v652
      %v655 = vadd.f32 %v651, %v653
      %v656 = vmul.f32 %v648, %v648
      %v657 = vmul.f32 %v649, %v649
      %v658 = vadd.f32 %v654, %v656
      %v659 = vadd.f32 %v655, %v657
      %v660 = vmax.f32 %v658, 1e-24
      %v661 = vmax.f32 %v659, 1e-24
      %v662 = vrsqrt.pop %v660
      %v663 = vrsqrt.pop %v661
      %v664 = vmul.f32 %v636, %v662
      %v665 = vmul.f32 %v637, %v663
      %v666 = vmul.f32 %v642, %v662
      %v667 = vmul.f32 %v643, %v663
      %v668 = vmul.f32 %v648, %v662
      %v669 = vmul.f32 %v649, %v663
      %v670 = vsub.f32 %v329, %v359
      %v671 = vsub.f32 %v330, %v360
      %v672 = vand.u32 2147483647, %v670
      %v673 = vand.u32 2147483647, %v671
      %v674 = vld [vmem:[%s325] sm:$0xff]
      %v675 = vld [vmem:[%s325 + $0x8] sm:$0xff]
      %v676 = vsub.f32 %v674, %v664
      %v677 = vsub.f32 %v675, %v665
      %v678 = vand.u32 2147483647, %v676
      %v679 = vand.u32 2147483647, %v677
      %s680 = scalar_lea.vmem %s325, 16
      %v681 = vld [vmem:[%s680] sm:$0xff]
      %v682 = vld [vmem:[%s680 + $0x8] sm:$0xff]
      %v683 = vsub.f32 %v681, %v666
      %v684 = vsub.f32 %v682, %v667
      %v685 = vand.u32 2147483647, %v683
      %v686 = vand.u32 2147483647, %v684
      %v687 = vadd.f32 %v678, %v685
      %v688 = vadd.f32 %v679, %v686
      %s689 = scalar_lea.vmem %s325, 32
      %v690 = vld [vmem:[%s689] sm:$0xff]
      %v691 = vld [vmem:[%s689 + $0x8] sm:$0xff]
      %v692 = vsub.f32 %v690, %v668
      %v693 = vsub.f32 %v691, %v669
      %v694 = vand.u32 2147483647, %v692
      %v695 = vand.u32 2147483647, %v693
      %v696 = vadd.f32 %v687, %v694
      %v697 = vadd.f32 %v688, %v695
      %v698 = vmul.f32 %v696, 0.33333334
      %v699 = vmul.f32 %v697, 0.33333334
      %v700 = vadd.f32 %v672, %v698
      %v701 = vadd.f32 %v673, %v699
      %v702 = vadd.f32 %v700, %v701
      %703 = vadd.xlane.f32.xlu0 %v702
      %v704 = vpop.xlane.xlu0 %703
      %v705 = vrot.slane %v704, 4
      %v706 = vadd.f32 %v704, %v705
      %v707 = vrot.slane %v706, 2
      %v708 = vadd.f32 %v706, %v707
      %v709 = vrot.slane %v708, 1
      %v710 = vadd.f32 %v708, %v709
      %s711 = vtos %v710
      %v712 = vrcp.pop 2048.0
      %s713 = vtos %v712
      %s714 = smul.f32 %s711, %s713
      %v715 = vstv %s714
      %716 = vst [vmem:[%s328] sm:$0x1] %v715
      %p717 = scmp.lt.s32.totalorder %s18, 1
      %s718 = scalar_select %p717, %s18, 1
      %s719 = scalar_lea.vmem %s6, %s718
      // Predicated region
      $region45: #{loss_batched_forward.4} parent=43 // pred_check
        %p720 = pneg %p187
      $region46: #{loss_batched_forward.4} parent=43 // pred_check_branch
        %722 = sbr.rel (%p720) target = $region48
      $region47: #{loss_batched_forward.4} parent=43 // pred_region
        _
      $region48: #{loss_batched_forward.4} parent=43 // pred_fallthru
        _
    $region44: #{loss_batched_forward.4} parent=5 // pred_fallthru
      _
    %p723 = scmp.le.s32.totalorder 2, %s13
    // Predicated region
    $region49: #{loss_batched_forward.4} parent=5 // pred_check
      %p724 = pneg %p723
    $region50: #{loss_batched_forward.4} parent=5 // pred_check_branch
      %726 = sbr.rel (%p724) target = $region52
    $region51: #{loss_batched_forward.4} parent=5 // pred_region
      %s727 = ssub.s32 %s13, 2
      // Predicated region
      $region53: #{loss_batched_forward.4} parent=51 // pred_check
        %p728 = pneg %p193
      $region54: #{loss_batched_forward.4} parent=51 // pred_check_branch
        %730 = sbr.rel (%p728) target = $region56
      $region55: #{loss_batched_forward.4} parent=51 // pred_region
        %p731 = scmp.lt.s32.totalorder %s19, 1
        %s732 = scalar_select %p731, %s19, 1
        %s733 = scalar_lea.vmem %s6, %s732
      $region56: #{loss_batched_forward.4} parent=51 // pred_fallthru
        _
    $region52: #{loss_batched_forward.4} parent=5 // pred_fallthru
      _
  $region6: #{loss_batched_forward.4} parent=0 // loop_footer
    %s17 = sadd.s32 1, %s13
  $region7: #{loss_batched_forward.4} parent=0 // loop_footer_branch
    %12 = sbr.rel target = $region3
  $region8: #{loss_batched_forward.4} parent=0 // loop_exit
    _

// kernel: loss_batched_forward.5
$region0: #{loss_batched_forward.5}
  #allocation0 [shape = 'u32[]', space=smem, size = 0x4, offset = 0x4, fixed_abs, tag = 'smem constant byte address 0x4 - core index']
  #allocation1 [shape = 'u32[144,128]{1,0:T(1,128)}', space=vmem, size = 0x12000, scoped, tag = 'internal scratch']
  #allocation2 [shape = 'f32[1,128]{1,0:T(1,128)}', space=vmem, size = 0x200, scoped, tag = 'scratch operand']
  %s0 = inlined_call_operand.vmem [shape: f32[2,3,128], index: 0, kind: input, shape index: {}]
  %s1 = inlined_call_operand.vmem [shape: f32[2,512,3], index: 1, kind: input, shape index: {}]
  %s2 = inlined_call_operand.vmem [shape: f32[2,1,128], index: 2, kind: output, shape index: {}]
  %s3 = sld [smem:[#allocation0]]
  $region49: #{loss_batched_forward.5} parent=0
    _
  %s5 = ssub.s32 1, %s3
  %s6 = scalar_select 0, %s5, %s3
  loop: start=0, step=1, limit=4
  $region2: #{loss_batched_forward.5} parent=0 // loop_pre_header
    _
  $region3: #{loss_batched_forward.5} parent=0 // loop_header
    %s8 = sphi 0, %s12
    %p9 = scmp.ge.s32.totalorder %s8, 4
    %s15 = sphi 0, %s27
    %s16 = sphi 0, %s23
    %s17 = sphi 0, %s15
    %s18 = sphi 0, %s16
    %s19 = sphi 0, %s17
    %s20 = sphi 0, %s18
    %s30 = sphi 0, %s32
    %s33 = sphi 0, %s30
    %s34 = sphi 0, %s33
    %s50 = sphi 0, %s34
    %s58 = sphi 0, %s60
    %s61 = sphi 0, %s58
    %s62 = sphi 0, %s61
    %s78 = sphi 0, %s62
    %s84 = sphi 0, %s86
    %s87 = sphi 0, %s84
    %s88 = sphi 0, %s87
    %s104 = sphi 0, %s88
  $region4: #{loss_batched_forward.5} parent=0 // loop_header_branch
    %11 = sbr.rel (%p9) target = $region8
  $region5: #{loss_batched_forward.5} parent=0 // loop_body
    %s13 = ssub.s32 %s8, 1
    %s14 = ssub.s32 %s8, 2
    %s21 = sadd.s32 1, %s16
    %p22 = scmp.ge.s32.totalorder %s21, 1
    %s23 = scalar_select %p22, 0, %s21
    %s24 = sadd.s32 1, %s15
    %s25 = scalar_select %p22, %s24, %s15
    %p26 = scmp.ge.s32.totalorder %s25, 2
    %s27 = scalar_select %p26, 0, %s25
    %s28 = ssub.s32 %s15, %s27
    %p29 = scmp.eq.s32.totalorder %s28, 0
    %s31 = sadd.s32 %s30, 1
    %s32 = scalar_select %p29, %s30, %s31
    %p35 = pneg %p29
    %p36 = scmp.eq.s32.totalorder %s8, 1
    %p37 = por %p35, %p36
    %p38 = scmp.ne.s32.totalorder %s30, %s33
    %p39 = scmp.eq.s32.totalorder %s8, 0
    %p40 = por %p38, %p39
    %p41 = scmp.ne.s32.totalorder %s30, %s33
    %p42 = scmp.eq.s32.totalorder %s13, 1
    %p43 = por %p41, %p42
    %p44 = scmp.ne.s32.totalorder %s33, %s34
    %p45 = scmp.eq.s32.totalorder %s13, 0
    %p46 = por %p44, %p45
    %p47 = scmp.ne.s32.totalorder %s33, %s34
    %p48 = scmp.eq.s32.totalorder %s14, 1
    %p49 = por %p47, %p48
    %p51 = scmp.ne.s32.totalorder %s34, %s50
    %p52 = scmp.eq.s32.totalorder %s14, 0
    %p53 = por %p51, %p52
    %s54 = ssub.s32 %s15, %s27
    %s55 = ssub.s32 %s16, %s23
    %s56 = sor.u32 %s54, %s55
    %p57 = scmp.eq.s32.totalorder %s56, 0
    %s59 = sadd.s32 %s58, 1
    %s60 = scalar_select %p57, %s58, %s59
    %p63 = pneg %p57
    %p64 = scmp.eq.s32.totalorder %s8, 1
    %p65 = por %p63, %p64
    %p66 = scmp.ne.s32.totalorder %s58, %s61
    %p67 = scmp.eq.s32.totalorder %s8, 0
    %p68 = por %p66, %p67
    %p69 = scmp.ne.s32.totalorder %s58, %s61
    %p70 = scmp.eq.s32.totalorder %s13, 1
    %p71 = por %p69, %p70
    %p72 = scmp.ne.s32.totalorder %s61, %s62
    %p73 = scmp.eq.s32.totalorder %s13, 0
    %p74 = por %p72, %p73
    %p75 = scmp.ne.s32.totalorder %s61, %s62
    %p76 = scmp.eq.s32.totalorder %s14, 1
    %p77 = por %p75, %p76
    %p79 = scmp.ne.s32.totalorder %s62, %s78
    %p80 = scmp.eq.s32.totalorder %s14, 0
    %p81 = por %p79, %p80
    %s82 = ssub.s32 %s15, %s27
    %p83 = scmp.eq.s32.totalorder %s82, 0
    %s85 = sadd.s32 %s84, 1
    %s86 = scalar_select %p83, %s84, %s85
    %p89 = pneg %p83
    %p90 = scmp.eq.s32.totalorder %s8, 1
    %p91 = por %p89, %p90
    %p92 = scmp.ne.s32.totalorder %s84, %s87
    %p93 = scmp.eq.s32.totalorder %s8, 0
    %p94 = por %p92, %p93
    %p95 = scmp.ne.s32.totalorder %s84, %s87
    %p96 = scmp.eq.s32.totalorder %s13, 1
    %p97 = por %p95, %p96
    %p98 = scmp.ne.s32.totalorder %s87, %s88
    %p99 = scmp.eq.s32.totalorder %s13, 0
    %p100 = por %p98, %p99
    %p101 = scmp.ne.s32.totalorder %s87, %s88
    %p102 = scmp.eq.s32.totalorder %s14, 1
    %p103 = por %p101, %p102
    %p105 = scmp.ne.s32.totalorder %s88, %s104
    %p106 = scmp.eq.s32.totalorder %s14, 0
    %p107 = por %p105, %p106
    %p108 = scmp.le.s32.totalorder 1, %s8
    %p109 = scmp.lt.s32.totalorder %s8, 3
    %p110 = pnand %p108, %p109
    %p111 = pneg %p110
    // Predicated region
    $region9: #{loss_batched_forward.5} parent=5 // pred_check
      _
    $region10: #{loss_batched_forward.5} parent=5 // pred_check_branch
      %113 = sbr.rel (%p110) target = $region12
    $region11: #{loss_batched_forward.5} parent=5 // pred_region
      %s114 = ssub.s32 %s8, 1
    $region12: #{loss_batched_forward.5} parent=5 // pred_fallthru
      _
    %p115 = scmp.lt.s32.totalorder %s8, 2
    // Predicated region
    $region13: #{loss_batched_forward.5} parent=5 // pred_check
      %p116 = pneg %p115
    $region14: #{loss_batched_forward.5} parent=5 // pred_check_branch
      %118 = sbr.rel (%p116) target = $region16
    $region15: #{loss_batched_forward.5} parent=5 // pred_region
      // Predicated region
      $region17: #{loss_batched_forward.5} parent=15 // pred_check
        %p119 = pneg %p40
      $region18: #{loss_batched_forward.5} parent=15 // pred_check_branch
        %121 = sbr.rel (%p119) target = $region20
      $region19: #{loss_batched_forward.5} parent=15 // pred_region
        %p122 = scmp.lt.s32.totalorder %s15, 1
        %s123 = scalar_select %p122, %s15, 1
        %s124 = smul.addr %s123, 4
        %s125 = scalar_lea.vmem %s0, %s124
      $region20: #{loss_batched_forward.5} parent=15 // pred_fallthru
        _
      // Predicated region
      $region21: #{loss_batched_forward.5} parent=15 // pred_check
        %p126 = pneg %p68
      $region22: #{loss_batched_forward.5} parent=15 // pred_check_branch
        %128 = sbr.rel (%p126) target = $region24
      $region23: #{loss_batched_forward.5} parent=15 // pred_region
        %s129 = smul.u32 64, %s16
        %p130 = scmp.lt.s32.totalorder %s15, 1
        %s131 = scalar_select %p130, %s15, 1
        %p132 = scmp.lt.s32.totalorder %s129, 63
        %s133 = scalar_select %p132, %s129, 63
        %s134 = smul.addr %s131, 64
        %s135 = sadd.s32 %s133, %s134
        %s136 = smul.addr %s135, 8
        %s137 = scalar_lea.vmem %s1, %s136
        %s138 = smul.u32 64, %s16
      $region24: #{loss_batched_forward.5} parent=15 // pred_fallthru
        _
    $region16: #{loss_batched_forward.5} parent=5 // pred_fallthru
      _
    %p139 = scmp.le.s32.totalorder 1, %s8
    %p140 = scmp.lt.s32.totalorder %s8, 3
    %p141 = pnand %p139, %p140
    %p142 = pneg %p141
    // Predicated region
    $region25: #{loss_batched_forward.5} parent=5 // pred_check
      _
    $region26: #{loss_batched_forward.5} parent=5 // pred_check_branch
      %144 = sbr.rel (%p141) target = $region28
    $region27: #{loss_batched_forward.5} parent=5 // pred_region
      %s145 = ssub.s32 %s8, 1
      %p146 = scmp.lt.s32.totalorder %s17, 1
      %s147 = scalar_select %p146, %s17, 1
      %s148 = smul.addr %s147, 4
      %s149 = scalar_lea.vmem %s0, %s148
      %p150 = pneg %p46
      %p151 = pneg %p43
      %s152 = smul.u32 64, %s18
      %p153 = scmp.lt.s32.totalorder %s17, 1
      %s154 = scalar_select %p153, %s17, 1
      %p155 = scmp.lt.s32.totalorder %s152, 63
      %s156 = scalar_select %p155, %s152, 63
      %s157 = smul.addr %s154, 64
      %s158 = sadd.s32 %s156, %s157
      %s159 = smul.addr %s158, 8
      %s160 = scalar_lea.vmem %s1, %s159
      %p161 = pneg %p74
      %p162 = pneg %p71
      %p163 = pneg %p100
      %p164 = pneg %p97
      %p165 = scmp.lt.s32.totalorder %s17, 1
      %s166 = scalar_select %p165, %s17, 1
      %s167 = scalar_lea.vmem %s2, %s166
      %p168 = scmp.lt.s32.totalorder %s17, 1
      %s169 = scalar_select %p168, %s17, 1
      %s170 = smul.addr %s169, 4
      %s171 = scalar_lea.vmem %s0, %s170
      %s172 = smul.u32 64, %s18
      %p173 = scmp.lt.s32.totalorder %s17, 1
      %s174 = scalar_select %p173, %s17, 1
      %p175 = scmp.lt.s32.totalorder %s172, 63
      %s176 = scalar_select %p175, %s172, 63
      %s177 = smul.addr %s174, 64
      %s178 = sadd.s32 %s176, %s177
      %s179 = smul.addr %s178, 8
      %s180 = scalar_lea.vmem %s1, %s179
      %s181 = smul.u32 64, %s18
      %p182 = scmp.lt.s32.totalorder %s17, 1
      %s183 = scalar_select %p182, %s17, 1
      %s184 = scalar_lea.vmem %s2, %s183
      %p185 = scmp.eq.s32.totalorder %s18, 0
      // Predicated region
      $region29: #{loss_batched_forward.5} parent=27 // pred_check
        %p186 = pneg %p185
      $region30: #{loss_batched_forward.5} parent=27 // pred_check_branch
        %188 = sbr.rel (%p186) target = $region32
      $region31: #{loss_batched_forward.5} parent=27 // pred_region
        %189 = vst [vmem:[#allocation2] sm:$0x1] inf
      $region32: #{loss_batched_forward.5} parent=27 // pred_fallthru
        _
      %v190 = vld [vmem:[%s171] sm:$0x7]
      %v191 = vld [vmem:[%s180] sm:$0xff]
      %v192 = vld [vmem:[%s180 + $0x8] sm:$0xff]
      %v193 = vld [vmem:[%s180 + $0x10] sm:$0xff]
      %v194 = vld [vmem:[%s180 + $0x18] sm:$0xff]
      %v195 = vld [vmem:[%s180 + $0x20] sm:$0xff]
      %v196 = vld [vmem:[%s180 + $0x28] sm:$0xff]
      %v197 = vld [vmem:[%s180 + $0x30] sm:$0xff]
      %v198 = vld [vmem:[%s180 + $0x38] sm:$0xff]
      %v199 = vld [vmem:[%s180 + $0x40] sm:$0xff]
      %v200 = vld [vmem:[%s180 + $0x48] sm:$0xff]
      %v201 = vld [vmem:[%s180 + $0x50] sm:$0xff]
      %v202 = vld [vmem:[%s180 + $0x58] sm:$0xff]
      %v203 = vld [vmem:[%s180 + $0x60] sm:$0xff]
      %v204 = vld [vmem:[%s180 + $0x68] sm:$0xff]
      %v205 = vld [vmem:[%s180 + $0x70] sm:$0xff]
      %v206 = vld [vmem:[%s180 + $0x78] sm:$0xff]
      %v207 = vld [vmem:[%s180 + $0x80] sm:$0xff]
      %v208 = vld [vmem:[%s180 + $0x88] sm:$0xff]
      %v209 = vld [vmem:[%s180 + $0x90] sm:$0xff]
      %v210 = vld [vmem:[%s180 + $0x98] sm:$0xff]
      %v211 = vld [vmem:[%s180 + $0xa0] sm:$0xff]
      %v212 = vld [vmem:[%s180 + $0xa8] sm:$0xff]
      %v213 = vld [vmem:[%s180 + $0xb0] sm:$0xff]
      %v214 = vld [vmem:[%s180 + $0xb8] sm:$0xff]
      %v215 = vld [vmem:[%s180 + $0xc0] sm:$0xff]
      %v216 = vld [vmem:[%s180 + $0xc8] sm:$0xff]
      %v217 = vld [vmem:[%s180 + $0xd0] sm:$0xff]
      %v218 = vld [vmem:[%s180 + $0xd8] sm:$0xff]
      %v219 = vld [vmem:[%s180 + $0xe0] sm:$0xff]
      %v220 = vld [vmem:[%s180 + $0xe8] sm:$0xff]
      %v221 = vld [vmem:[%s180 + $0xf0] sm:$0xff]
      %v222 = vld [vmem:[%s180 + $0xf8] sm:$0xff]
      %v223 = vld [vmem:[%s180 + $0x100] sm:$0xff]
      %v224 = vld [vmem:[%s180 + $0x108] sm:$0xff]
      %v225 = vld [vmem:[%s180 + $0x110] sm:$0xff]
      %v226 = vld [vmem:[%s180 + $0x118] sm:$0xff]
      %v227 = vld [vmem:[%s180 + $0x120] sm:$0xff]
      %v228 = vld [vmem:[%s180 + $0x128] sm:$0xff]
      %v229 = vld [vmem:[%s180 + $0x130] sm:$0xff]
      %v230 = vld [vmem:[%s180 + $0x138] sm:$0xff]
      %v231 = vld [vmem:[%s180 + $0x140] sm:$0xff]
      %v232 = vld [vmem:[%s180 + $0x148] sm:$0xff]
      %v233 = vld [vmem:[%s180 + $0x150] sm:$0xff]
      %v234 = vld [vmem:[%s180 + $0x158] sm:$0xff]
      %v235 = vld [vmem:[%s180 + $0x160] sm:$0xff]
      %v236 = vld [vmem:[%s180 + $0x168] sm:$0xff]
      %v237 = vld [vmem:[%s180 + $0x170] sm:$0xff]
      %v238 = vld [vmem:[%s180 + $0x178] sm:$0xff]
      %v239 = vld [vmem:[%s180 + $0x180] sm:$0xff]
      %v240 = vld [vmem:[%s180 + $0x188] sm:$0xff]
      %v241 = vld [vmem:[%s180 + $0x190] sm:$0xff]
      %v242 = vld [vmem:[%s180 + $0x198] sm:$0xff]
      %v243 = vld [vmem:[%s180 + $0x1a0] sm:$0xff]
      %v244 = vld [vmem:[%s180 + $0x1a8] sm:$0xff]
      %v245 = vld [vmem:[%s180 + $0x1b0] sm:$0xff]
      %v246 = vld [vmem:[%s180 + $0x1b8] sm:$0xff]
      %v247 = vld [vmem:[%s180 + $0x1c0] sm:$0xff]
      %v248 = vld [vmem:[%s180 + $0x1c8] sm:$0xff]
      %v249 = vld [vmem:[%s180 + $0x1d0] sm:$0xff]
      %v250 = vld [vmem:[%s180 + $0x1d8] sm:$0xff]
      %v251 = vld [vmem:[%s180 + $0x1e0] sm:$0xff]
      %v252 = vld [vmem:[%s180 + $0x1e8] sm:$0xff]
      %v253 = vld [vmem:[%s180 + $0x1f0] sm:$0xff]
      %v254 = vld [vmem:[%s180 + $0x1f8] sm:$0xff]
      %256 = vset.pattern.permute.xlu0 0
      %257 = vperm.xlu0 %256, %v191
      %v258 = vpop.permute.xlu0 %257
      %261 = vset.pattern.permute.xlu0 0
      %262 = vperm.xlu0 %261, %v192
      %v263 = vpop.permute.xlu0 %262
      %266 = vset.pattern.permute.xlu0 0
      %267 = vperm.xlu0 %266, %v193
      %v268 = vpop.permute.xlu0 %267
      %271 = vset.pattern.permute.xlu0 0
      %272 = vperm.xlu0 %271, %v194
      %v273 = vpop.permute.xlu0 %272
      %276 = vset.pattern.permute.xlu0 0
      %277 = vperm.xlu0 %276, %v195
      %v278 = vpop.permute.xlu0 %277
      %281 = vset.pattern.permute.xlu0 0
      %282 = vperm.xlu0 %281, %v196
      %v283 = vpop.permute.xlu0 %282
      %286 = vset.pattern.permute.xlu0 0
      %287 = vperm.xlu0 %286, %v197
      %v288 = vpop.permute.xlu0 %287
      %291 = vset.pattern.permute.xlu0 0
      %292 = vperm.xlu0 %291, %v198
      %v293 = vpop.permute.xlu0 %292
      %296 = vset.pattern.permute.xlu0 0
      %297 = vperm.xlu0 %296, %v199
      %v298 = vpop.permute.xlu0 %297
      %301 = vset.pattern.permute.xlu0 0
      %302 = vperm.xlu0 %301, %v200
      %v303 = vpop.permute.xlu0 %302
      %306 = vset.pattern.permute.xlu0 0
      %307 = vperm.xlu0 %306, %v201
      %v308 = vpop.permute.xlu0 %307
      %311 = vset.pattern.permute.xlu0 0
      %312 = vperm.xlu0 %311, %v202
      %v313 = vpop.permute.xlu0 %312
      %316 = vset.pattern.permute.xlu0 0
      %317 = vperm.xlu0 %316, %v203
      %v318 = vpop.permute.xlu0 %317
      %321 = vset.pattern.permute.xlu0 0
      %322 = vperm.xlu0 %321, %v204
      %v323 = vpop.permute.xlu0 %322
      %326 = vset.pattern.permute.xlu0 0
      %327 = vperm.xlu0 %326, %v205
      %v328 = vpop.permute.xlu0 %327
      %331 = vset.pattern.permute.xlu0 0
      %332 = vperm.xlu0 %331, %v206
      %v333 = vpop.permute.xlu0 %332
      %336 = vset.pattern.permute.xlu0 0
      %337 = vperm.xlu0 %336, %v207
      %v338 = vpop.permute.xlu0 %337
      %341 = vset.pattern.permute.xlu0 0
      %342 = vperm.xlu0 %341, %v208
      %v343 = vpop.permute.xlu0 %342
      %346 = vset.pattern.permute.xlu0 0
      %347 = vperm.xlu0 %346, %v209
      %v348 = vpop.permute.xlu0 %347
      %351 = vset.pattern.permute.xlu0 0
      %352 = vperm.xlu0 %351, %v210
      %v353 = vpop.permute.xlu0 %352
      %356 = vset.pattern.permute.xlu0 0
      %357 = vperm.xlu0 %356, %v211
      %v358 = vpop.permute.xlu0 %357
      %361 = vset.pattern.permute.xlu0 0
      %362 = vperm.xlu0 %361, %v212
      %v363 = vpop.permute.xlu0 %362
      %366 = vset.pattern.permute.xlu0 0
      %367 = vperm.xlu0 %366, %v213
      %v368 = vpop.permute.xlu0 %367
      %371 = vset.pattern.permute.xlu0 0
      %372 = vperm.xlu0 %371, %v214
      %v373 = vpop.permute.xlu0 %372
      %376 = vset.pattern.permute.xlu0 0
      %377 = vperm.xlu0 %376, %v215
      %v378 = vpop.permute.xlu0 %377
      %381 = vset.pattern.permute.xlu0 0
      %382 = vperm.xlu0 %381, %v216
      %v383 = vpop.permute.xlu0 %382
      %386 = vset.pattern.permute.xlu0 0
      %387 = vperm.xlu0 %386, %v217
      %v388 = vpop.permute.xlu0 %387
      %391 = vset.pattern.permute.xlu0 0
      %392 = vperm.xlu0 %391, %v218
      %v393 = vpop.permute.xlu0 %392
      %396 = vset.pattern.permute.xlu0 0
      %397 = vperm.xlu0 %396, %v219
      %v398 = vpop.permute.xlu0 %397
      %401 = vset.pattern.permute.xlu0 0
      %402 = vperm.xlu0 %401, %v220
      %v403 = vpop.permute.xlu0 %402
      %406 = vset.pattern.permute.xlu0 0
      %407 = vperm.xlu0 %406, %v221
      %v408 = vpop.permute.xlu0 %407
      %411 = vset.pattern.permute.xlu0 0
      %412 = vperm.xlu0 %411, %v222
      %v413 = vpop.permute.xlu0 %412
      %416 = vset.pattern.permute.xlu0 0
      %417 = vperm.xlu0 %416, %v223
      %v418 = vpop.permute.xlu0 %417
      %421 = vset.pattern.permute.xlu0 0
      %422 = vperm.xlu0 %421, %v224
      %v423 = vpop.permute.xlu0 %422
      %426 = vset.pattern.permute.xlu0 0
      %427 = vperm.xlu0 %426, %v225
      %v428 = vpop.permute.xlu0 %427
      %431 = vset.pattern.permute.xlu0 0
      %432 = vperm.xlu0 %431, %v226
      %v433 = vpop.permute.xlu0 %432
      %436 = vset.pattern.permute.xlu0 0
      %437 = vperm.xlu0 %436, %v227
      %v438 = vpop.permute.xlu0 %437
      %441 = vset.pattern.permute.xlu0 0
      %442 = vperm.xlu0 %441, %v228
      %v443 = vpop.permute.xlu0 %442
      %446 = vset.pattern.permute.xlu0 0
      %447 = vperm.xlu0 %446, %v229
      %v448 = vpop.permute.xlu0 %447
      %451 = vset.pattern.permute.xlu0 0
      %452 = vperm.xlu0 %451, %v230
      %v453 = vpop.permute.xlu0 %452
      %456 = vset.pattern.permute.xlu0 0
      %457 = vperm.xlu0 %456, %v231
      %v458 = vpop.permute.xlu0 %457
      %461 = vset.pattern.permute.xlu0 0
      %462 = vperm.xlu0 %461, %v232
      %v463 = vpop.permute.xlu0 %462
      %466 = vset.pattern.permute.xlu0 0
      %467 = vperm.xlu0 %466, %v233
      %v468 = vpop.permute.xlu0 %467
      %471 = vset.pattern.permute.xlu0 0
      %472 = vperm.xlu0 %471, %v234
      %v473 = vpop.permute.xlu0 %472
      %476 = vset.pattern.permute.xlu0 0
      %477 = vperm.xlu0 %476, %v235
      %v478 = vpop.permute.xlu0 %477
      %481 = vset.pattern.permute.xlu0 0
      %482 = vperm.xlu0 %481, %v236
      %v483 = vpop.permute.xlu0 %482
      %486 = vset.pattern.permute.xlu0 0
      %487 = vperm.xlu0 %486, %v237
      %v488 = vpop.permute.xlu0 %487
      %491 = vset.pattern.permute.xlu0 0
      %492 = vperm.xlu0 %491, %v238
      %v493 = vpop.permute.xlu0 %492
      %496 = vset.pattern.permute.xlu0 0
      %497 = vperm.xlu0 %496, %v239
      %v498 = vpop.permute.xlu0 %497
      %501 = vset.pattern.permute.xlu0 0
      %502 = vperm.xlu0 %501, %v240
      %v503 = vpop.permute.xlu0 %502
      %506 = vset.pattern.permute.xlu0 0
      %507 = vperm.xlu0 %506, %v241
      %v508 = vpop.permute.xlu0 %507
      %511 = vset.pattern.permute.xlu0 0
      %512 = vperm.xlu0 %511, %v242
      %v513 = vpop.permute.xlu0 %512
      %516 = vset.pattern.permute.xlu0 0
      %517 = vperm.xlu0 %516, %v243
      %v518 = vpop.permute.xlu0 %517
      %521 = vset.pattern.permute.xlu0 0
      %522 = vperm.xlu0 %521, %v244
      %v523 = vpop.permute.xlu0 %522
      %526 = vset.pattern.permute.xlu0 0
      %527 = vperm.xlu0 %526, %v245
      %v528 = vpop.permute.xlu0 %527
      %531 = vset.pattern.permute.xlu0 0
      %532 = vperm.xlu0 %531, %v246
      %v533 = vpop.permute.xlu0 %532
      %536 = vset.pattern.permute.xlu0 0
      %537 = vperm.xlu0 %536, %v247
      %v538 = vpop.permute.xlu0 %537
      %541 = vset.pattern.permute.xlu0 0
      %542 = vperm.xlu0 %541, %v248
      %v543 = vpop.permute.xlu0 %542
      %546 = vset.pattern.permute.xlu0 0
      %547 = vperm.xlu0 %546, %v249
      %v548 = vpop.permute.xlu0 %547
      %551 = vset.pattern.permute.xlu0 0
      %552 = vperm.xlu0 %551, %v250
      %v553 = vpop.permute.xlu0 %552
      %556 = vset.pattern.permute.xlu0 0
      %557 = vperm.xlu0 %556, %v251
      %v558 = vpop.permute.xlu0 %557
      %561 = vset.pattern.permute.xlu0 0
      %562 = vperm.xlu0 %561, %v252
      %v563 = vpop.permute.xlu0 %562
      %566 = vset.pattern.permute.xlu0 0
      %567 = vperm.xlu0 %566, %v253
      %v568 = vpop.permute.xlu0 %567
      %571 = vset.pattern.permute.xlu0 0
      %572 = vperm.xlu0 %571, %v254
      %v573 = vpop.permute.xlu0 %572
      %v575 = vlaneseq
      %v576 = vshrl.u32 %v575, 7
      %v577 = vsub.s32 0, %v576
      %v578 = vrot.slane %v190, %v577
      %v579 = vsub.f32 %v258, %v578
      %v580 = vsub.f32 %v263, %v578
      %v581 = vsub.f32 %v268, %v578
      %v582 = vsub.f32 %v273, %v578
      %v583 = vsub.f32 %v278, %v578
      %v584 = vsub.f32 %v283, %v578
      %v585 = vsub.f32 %v288, %v578
      %v586 = vsub.f32 %v293, %v578
      %v587 = vsub.f32 %v298, %v578
      %v588 = vsub.f32 %v303, %v578
      %v589 = vsub.f32 %v308, %v578
      %v590 = vsub.f32 %v313, %v578
      %v591 = vsub.f32 %v318, %v578
      %v592 = vsub.f32 %v323, %v578
      %v593 = vsub.f32 %v328, %v578
      %v594 = vsub.f32 %v333, %v578
      %v595 = vsub.f32 %v338, %v578
      %v596 = vsub.f32 %v343, %v578
      %v597 = vsub.f32 %v348, %v578
      %v598 = vsub.f32 %v353, %v578
      %v599 = vsub.f32 %v358, %v578
      %v600 = vsub.f32 %v363, %v578
      %v601 = vsub.f32 %v368, %v578
      %v602 = vsub.f32 %v373, %v578
      %v603 = vsub.f32 %v378, %v578
      %v604 = vsub.f32 %v383, %v578
      %v605 = vsub.f32 %v388, %v578
      %v606 = vsub.f32 %v393, %v578
      %v607 = vsub.f32 %v398, %v578
      %v608 = vsub.f32 %v403, %v578
      %v609 = vsub.f32 %v408, %v578
      %v610 = vsub.f32 %v413, %v578
      %v611 = vsub.f32 %v418, %v578
      %v612 = vsub.f32 %v423, %v578
      %v613 = vsub.f32 %v428, %v578
      %v614 = vsub.f32 %v433, %v578
      %v615 = vsub.f32 %v438, %v578
      %v616 = vsub.f32 %v443, %v578
      %v617 = vsub.f32 %v448, %v578
      %v618 = vsub.f32 %v453, %v578
      %v619 = vsub.f32 %v458, %v578
      %v620 = vsub.f32 %v463, %v578
      %v621 = vsub.f32 %v468, %v578
      %v622 = vsub.f32 %v473, %v578
      %v623 = vsub.f32 %v478, %v578
      %v624 = vsub.f32 %v483, %v578
      %v625 = vsub.f32 %v488, %v578
      %v626 = vsub.f32 %v493, %v578
      %v627 = vsub.f32 %v498, %v578
      %v628 = vsub.f32 %v503, %v578
      %v629 = vsub.f32 %v508, %v578
      %v630 = vsub.f32 %v513, %v578
      %v631 = vsub.f32 %v518, %v578
      %v632 = vsub.f32 %v523, %v578
      %v633 = vsub.f32 %v528, %v578
      %v634 = vsub.f32 %v533, %v578
      %v635 = vsub.f32 %v538, %v578
      %v636 = vsub.f32 %v543, %v578
      %v637 = vsub.f32 %v548, %v578
      %v638 = vsub.f32 %v553, %v578
      %v639 = vsub.f32 %v558, %v578
      %v640 = vsub.f32 %v563, %v578
      %v641 = vsub.f32 %v568, %v578
      %v642 = vsub.f32 %v573, %v578
      %v643 = vmul.f32 %v579, %v579
      %v644 = vmul.f32 %v580, %v580
      %v645 = vmul.f32 %v581, %v581
      %v646 = vmul.f32 %v582, %v582
      %v647 = vmul.f32 %v583, %v583
      %v648 = vmul.f32 %v584, %v584
      %v649 = vmul.f32 %v585, %v585
      %v650 = vmul.f32 %v586, %v586
      %v651 = vmul.f32 %v587, %v587
      %v652 = vmul.f32 %v588, %v588
      %v653 = vmul.f32 %v589, %v589
      %v654 = vmul.f32 %v590, %v590
      %v655 = vmul.f32 %v591, %v591
      %v656 = vmul.f32 %v592, %v592
      %v657 = vmul.f32 %v593, %v593
      %v658 = vmul.f32 %v594, %v594
      %v659 = vmul.f32 %v595, %v595
      %v660 = vmul.f32 %v596, %v596
      %v661 = vmul.f32 %v597, %v597
      %v662 = vmul.f32 %v598, %v598
      %v663 = vmul.f32 %v599, %v599
      %v664 = vmul.f32 %v600, %v600
      %v665 = vmul.f32 %v601, %v601
      %v666 = vmul.f32 %v602, %v602
      %v667 = vmul.f32 %v603, %v603
      %v668 = vmul.f32 %v604, %v604
      %v669 = vmul.f32 %v605, %v605
      %v670 = vmul.f32 %v606, %v606
      %v671 = vmul.f32 %v607, %v607
      %v672 = vmul.f32 %v608, %v608
      %v673 = vmul.f32 %v609, %v609
      %v674 = vmul.f32 %v610, %v610
      %v675 = vmul.f32 %v611, %v611
      %v676 = vmul.f32 %v612, %v612
      %v677 = vmul.f32 %v613, %v613
      %v678 = vmul.f32 %v614, %v614
      %v679 = vmul.f32 %v615, %v615
      %v680 = vmul.f32 %v616, %v616
      %v681 = vmul.f32 %v617, %v617
      %v682 = vmul.f32 %v618, %v618
      %v683 = vmul.f32 %v619, %v619
      %v684 = vmul.f32 %v620, %v620
      %v685 = vmul.f32 %v621, %v621
      %v686 = vmul.f32 %v622, %v622
      %v687 = vmul.f32 %v623, %v623
      %v688 = vmul.f32 %v624, %v624
      %v689 = vmul.f32 %v625, %v625
      %v690 = vmul.f32 %v626, %v626
      %v691 = vmul.f32 %v627, %v627
      %v692 = vmul.f32 %v628, %v628
      %v693 = vmul.f32 %v629, %v629
      %v694 = vmul.f32 %v630, %v630
      %v695 = vmul.f32 %v631, %v631
      %v696 = vmul.f32 %v632, %v632
      %v697 = vmul.f32 %v633, %v633
      %v698 = vmul.f32 %v634, %v634
      %v699 = vmul.f32 %v635, %v635
      %v700 = vmul.f32 %v636, %v636
      %v701 = vmul.f32 %v637, %v637
      %v702 = vmul.f32 %v638, %v638
      %v703 = vmul.f32 %v639, %v639
      %v704 = vmul.f32 %v640, %v640
      %v705 = vmul.f32 %v641, %v641
      %v706 = vmul.f32 %v642, %v642
      %707 = vset.pattern.permute.xlu0 1
      %708 = vperm.xlu0 %707, %v191
      %v709 = vpop.permute.xlu0 %708
      %711 = vset.pattern.permute.xlu0 1
      %712 = vperm.xlu0 %711, %v192
      %v713 = vpop.permute.xlu0 %712
      %715 = vset.pattern.permute.xlu0 1
      %716 = vperm.xlu0 %715, %v193
      %v717 = vpop.permute.xlu0 %716
      %719 = vset.pattern.permute.xlu0 1
      %720 = vperm.xlu0 %719, %v194
      %v721 = vpop.permute.xlu0 %720
      %723 = vset.pattern.permute.xlu0 1
      %724 = vperm.xlu0 %723, %v195
      %v725 = vpop.permute.xlu0 %724
      %727 = vset.pattern.permute.xlu0 1
      %728 = vperm.xlu0 %727, %v196
      %v729 = vpop.permute.xlu0 %728
      %731 = vset.pattern.permute.xlu0 1
      %732 = vperm.xlu0 %731, %v197
      %v733 = vpop.permute.xlu0 %732
      %735 = vset.pattern.permute.xlu0 1
      %736 = vperm.xlu0 %735, %v198
      %v737 = vpop.permute.xlu0 %736
      %739 = vset.pattern.permute.xlu0 1
      %740 = vperm.xlu0 %739, %v199
      %v741 = vpop.permute.xlu0 %740
      %743 = vset.pattern.permute.xlu0 1
      %744 = vperm.xlu0 %743, %v200
      %v745 = vpop.permute.xlu0 %744
      %747 = vset.pattern.permute.xlu0 1
      %748 = vperm.xlu0 %747, %v201
      %v749 = vpop.permute.xlu0 %748
      %751 = vset.pattern.permute.xlu0 1
      %752 = vperm.xlu0 %751, %v202
      %v753 = vpop.permute.xlu0 %752
      %755 = vset.pattern.permute.xlu0 1
      %756 = vperm.xlu0 %755, %v203
      %v757 = vpop.permute.xlu0 %756
      %759 = vset.pattern.permute.xlu0 1
      %760 = vperm.xlu0 %759, %v204
      %v761 = vpop.permute.xlu0 %760
      %763 = vset.pattern.permute.xlu0 1
      %764 = vperm.xlu0 %763, %v205
      %v765 = vpop.permute.xlu0 %764
      %767 = vset.pattern.permute.xlu0 1
      %768 = vperm.xlu0 %767, %v206
      %v769 = vpop.permute.xlu0 %768
      %771 = vset.pattern.permute.xlu0 1
      %772 = vperm.xlu0 %771, %v207
      %v773 = vpop.permute.xlu0 %772
      %775 = vset.pattern.permute.xlu0 1
      %776 = vperm.xlu0 %775, %v208
      %v777 = vpop.permute.xlu0 %776
      %779 = vset.pattern.permute.xlu0 1
      %780 = vperm.xlu0 %779, %v209
      %v781 = vpop.permute.xlu0 %780
      %783 = vset.pattern.permute.xlu0 1
      %784 = vperm.xlu0 %783, %v210
      %v785 = vpop.permute.xlu0 %784
      %787 = vset.pattern.permute.xlu0 1
      %788 = vperm.xlu0 %787, %v211
      %v789 = vpop.permute.xlu0 %788
      %791 = vset.pattern.permute.xlu0 1
      %792 = vperm.xlu0 %791, %v212
      %v793 = vpop.permute.xlu0 %792
      %795 = vset.pattern.permute.xlu0 1
      %796 = vperm.xlu0 %795, %v213
      %v797 = vpop.permute.xlu0 %796
      %799 = vset.pattern.permute.xlu0 1
      %800 = vperm.xlu0 %799, %v214
      %v801 = vpop.permute.xlu0 %800
      %803 = vset.pattern.permute.xlu0 1
      %804 = vperm.xlu0 %803, %v215
      %v805 = vpop.permute.xlu0 %804
      %807 = vset.pattern.permute.xlu0 1
      %808 = vperm.xlu0 %807, %v216
      %v809 = vpop.permute.xlu0 %808
      %811 = vset.pattern.permute.xlu0 1
      %812 = vperm.xlu0 %811, %v217
      %v813 = vpop.permute.xlu0 %812
      %815 = vset.pattern.permute.xlu0 1
      %816 = vperm.xlu0 %815, %v218
      %v817 = vpop.permute.xlu0 %816
      %819 = vset.pattern.permute.xlu0 1
      %820 = vperm.xlu0 %819, %v219
      %v821 = vpop.permute.xlu0 %820
      %823 = vset.pattern.permute.xlu0 1
      %824 = vperm.xlu0 %823, %v220
      %v825 = vpop.permute.xlu0 %824
      %827 = vset.pattern.permute.xlu0 1
      %828 = vperm.xlu0 %827, %v221
      %v829 = vpop.permute.xlu0 %828
      %831 = vset.pattern.permute.xlu0 1
      %832 = vperm.xlu0 %831, %v222
      %v833 = vpop.permute.xlu0 %832
      %835 = vset.pattern.permute.xlu0 1
      %836 = vperm.xlu0 %835, %v223
      %v837 = vpop.permute.xlu0 %836
      %839 = vset.pattern.permute.xlu0 1
      %840 = vperm.xlu0 %839, %v224
      %v841 = vpop.permute.xlu0 %840
      %843 = vset.pattern.permute.xlu0 1
      %844 = vperm.xlu0 %843, %v225
      %v845 = vpop.permute.xlu0 %844
      %847 = vset.pattern.permute.xlu0 1
      %848 = vperm.xlu0 %847, %v226
      %v849 = vpop.permute.xlu0 %848
      %851 = vset.pattern.permute.xlu0 1
      %852 = vperm.xlu0 %851, %v227
      %v853 = vpop.permute.xlu0 %852
      %855 = vset.pattern.permute.xlu0 1
      %856 = vperm.xlu0 %855, %v228
      %v857 = vpop.permute.xlu0 %856
      %859 = vset.pattern.permute.xlu0 1
      %860 = vperm.xlu0 %859, %v229
      %v861 = vpop.permute.xlu0 %860
      %863 = vset.pattern.permute.xlu0 1
      %864 = vperm.xlu0 %863, %v230
      %v865 = vpop.permute.xlu0 %864
      %867 = vset.pattern.permute.xlu0 1
      %868 = vperm.xlu0 %867, %v231
      %v869 = vpop.permute.xlu0 %868
      %871 = vset.pattern.permute.xlu0 1
      %872 = vperm.xlu0 %871, %v232
      %v873 = vpop.permute.xlu0 %872
      %875 = vset.pattern.permute.xlu0 1
      %876 = vperm.xlu0 %875, %v233
      %v877 = vpop.permute.xlu0 %876
      %879 = vset.pattern.permute.xlu0 1
      %880 = vperm.xlu0 %879, %v234
      %v881 = vpop.permute.xlu0 %880
      %883 = vset.pattern.permute.xlu0 1
      %884 = vperm.xlu0 %883, %v235
      %v885 = vpop.permute.xlu0 %884
      %887 = vset.pattern.permute.xlu0 1
      %888 = vperm.xlu0 %887, %v236
      %v889 = vpop.permute.xlu0 %888
      %891 = vset.pattern.permute.xlu0 1
      %892 = vperm.xlu0 %891, %v237
      %v893 = vpop.permute.xlu0 %892
      %895 = vset.pattern.permute.xlu0 1
      %896 = vperm.xlu0 %895, %v238
      %v897 = vpop.permute.xlu0 %896
      %899 = vset.pattern.permute.xlu0 1
      %900 = vperm.xlu0 %899, %v239
      %v901 = vpop.permute.xlu0 %900
      %903 = vset.pattern.permute.xlu0 1
      %904 = vperm.xlu0 %903, %v240
      %v905 = vpop.permute.xlu0 %904
      %907 = vset.pattern.permute.xlu0 1
      %908 = vperm.xlu0 %907, %v241
      %v909 = vpop.permute.xlu0 %908
      %911 = vset.pattern.permute.xlu0 1
      %912 = vperm.xlu0 %911, %v242
      %v913 = vpop.permute.xlu0 %912
      %915 = vset.pattern.permute.xlu0 1
      %916 = vperm.xlu0 %915, %v243
      %v917 = vpop.permute.xlu0 %916
      %919 = vset.pattern.permute.xlu0 1
      %920 = vperm.xlu0 %919, %v244
      %v921 = vpop.permute.xlu0 %920
      %923 = vset.pattern.permute.xlu0 1
      %924 = vperm.xlu0 %923, %v245
      %v925 = vpop.permute.xlu0 %924
      %927 = vset.pattern.permute.xlu0 1
      %928 = vperm.xlu0 %927, %v246
      %v929 = vpop.permute.xlu0 %928
      %931 = vset.pattern.permute.xlu0 1
      %932 = vperm.xlu0 %931, %v247
      %v933 = vpop.permute.xlu0 %932
      %935 = vset.pattern.permute.xlu0 1
      %936 = vperm.xlu0 %935, %v248
      %v937 = vpop.permute.xlu0 %936
      %939 = vset.pattern.permute.xlu0 1
      %940 = vperm.xlu0 %939, %v249
      %v941 = vpop.permute.xlu0 %940
      %943 = vset.pattern.permute.xlu0 1
      %944 = vperm.xlu0 %943, %v250
      %v945 = vpop.permute.xlu0 %944
      %947 = vset.pattern.permute.xlu0 1
      %948 = vperm.xlu0 %947, %v251
      %v949 = vpop.permute.xlu0 %948
      %951 = vset.pattern.permute.xlu0 1
      %952 = vperm.xlu0 %951, %v252
      %v953 = vpop.permute.xlu0 %952
      %955 = vset.pattern.permute.xlu0 1
      %956 = vperm.xlu0 %955, %v253
      %v957 = vpop.permute.xlu0 %956
      %959 = vset.pattern.permute.xlu0 1
      %960 = vperm.xlu0 %959, %v254
      %v961 = vpop.permute.xlu0 %960
      %v963 = vlaneseq
      %v964 = vshrl.u32 %v963, 7
      %v965 = vsub.s32 1, %v964
      %v966 = vrot.slane %v190, %v965
      %v967 = vsub.f32 %v709, %v966
      %v968 = vsub.f32 %v713, %v966
      %v969 = vsub.f32 %v717, %v966
      %v970 = vsub.f32 %v721, %v966
      %v971 = vsub.f32 %v725, %v966
      %v972 = vsub.f32 %v729, %v966
      %v973 = vsub.f32 %v733, %v966
      %v974 = vsub.f32 %v737, %v966
      %v975 = vsub.f32 %v741, %v966
      %v976 = vsub.f32 %v745, %v966
      %v977 = vsub.f32 %v749, %v966
      %v978 = vsub.f32 %v753, %v966
      %v979 = vsub.f32 %v757, %v966
      %v980 = vsub.f32 %v761, %v966
      %v981 = vsub.f32 %v765, %v966
      %v982 = vsub.f32 %v769, %v966
      %v983 = vsub.f32 %v773, %v966
      %v984 = vsub.f32 %v777, %v966
      %v985 = vsub.f32 %v781, %v966
      %v986 = vsub.f32 %v785, %v966
      %v987 = vsub.f32 %v789, %v966
      %v988 = vsub.f32 %v793, %v966
      %v989 = vsub.f32 %v797, %v966
      %v990 = vsub.f32 %v801, %v966
      %v991 = vsub.f32 %v805, %v966
      %v992 = vsub.f32 %v809, %v966
      %v993 = vsub.f32 %v813, %v966
      %v994 = vsub.f32 %v817, %v966
      %v995 = vsub.f32 %v821, %v966
      %v996 = vsub.f32 %v825, %v966
      %v997 = vsub.f32 %v829, %v966
      %v998 = vsub.f32 %v833, %v966
      %v999 = vsub.f32 %v837, %v966
      %v1000 = vsub.f32 %v841, %v966
      %v1001 = vsub.f32 %v845, %v966
      %v1002 = vsub.f32 %v849, %v966
      %v1003 = vsub.f32 %v853, %v966
      %v1004 = vsub.f32 %v857, %v966
      %v1005 = vsub.f32 %v861, %v966
      %v1006 = vsub.f32 %v865, %v966
      %v1007 = vsub.f32 %v869, %v966
      %v1008 = vsub.f32 %v873, %v966
      %v1009 = vsub.f32 %v877, %v966
      %v1010 = vsub.f32 %v881, %v966
      %v1011 = vsub.f32 %v885, %v966
      %v1012 = vsub.f32 %v889, %v966
      %v1013 = vsub.f32 %v893, %v966
      %v1014 = vsub.f32 %v897, %v966
      %v1015 = vsub.f32 %v901, %v966
      %v1016 = vsub.f32 %v905, %v966
      %v1017 = vsub.f32 %v909, %v966
      %v1018 = vsub.f32 %v913, %v966
      %v1019 = vsub.f32 %v917, %v966
      %v1020 = vsub.f32 %v921, %v966
      %v1021 = vsub.f32 %v925, %v966
      %v1022 = vsub.f32 %v929, %v966
      %v1023 = vsub.f32 %v933, %v966
      %v1024 = vsub.f32 %v937, %v966
      %v1025 = vsub.f32 %v941, %v966
      %v1026 = vsub.f32 %v945, %v966
      %v1027 = vsub.f32 %v949, %v966
      %v1028 = vsub.f32 %v953, %v966
      %v1029 = vsub.f32 %v957, %v966
      %v1030 = vsub.f32 %v961, %v966
      %v1031 = vmul.f32 %v967, %v967
      %v1032 = vmul.f32 %v968, %v968
      %v1033 = vmul.f32 %v969, %v969
      %v1034 = vmul.f32 %v970, %v970
      %v1035 = vmul.f32 %v971, %v971
      %v1036 = vmul.f32 %v972, %v972
      %v1037 = vmul.f32 %v973, %v973
      %v1038 = vmul.f32 %v974, %v974
      %v1039 = vmul.f32 %v975, %v975
      %v1040 = vmul.f32 %v976, %v976
      %v1041 = vmul.f32 %v977, %v977
      %v1042 = vmul.f32 %v978, %v978
      %v1043 = vmul.f32 %v979, %v979
      %v1044 = vmul.f32 %v980, %v980
      %v1045 = vmul.f32 %v981, %v981
      %v1046 = vmul.f32 %v982, %v982
      %v1047 = vmul.f32 %v983, %v983
      %v1048 = vmul.f32 %v984, %v984
      %v1049 = vmul.f32 %v985, %v985
      %v1050 = vmul.f32 %v986, %v986
      %v1051 = vmul.f32 %v987, %v987
      %v1052 = vmul.f32 %v988, %v988
      %v1053 = vmul.f32 %v989, %v989
      %v1054 = vmul.f32 %v990, %v990
      %v1055 = vmul.f32 %v991, %v991
      %v1056 = vmul.f32 %v992, %v992
      %v1057 = vmul.f32 %v993, %v993
      %v1058 = vmul.f32 %v994, %v994
      %v1059 = vmul.f32 %v995, %v995
      %v1060 = vmul.f32 %v996, %v996
      %v1061 = vmul.f32 %v997, %v997
      %v1062 = vmul.f32 %v998, %v998
      %v1063 = vmul.f32 %v999, %v999
      %v1064 = vmul.f32 %v1000, %v1000
      %v1065 = vmul.f32 %v1001, %v1001
      %v1066 = vmul.f32 %v1002, %v1002
      %v1067 = vmul.f32 %v1003, %v1003
      %v1068 = vmul.f32 %v1004, %v1004
      %v1069 = vmul.f32 %v1005, %v1005
      %v1070 = vmul.f32 %v1006, %v1006
      %v1071 = vmul.f32 %v1007, %v1007
      %v1072 = vmul.f32 %v1008, %v1008
      %v1073 = vmul.f32 %v1009, %v1009
      %v1074 = vmul.f32 %v1010, %v1010
      %v1075 = vmul.f32 %v1011, %v1011
      %v1076 = vmul.f32 %v1012, %v1012
      %v1077 = vmul.f32 %v1013, %v1013
      %v1078 = vmul.f32 %v1014, %v1014
      %v1079 = vmul.f32 %v1015, %v1015
      %v1080 = vmul.f32 %v1016, %v1016
      %v1081 = vmul.f32 %v1017, %v1017
      %v1082 = vmul.f32 %v1018, %v1018
      %v1083 = vmul.f32 %v1019, %v1019
      %v1084 = vmul.f32 %v1020, %v1020
      %v1085 = vmul.f32 %v1021, %v1021
      %v1086 = vmul.f32 %v1022, %v1022
      %v1087 = vmul.f32 %v1023, %v1023
      %v1088 = vmul.f32 %v1024, %v1024
      %v1089 = vmul.f32 %v1025, %v1025
      %v1090 = vmul.f32 %v1026, %v1026
      %v1091 = vmul.f32 %v1027, %v1027
      %v1092 = vmul.f32 %v1028, %v1028
      %v1093 = vmul.f32 %v1029, %v1029
      %v1094 = vmul.f32 %v1030, %v1030
      %v1095 = vadd.f32 %v643, %v1031
      %v1096 = vadd.f32 %v644, %v1032
      %v1097 = vadd.f32 %v645, %v1033
      %v1098 = vadd.f32 %v646, %v1034
      %v1099 = vadd.f32 %v647, %v1035
      %v1100 = vadd.f32 %v648, %v1036
      %v1101 = vadd.f32 %v649, %v1037
      %v1102 = vadd.f32 %v650, %v1038
      %v1103 = vadd.f32 %v651, %v1039
      %v1104 = vadd.f32 %v652, %v1040
      %v1105 = vadd.f32 %v653, %v1041
      %v1106 = vadd.f32 %v654, %v1042
      %v1107 = vadd.f32 %v655, %v1043
      %v1108 = vadd.f32 %v656, %v1044
      %v1109 = vadd.f32 %v657, %v1045
      %v1110 = vadd.f32 %v658, %v1046
      %v1111 = vadd.f32 %v659, %v1047
      %v1112 = vadd.f32 %v660, %v1048
      %v1113 = vadd.f32 %v661, %v1049
      %v1114 = vadd.f32 %v662, %v1050
      %v1115 = vadd.f32 %v663, %v1051
      %v1116 = vadd.f32 %v664, %v1052
      %v1117 = vadd.f32 %v665, %v1053
      %v1118 = vadd.f32 %v666, %v1054
      %v1119 = vadd.f32 %v667, %v1055
      %v1120 = vadd.f32 %v668, %v1056
      %v1121 = vadd.f32 %v669, %v1057
      %v1122 = vadd.f32 %v670, %v1058
      %v1123 = vadd.f32 %v671, %v1059
      %v1124 = vadd.f32 %v672, %v1060
      %v1125 = vadd.f32 %v673, %v1061
      %v1126 = vadd.f32 %v674, %v1062
      %v1127 = vadd.f32 %v675, %v1063
      %v1128 = vadd.f32 %v676, %v1064
      %v1129 = vadd.f32 %v677, %v1065
      %v1130 = vadd.f32 %v678, %v1066
      %v1131 = vadd.f32 %v679, %v1067
      %v1132 = vadd.f32 %v680, %v1068
      %v1133 = vadd.f32 %v681, %v1069
      %v1134 = vadd.f32 %v682, %v1070
      %v1135 = vadd.f32 %v683, %v1071
      %v1136 = vadd.f32 %v684, %v1072
      %v1137 = vadd.f32 %v685, %v1073
      %v1138 = vadd.f32 %v686, %v1074
      %v1139 = vadd.f32 %v687, %v1075
      %v1140 = vadd.f32 %v688, %v1076
      %v1141 = vadd.f32 %v689, %v1077
      %v1142 = vadd.f32 %v690, %v1078
      %v1143 = vadd.f32 %v691, %v1079
      %v1144 = vadd.f32 %v692, %v1080
      %v1145 = vadd.f32 %v693, %v1081
      %v1146 = vadd.f32 %v694, %v1082
      %v1147 = vadd.f32 %v695, %v1083
      %v1148 = vadd.f32 %v696, %v1084
      %v1149 = vadd.f32 %v697, %v1085
      %v1150 = vadd.f32 %v698, %v1086
      %v1151 = vadd.f32 %v699, %v1087
      %v1152 = vadd.f32 %v700, %v1088
      %v1153 = vadd.f32 %v701, %v1089
      %v1154 = vadd.f32 %v702, %v1090
      %v1155 = vadd.f32 %v703, %v1091
      %v1156 = vadd.f32 %v704, %v1092
      %v1157 = vadd.f32 %v705, %v1093
      %v1158 = vadd.f32 %v706, %v1094
      %1159 = vset.pattern.permute.xlu0 2
      %1160 = vperm.xlu0 %1159, %v191
      %v1161 = vpop.permute.xlu0 %1160
      %1163 = vset.pattern.permute.xlu0 2
      %1164 = vperm.xlu0 %1163, %v192
      %v1165 = vpop.permute.xlu0 %1164
      %1167 = vset.pattern.permute.xlu0 2
      %1168 = vperm.xlu0 %1167, %v193
      %v1169 = vpop.permute.xlu0 %1168
      %1171 = vset.pattern.permute.xlu0 2
      %1172 = vperm.xlu0 %1171, %v194
      %v1173 = vpop.permute.xlu0 %1172
      %1175 = vset.pattern.permute.xlu0 2
      %1176 = vperm.xlu0 %1175, %v195
      %v1177 = vpop.permute.xlu0 %1176
      %1179 = vset.pattern.permute.xlu0 2
      %1180 = vperm.xlu0 %1179, %v196
      %v1181 = vpop.permute.xlu0 %1180
      %1183 = vset.pattern.permute.xlu0 2
      %1184 = vperm.xlu0 %1183, %v197
      %v1185 = vpop.permute.xlu0 %1184
      %1187 = vset.pattern.permute.xlu0 2
      %1188 = vperm.xlu0 %1187, %v198
      %v1189 = vpop.permute.xlu0 %1188
      %1191 = vset.pattern.permute.xlu0 2
      %1192 = vperm.xlu0 %1191, %v199
      %v1193 = vpop.permute.xlu0 %1192
      %1195 = vset.pattern.permute.xlu0 2
      %1196 = vperm.xlu0 %1195, %v200
      %v1197 = vpop.permute.xlu0 %1196
      %1199 = vset.pattern.permute.xlu0 2
      %1200 = vperm.xlu0 %1199, %v201
      %v1201 = vpop.permute.xlu0 %1200
      %1203 = vset.pattern.permute.xlu0 2
      %1204 = vperm.xlu0 %1203, %v202
      %v1205 = vpop.permute.xlu0 %1204
      %1207 = vset.pattern.permute.xlu0 2
      %1208 = vperm.xlu0 %1207, %v203
      %v1209 = vpop.permute.xlu0 %1208
      %1211 = vset.pattern.permute.xlu0 2
      %1212 = vperm.xlu0 %1211, %v204
      %v1213 = vpop.permute.xlu0 %1212
      %1215 = vset.pattern.permute.xlu0 2
      %1216 = vperm.xlu0 %1215, %v205
      %v1217 = vpop.permute.xlu0 %1216
      %1219 = vset.pattern.permute.xlu0 2
      %1220 = vperm.xlu0 %1219, %v206
      %v1221 = vpop.permute.xlu0 %1220
      %1223 = vset.pattern.permute.xlu0 2
      %1224 = vperm.xlu0 %1223, %v207
      %v1225 = vpop.permute.xlu0 %1224
      %1227 = vset.pattern.permute.xlu0 2
      %1228 = vperm.xlu0 %1227, %v208
      %v1229 = vpop.permute.xlu0 %1228
      %1231 = vset.pattern.permute.xlu0 2
      %1232 = vperm.xlu0 %1231, %v209
      %v1233 = vpop.permute.xlu0 %1232
      %1235 = vset.pattern.permute.xlu0 2
      %1236 = vperm.xlu0 %1235, %v210
      %v1237 = vpop.permute.xlu0 %1236
      %1239 = vset.pattern.permute.xlu0 2
      %1240 = vperm.xlu0 %1239, %v211
      %v1241 = vpop.permute.xlu0 %1240
      %1243 = vset.pattern.permute.xlu0 2
      %1244 = vperm.xlu0 %1243, %v212
      %v1245 = vpop.permute.xlu0 %1244
      %1247 = vset.pattern.permute.xlu0 2
      %1248 = vperm.xlu0 %1247, %v213
      %v1249 = vpop.permute.xlu0 %1248
      %1251 = vset.pattern.permute.xlu0 2
      %1252 = vperm.xlu0 %1251, %v214
      %v1253 = vpop.permute.xlu0 %1252
      %1255 = vset.pattern.permute.xlu0 2
      %1256 = vperm.xlu0 %1255, %v215
      %v1257 = vpop.permute.xlu0 %1256
      %1259 = vset.pattern.permute.xlu0 2
      %1260 = vperm.xlu0 %1259, %v216
      %v1261 = vpop.permute.xlu0 %1260
      %1263 = vset.pattern.permute.xlu0 2
      %1264 = vperm.xlu0 %1263, %v217
      %v1265 = vpop.permute.xlu0 %1264
      %1267 = vset.pattern.permute.xlu0 2
      %1268 = vperm.xlu0 %1267, %v218
      %v1269 = vpop.permute.xlu0 %1268
      %1271 = vset.pattern.permute.xlu0 2
      %1272 = vperm.xlu0 %1271, %v219
      %v1273 = vpop.permute.xlu0 %1272
      %1275 = vset.pattern.permute.xlu0 2
      %1276 = vperm.xlu0 %1275, %v220
      %v1277 = vpop.permute.xlu0 %1276
      %1279 = vset.pattern.permute.xlu0 2
      %1280 = vperm.xlu0 %1279, %v221
      %v1281 = vpop.permute.xlu0 %1280
      %1283 = vset.pattern.permute.xlu0 2
      %1284 = vperm.xlu0 %1283, %v222
      %v1285 = vpop.permute.xlu0 %1284
      %1287 = vset.pattern.permute.xlu0 2
      %1288 = vperm.xlu0 %1287, %v223
      %v1289 = vpop.permute.xlu0 %1288
      %1291 = vset.pattern.permute.xlu0 2
      %1292 = vperm.xlu0 %1291, %v224
      %v1293 = vpop.permute.xlu0 %1292
      %1295 = vset.pattern.permute.xlu0 2
      %1296 = vperm.xlu0 %1295, %v225
      %v1297 = vpop.permute.xlu0 %1296
      %1299 = vset.pattern.permute.xlu0 2
      %1300 = vperm.xlu0 %1299, %v226
      %v1301 = vpop.permute.xlu0 %1300
      %1303 = vset.pattern.permute.xlu0 2
      %1304 = vperm.xlu0 %1303, %v227
      %v1305 = vpop.permute.xlu0 %1304
      %1307 = vset.pattern.permute.xlu0 2
      %1308 = vperm.xlu0 %1307, %v228
      %v1309 = vpop.permute.xlu0 %1308
      %1311 = vset.pattern.permute.xlu0 2
      %1312 = vperm.xlu0 %1311, %v229
      %v1313 = vpop.permute.xlu0 %1312
      %1315 = vset.pattern.permute.xlu0 2
      %1316 = vperm.xlu0 %1315, %v230
      %v1317 = vpop.permute.xlu0 %1316
      %1319 = vset.pattern.permute.xlu0 2
      %1320 = vperm.xlu0 %1319, %v231
      %v1321 = vpop.permute.xlu0 %1320
      %1323 = vset.pattern.permute.xlu0 2
      %1324 = vperm.xlu0 %1323, %v232
      %v1325 = vpop.permute.xlu0 %1324
      %1327 = vset.pattern.permute.xlu0 2
      %1328 = vperm.xlu0 %1327, %v233
      %v1329 = vpop.permute.xlu0 %1328
      %1331 = vset.pattern.permute.xlu0 2
      %1332 = vperm.xlu0 %1331, %v234
      %v1333 = vpop.permute.xlu0 %1332
      %1335 = vset.pattern.permute.xlu0 2
      %1336 = vperm.xlu0 %1335, %v235
      %v1337 = vpop.permute.xlu0 %1336
      %1339 = vset.pattern.permute.xlu0 2
      %1340 = vperm.xlu0 %1339, %v236
      %v1341 = vpop.permute.xlu0 %1340
      %1343 = vset.pattern.permute.xlu0 2
      %1344 = vperm.xlu0 %1343, %v237
      %v1345 = vpop.permute.xlu0 %1344
      %1347 = vset.pattern.permute.xlu0 2
      %1348 = vperm.xlu0 %1347, %v238
      %v1349 = vpop.permute.xlu0 %1348
      %1351 = vset.pattern.permute.xlu0 2
      %1352 = vperm.xlu0 %1351, %v239
      %v1353 = vpop.permute.xlu0 %1352
      %1355 = vset.pattern.permute.xlu0 2
      %1356 = vperm.xlu0 %1355, %v240
      %v1357 = vpop.permute.xlu0 %1356
      %1359 = vset.pattern.permute.xlu0 2
      %1360 = vperm.xlu0 %1359, %v241
      %v1361 = vpop.permute.xlu0 %1360
      %1363 = vset.pattern.permute.xlu0 2
      %1364 = vperm.xlu0 %1363, %v242
      %v1365 = vpop.permute.xlu0 %1364
      %1367 = vset.pattern.permute.xlu0 2
      %1368 = vperm.xlu0 %1367, %v243
      %v1369 = vpop.permute.xlu0 %1368
      %1371 = vset.pattern.permute.xlu0 2
      %1372 = vperm.xlu0 %1371, %v244
      %v1373 = vpop.permute.xlu0 %1372
      %1375 = vset.pattern.permute.xlu0 2
      %1376 = vperm.xlu0 %1375, %v245
      %v1377 = vpop.permute.xlu0 %1376
      %1379 = vset.pattern.permute.xlu0 2
      %1380 = vperm.xlu0 %1379, %v246
      %v1381 = vpop.permute.xlu0 %1380
      %1383 = vset.pattern.permute.xlu0 2
      %1384 = vperm.xlu0 %1383, %v247
      %v1385 = vpop.permute.xlu0 %1384
      %1387 = vset.pattern.permute.xlu0 2
      %1388 = vperm.xlu0 %1387, %v248
      %v1389 = vpop.permute.xlu0 %1388
      %1391 = vset.pattern.permute.xlu0 2
      %1392 = vperm.xlu0 %1391, %v249
      %v1393 = vpop.permute.xlu0 %1392
      %1395 = vset.pattern.permute.xlu0 2
      %1396 = vperm.xlu0 %1395, %v250
      %v1397 = vpop.permute.xlu0 %1396
      %1399 = vset.pattern.permute.xlu0 2
      %1400 = vperm.xlu0 %1399, %v251
      %v1401 = vpop.permute.xlu0 %1400
      %1403 = vset.pattern.permute.xlu0 2
      %1404 = vperm.xlu0 %1403, %v252
      %v1405 = vpop.permute.xlu0 %1404
      %1407 = vset.pattern.permute.xlu0 2
      %1408 = vperm.xlu0 %1407, %v253
      %v1409 = vpop.permute.xlu0 %1408
      %1411 = vset.pattern.permute.xlu0 2
      %1412 = vperm.xlu0 %1411, %v254
      %v1413 = vpop.permute.xlu0 %1412
      %v1415 = vlaneseq
      %v1416 = vshrl.u32 %v1415, 7
      %v1417 = vsub.s32 2, %v1416
      %v1418 = vrot.slane %v190, %v1417
      %v1419 = vsub.f32 %v1161, %v1418
      %v1420 = vsub.f32 %v1165, %v1418
      %v1421 = vsub.f32 %v1169, %v1418
      %v1422 = vsub.f32 %v1173, %v1418
      %v1423 = vsub.f32 %v1177, %v1418
      %v1424 = vsub.f32 %v1181, %v1418
      %v1425 = vsub.f32 %v1185, %v1418
      %v1426 = vsub.f32 %v1189, %v1418
      %v1427 = vsub.f32 %v1193, %v1418
      %v1428 = vsub.f32 %v1197, %v1418
      %v1429 = vsub.f32 %v1201, %v1418
      %v1430 = vsub.f32 %v1205, %v1418
      %v1431 = vsub.f32 %v1209, %v1418
      %v1432 = vsub.f32 %v1213, %v1418
      %v1433 = vsub.f32 %v1217, %v1418
      %v1434 = vsub.f32 %v1221, %v1418
      %v1435 = vsub.f32 %v1225, %v1418
      %v1436 = vsub.f32 %v1229, %v1418
      %v1437 = vsub.f32 %v1233, %v1418
      %v1438 = vsub.f32 %v1237, %v1418
      %v1439 = vsub.f32 %v1241, %v1418
      %v1440 = vsub.f32 %v1245, %v1418
      %v1441 = vsub.f32 %v1249, %v1418
      %v1442 = vsub.f32 %v1253, %v1418
      %v1443 = vsub.f32 %v1257, %v1418
      %v1444 = vsub.f32 %v1261, %v1418
      %v1445 = vsub.f32 %v1265, %v1418
      %v1446 = vsub.f32 %v1269, %v1418
      %v1447 = vsub.f32 %v1273, %v1418
      %v1448 = vsub.f32 %v1277, %v1418
      %v1449 = vsub.f32 %v1281, %v1418
      %v1450 = vsub.f32 %v1285, %v1418
      %v1451 = vsub.f32 %v1289, %v1418
      %v1452 = vsub.f32 %v1293, %v1418
      %v1453 = vsub.f32 %v1297, %v1418
      %v1454 = vsub.f32 %v1301, %v1418
      %v1455 = vsub.f32 %v1305, %v1418
      %v1456 = vsub.f32 %v1309, %v1418
      %v1457 = vsub.f32 %v1313, %v1418
      %v1458 = vsub.f32 %v1317, %v1418
      %v1459 = vsub.f32 %v1321, %v1418
      %v1460 = vsub.f32 %v1325, %v1418
      %v1461 = vsub.f32 %v1329, %v1418
      %v1462 = vsub.f32 %v1333, %v1418
      %v1463 = vsub.f32 %v1337, %v1418
      %v1464 = vsub.f32 %v1341, %v1418
      %v1465 = vsub.f32 %v1345, %v1418
      %v1466 = vsub.f32 %v1349, %v1418
      %v1467 = vsub.f32 %v1353, %v1418
      %v1468 = vsub.f32 %v1357, %v1418
      %v1469 = vsub.f32 %v1361, %v1418
      %v1470 = vsub.f32 %v1365, %v1418
      %v1471 = vsub.f32 %v1369, %v1418
      %v1472 = vsub.f32 %v1373, %v1418
      %v1473 = vsub.f32 %v1377, %v1418
      %v1474 = vsub.f32 %v1381, %v1418
      %v1475 = vsub.f32 %v1385, %v1418
      %v1476 = vsub.f32 %v1389, %v1418
      %v1477 = vsub.f32 %v1393, %v1418
      %v1478 = vsub.f32 %v1397, %v1418
      %v1479 = vsub.f32 %v1401, %v1418
      %v1480 = vsub.f32 %v1405, %v1418
      %v1481 = vsub.f32 %v1409, %v1418
      %v1482 = vsub.f32 %v1413, %v1418
      %v1483 = vmul.f32 %v1419, %v1419
      %v1484 = vmul.f32 %v1420, %v1420
      %v1485 = vmul.f32 %v1421, %v1421
      %v1486 = vmul.f32 %v1422, %v1422
      %v1487 = vmul.f32 %v1423, %v1423
      %v1488 = vmul.f32 %v1424, %v1424
      %v1489 = vmul.f32 %v1425, %v1425
      %v1490 = vmul.f32 %v1426, %v1426
      %v1491 = vmul.f32 %v1427, %v1427
      %v1492 = vmul.f32 %v1428, %v1428
      %v1493 = vmul.f32 %v1429, %v1429
      %v1494 = vmul.f32 %v1430, %v1430
      %v1495 = vmul.f32 %v1431, %v1431
      %v1496 = vmul.f32 %v1432, %v1432
      %v1497 = vmul.f32 %v1433, %v1433
      %v1498 = vmul.f32 %v1434, %v1434
      %v1499 = vmul.f32 %v1435, %v1435
      %v1500 = vmul.f32 %v1436, %v1436
      %v1501 = vmul.f32 %v1437, %v1437
      %v1502 = vmul.f32 %v1438, %v1438
      %v1503 = vmul.f32 %v1439, %v1439
      %v1504 = vmul.f32 %v1440, %v1440
      %v1505 = vmul.f32 %v1441, %v1441
      %v1506 = vmul.f32 %v1442, %v1442
      %v1507 = vmul.f32 %v1443, %v1443
      %v1508 = vmul.f32 %v1444, %v1444
      %v1509 = vmul.f32 %v1445, %v1445
      %v1510 = vmul.f32 %v1446, %v1446
      %v1511 = vmul.f32 %v1447, %v1447
      %v1512 = vmul.f32 %v1448, %v1448
      %v1513 = vmul.f32 %v1449, %v1449
      %v1514 = vmul.f32 %v1450, %v1450
      %v1515 = vmul.f32 %v1451, %v1451
      %v1516 = vmul.f32 %v1452, %v1452
      %v1517 = vmul.f32 %v1453, %v1453
      %v1518 = vmul.f32 %v1454, %v1454
      %v1519 = vmul.f32 %v1455, %v1455
      %v1520 = vmul.f32 %v1456, %v1456
      %v1521 = vmul.f32 %v1457, %v1457
      %v1522 = vmul.f32 %v1458, %v1458
      %v1523 = vmul.f32 %v1459, %v1459
      %v1524 = vmul.f32 %v1460, %v1460
      %v1525 = vmul.f32 %v1461, %v1461
      %v1526 = vmul.f32 %v1462, %v1462
      %v1527 = vmul.f32 %v1463, %v1463
      %v1528 = vmul.f32 %v1464, %v1464
      %v1529 = vmul.f32 %v1465, %v1465
      %v1530 = vmul.f32 %v1466, %v1466
      %v1531 = vmul.f32 %v1467, %v1467
      %v1532 = vmul.f32 %v1468, %v1468
      %v1533 = vmul.f32 %v1469, %v1469
      %v1534 = vmul.f32 %v1470, %v1470
      %v1535 = vmul.f32 %v1471, %v1471
      %v1536 = vmul.f32 %v1472, %v1472
      %v1537 = vmul.f32 %v1473, %v1473
      %v1538 = vmul.f32 %v1474, %v1474
      %v1539 = vmul.f32 %v1475, %v1475
      %v1540 = vmul.f32 %v1476, %v1476
      %v1541 = vmul.f32 %v1477, %v1477
      %v1542 = vmul.f32 %v1478, %v1478
      %v1543 = vmul.f32 %v1479, %v1479
      %v1544 = vmul.f32 %v1480, %v1480
      %v1545 = vmul.f32 %v1481, %v1481
      %v1546 = vmul.f32 %v1482, %v1482
      %v1547 = vadd.f32 %v1095, %v1483
      %v1548 = vadd.f32 %v1096, %v1484
      %v1549 = vadd.f32 %v1097, %v1485
      %v1550 = vadd.f32 %v1098, %v1486
      %v1551 = vadd.f32 %v1099, %v1487
      %v1552 = vadd.f32 %v1100, %v1488
      %v1553 = vadd.f32 %v1101, %v1489
      %v1554 = vadd.f32 %v1102, %v1490
      %v1555 = vadd.f32 %v1103, %v1491
      %v1556 = vadd.f32 %v1104, %v1492
      %v1557 = vadd.f32 %v1105, %v1493
      %v1558 = vadd.f32 %v1106, %v1494
      %v1559 = vadd.f32 %v1107, %v1495
      %v1560 = vadd.f32 %v1108, %v1496
      %v1561 = vadd.f32 %v1109, %v1497
      %v1562 = vadd.f32 %v1110, %v1498
      %v1563 = vadd.f32 %v1111, %v1499
      %v1564 = vadd.f32 %v1112, %v1500
      %v1565 = vadd.f32 %v1113, %v1501
      %v1566 = vadd.f32 %v1114, %v1502
      %v1567 = vadd.f32 %v1115, %v1503
      %v1568 = vadd.f32 %v1116, %v1504
      %v1569 = vadd.f32 %v1117, %v1505
      %v1570 = vadd.f32 %v1118, %v1506
      %v1571 = vadd.f32 %v1119, %v1507
      %v1572 = vadd.f32 %v1120, %v1508
      %v1573 = vadd.f32 %v1121, %v1509
      %v1574 = vadd.f32 %v1122, %v1510
      %v1575 = vadd.f32 %v1123, %v1511
      %v1576 = vadd.f32 %v1124, %v1512
      %v1577 = vadd.f32 %v1125, %v1513
      %v1578 = vadd.f32 %v1126, %v1514
      %v1579 = vadd.f32 %v1127, %v1515
      %v1580 = vadd.f32 %v1128, %v1516
      %v1581 = vadd.f32 %v1129, %v1517
      %v1582 = vadd.f32 %v1130, %v1518
      %v1583 = vadd.f32 %v1131, %v1519
      %v1584 = vadd.f32 %v1132, %v1520
      %v1585 = vadd.f32 %v1133, %v1521
      %v1586 = vadd.f32 %v1134, %v1522
      %v1587 = vadd.f32 %v1135, %v1523
      %v1588 = vadd.f32 %v1136, %v1524
      %v1589 = vadd.f32 %v1137, %v1525
      %v1590 = vadd.f32 %v1138, %v1526
      %v1591 = vadd.f32 %v1139, %v1527
      %v1592 = vadd.f32 %v1140, %v1528
      %v1593 = vadd.f32 %v1141, %v1529
      %v1594 = vadd.f32 %v1142, %v1530
      %v1595 = vadd.f32 %v1143, %v1531
      %v1596 = vadd.f32 %v1144, %v1532
      %v1597 = vadd.f32 %v1145, %v1533
      %v1598 = vadd.f32 %v1146, %v1534
      %v1599 = vadd.f32 %v1147, %v1535
      %v1600 = vadd.f32 %v1148, %v1536
      %v1601 = vadd.f32 %v1149, %v1537
      %v1602 = vadd.f32 %v1150, %v1538
      %v1603 = vadd.f32 %v1151, %v1539
      %v1604 = vadd.f32 %v1152, %v1540
      %v1605 = vadd.f32 %v1153, %v1541
      %v1606 = vadd.f32 %v1154, %v1542
      %v1607 = vadd.f32 %v1155, %v1543
      %v1608 = vadd.f32 %v1156, %v1544
      %v1609 = vadd.f32 %v1157, %v1545
      %v1610 = vadd.f32 %v1158, %v1546
      %v1611 = vld [vmem:[#allocation2] sm:$0x1]
      %v1612 = vmin.f32 %v1547, %v1551
      %v1613 = vmin.f32 %v1548, %v1552
      %v1614 = vmin.f32 %v1549, %v1553
      %v1615 = vmin.f32 %v1550, %v1554
      %v1616 = vmin.f32 %v1612, %v1555
      %v1617 = vmin.f32 %v1613, %v1556
      %v1618 = vmin.f32 %v1614, %v1557
      %v1619 = vmin.f32 %v1615, %v1558
      %v1620 = vmin.f32 %v1616, %v1559
      %v1621 = vmin.f32 %v1617, %v1560
      %v1622 = vmin.f32 %v1618, %v1561
      %v1623 = vmin.f32 %v1619, %v1562
      %v1624 = vmin.f32 %v1620, %v1563
      %v1625 = vmin.f32 %v1621, %v1564
      %v1626 = vmin.f32 %v1622, %v1565
      %v1627 = vmin.f32 %v1623, %v1566
      %v1628 = vmin.f32 %v1624, %v1567
      %v1629 = vmin.f32 %v1625, %v1568
      %v1630 = vmin.f32 %v1626, %v1569
      %v1631 = vmin.f32 %v1627, %v1570
      %v1632 = vmin.f32 %v1628, %v1571
      %v1633 = vmin.f32 %v1629, %v1572
      %v1634 = vmin.f32 %v1630, %v1573
      %v1635 = vmin.f32 %v1631, %v1574
      %v1636 = vmin.f32 %v1632, %v1575
      %v1637 = vmin.f32 %v1633, %v1576
      %v1638 = vmin.f32 %v1634, %v1577
      %v1639 = vmin.f32 %v1635, %v1578
      %v1640 = vmin.f32 %v1636, %v1579
      %v1641 = vmin.f32 %v1637, %v1580
      %v1642 = vmin.f32 %v1638, %v1581
      %v1643 = vmin.f32 %v1639, %v1582
      %v1644 = vmin.f32 %v1640, %v1583
      %v1645 = vmin.f32 %v1641, %v1584
      %v1646 = vmin.f32 %v1642, %v1585
      %v1647 = vmin.f32 %v1643, %v1586
      %v1648 = vmin.f32 %v1644, %v1587
      %v1649 = vmin.f32 %v1645, %v1588
      %v1650 = vmin.f32 %v1646, %v1589
      %v1651 = vmin.f32 %v1647, %v1590
      %v1652 = vmin.f32 %v1648, %v1591
      %v1653 = vmin.f32 %v1649, %v1592
      %v1654 = vmin.f32 %v1650, %v1593
      %v1655 = vmin.f32 %v1651, %v1594
      %v1656 = vmin.f32 %v1652, %v1595
      %v1657 = vmin.f32 %v1653, %v1596
      %v1658 = vmin.f32 %v1654, %v1597
      %v1659 = vmin.f32 %v1655, %v1598
      %v1660 = vmin.f32 %v1656, %v1599
      %v1661 = vmin.f32 %v1657, %v1600
      %v1662 = vmin.f32 %v1658, %v1601
      %v1663 = vmin.f32 %v1659, %v1602
      %v1664 = vmin.f32 %v1660, %v1603
      %v1665 = vmin.f32 %v1661, %v1604
      %v1666 = vmin.f32 %v1662, %v1605
      %v1667 = vmin.f32 %v1663, %v1606
      %v1668 = vmin.f32 %v1664, %v1607
      %v1669 = vmin.f32 %v1665, %v1608
      %v1670 = vmin.f32 %v1666, %v1609
      %v1671 = vmin.f32 %v1667, %v1610
      %v1672 = vmin.f32 %v1668, %v1669
      %v1673 = vmin.f32 %v1670, %v1671
      %v1674 = vmin.f32 %v1672, %v1673
      %v1675 = vrot.slane %v1674, 4
      %v1676 = vmin.f32 %v1674, %v1675
      %v1677 = vrot.slane %v1676, 2
      %v1678 = vmin.f32 %v1676, %v1677
      %v1679 = vrot.slane %v1678, 1
      %v1680 = vmin.f32 %v1678, %v1679
      %v1681 = vmin.f32 %v1611, %v1680
      %1682 = vst [vmem:[#allocation2] sm:$0x1] %v1681
      // Predicated region
      $region33: #{loss_batched_forward.5} parent=27 // pred_check
        %p1683 = pneg %p185
      $region34: #{loss_batched_forward.5} parent=27 // pred_check_branch
        %1685 = sbr.rel (%p1683) target = $region36
      $region35: #{loss_batched_forward.5} parent=27 // pred_region
        %v1686 = vld [vmem:[#allocation2] sm:$0x1]
        %v1687 = vmin.f32 %v1686, 0.2
        %vm1688 = vcmask 1040384
        %v1689 = vsel %vm1688, %v1687, 0.0
        %1690 = vadd.xlane.f32.xlu0 %v1689
        %v1691 = vpop.xlane.xlu0 %1690
        %v1692 = vrot.slane %v1691, 4
        %v1693 = vadd.f32 %v1691, %v1692
        %v1694 = vrot.slane %v1693, 2
        %v1695 = vadd.f32 %v1693, %v1694
        %v1696 = vrot.slane %v1695, 1
        %v1697 = vadd.f32 %v1695, %v1696
        %s1698 = vtos %v1697
        %s1699 = smul.f32 %s1698, 0.0078125
        %v1700 = vstv %s1699
        %1701 = vst [vmem:[%s184] sm:$0x1] %v1700
      $region36: #{loss_batched_forward.5} parent=27 // pred_fallthru
        _
      %p1702 = scmp.lt.s32.totalorder %s17, 1
      %s1703 = scalar_select %p1702, %s17, 1
      %s1704 = scalar_lea.vmem %s2, %s1703
      // Predicated region
      $region37: #{loss_batched_forward.5} parent=27 // pred_check
        %p1705 = pneg %p97
      $region38: #{loss_batched_forward.5} parent=27 // pred_check_branch
        %1707 = sbr.rel (%p1705) target = $region40
      $region39: #{loss_batched_forward.5} parent=27 // pred_region
        _
      $region40: #{loss_batched_forward.5} parent=27 // pred_fallthru
        _
    $region28: #{loss_batched_forward.5} parent=5 // pred_fallthru
      _
    %p1708 = scmp.le.s32.totalorder 2, %s8
    // Predicated region
    $region41: #{loss_batched_forward.5} parent=5 // pred_check
      %p1709 = pneg %p1708
    $region42: #{loss_batched_forward.5} parent=5 // pred_check_branch
      %1711 = sbr.rel (%p1709) target = $region44
    $region43: #{loss_batched_forward.5} parent=5 // pred_region
      %s1712 = ssub.s32 %s8, 2
      // Predicated region
      $region45: #{loss_batched_forward.5} parent=43 // pred_check
        %p1713 = pneg %p103
      $region46: #{loss_batched_forward.5} parent=43 // pred_check_branch
        %1715 = sbr.rel (%p1713) target = $region48
      $region47: #{loss_batched_forward.5} parent=43 // pred_region
        %p1716 = scmp.lt.s32.totalorder %s19, 1
        %s1717 = scalar_select %p1716, %s19, 1
        %s1718 = scalar_lea.vmem %s2, %s1717
      $region48: #{loss_batched_forward.5} parent=43 // pred_fallthru
        _
    $region44: #{loss_batched_forward.5} parent=5 // pred_fallthru
      _
  $region6: #{loss_batched_forward.5} parent=0 // loop_footer
    %s12 = sadd.s32 1, %s8
  $region7: #{loss_batched_forward.5} parent=0 // loop_footer_branch
    %7 = sbr.rel target = $region3
  $region8: #{loss_batched_forward.5} parent=0 // loop_exit
    _

</llo_original>
